<compile_context>
chip_gen: v6e
topology: v6e:2x2x1
jax: 0.10.0
libtpu: 0.0.40
codegen_flags: <defaults>
</compile_context>

<pallas_src>
import functools

import numpy as np
import jax
import jax.numpy as jnp
from jax.experimental import pallas as pl
from jax.experimental.pallas import tpu as pltpu


OUT_PAD = 128   # lane-dense padded logits width (true logits live in [:, :3])
NEG = -1e9      # additive mask value (matches reference masked_fill)


def dam_kernel(x_ref, mask_ref, colb_ref, blk_ref,
               fw_ref, ab1_ref, aw2_ref, ab2_ref,
               cw1_ref, cb1_ref, cw2_ref, cb2_ref,
               ow1_ref, ob1_ref, ow2_ref, ob2_ref,
               o_ref, *, Lp):
    f32, bf16 = jnp.float32, jnp.bfloat16
    _, Bblk, L, E = x_ref.shape
    H = aw2_ref.shape[0]
    M = Bblk * L

    def relu(v):
        return jnp.maximum(v, 0.0)

    # ---- shared-weight path on the stacked [M, E] operand --------------------
    X = x_ref[...].reshape(M, E)                                # bf16 tokens
    # fused projection + att-MLP layer 1 (no nonlinearity between them):
    #   fw = [proj | proj @ att_w1]  ->  Y[:, :H] = projected, Y[:, H:] = att pre-act
    Y = jnp.dot(X, fw_ref[...], preferred_element_type=f32)     # [M, 2H] f32
    Xp = Y[:, :H]                                               # projected tokens
    Ah = relu(Y[:, H:] + ab1_ref[...])
    Xa = relu(jnp.dot(Ah.astype(bf16), aw2_ref[...],
                      preferred_element_type=f32) + ab2_ref[...])   # [M, H]

    # ---- flattened attention: one [M, M] score matmul, block-diag masked -----
    Xa_b = Xa.astype(bf16)
    scores = jax.lax.dot_general(Xa_b, Xa_b, (((1,), (1,)), ((), ())),
                                 preferred_element_type=f32)    # [M, M]
    # blk_ref : 0 where (same pair) & (premise row <-> hypo col or vice versa), else -1e9
    # colb_ref: (token_mask - 1) * 1e9 over the flattened stacked tokens (columns).
    # Row padding bias is a per-row constant -> softmax-invariant, so omitted.
    scores = scores + blk_ref[...] + colb_ref[0]
    mrow = jnp.max(scores, axis=1, keepdims=True)
    e = jnp.exp(scores - mrow)
    probs = e * pl.reciprocal(jnp.sum(e, axis=1, keepdims=True), approx=True)

    # Premise rows attend over their pair's hypothesis tokens and vice versa, so a
    # single probs @ Xp produces both "hypos_attended" and "prems_attended".
    Xp_b = Xp.astype(bf16)
    att = jnp.dot(probs.astype(bf16), Xp_b, preferred_element_type=f32)   # [M, H]

    # ---- compare MLP (shared weights, both directions stacked) ---------------
    cin = jnp.concatenate([Xp_b, att.astype(bf16)], axis=1)     # [M, 2H] bf16
    Ch = relu(jnp.dot(cin, cw1_ref[...], preferred_element_type=f32) + cb1_ref[...])
    Co = relu(jnp.dot(Ch.astype(bf16), cw2_ref[...],
                      preferred_element_type=f32) + cb2_ref[...])         # [M, H]

    # zero padded tokens (reference masked_fill) and aggregate per side
    m = mask_ref[0]                                             # [Bblk, L] f32
    Co3 = Co.reshape(Bblk, L, H) * m[:, :, None]
    agg_p = jnp.sum(Co3[:, :Lp, :], axis=1)                     # [Bblk, H]
    agg_h = jnp.sum(Co3[:, Lp:, :], axis=1)                     # [Bblk, H]

    # ---- output MLP -> lane-dense padded logits -------------------------------
    enc = jnp.concatenate([agg_p, agg_h], axis=1)               # [Bblk, 2H]
    Oh = relu(jnp.dot(enc.astype(bf16), ow1_ref[...],
                      preferred_element_type=f32) + ob1_ref[...])
    o_ref[0] = (jnp.dot(Oh.astype(bf16), ow2_ref[...],
                        preferred_element_type=f32) + ob2_ref[...])       # [Bblk, OUT_PAD]


def _pick_block_b(B, max_blk=32):
    # Prefer a divisor of B (zero padded work); among divisors prefer an even grid
    # length so v7x's two TensorCores get equal amounts of real work.
    divs = [d for d in range(1, min(B, max_blk) + 1) if B % d == 0]
    even = [d for d in divs if (B // d) % 2 == 0]
    best = max(even) if even else max(divs)
    if best * 4 >= min(B, max_blk):
        return best
    return min(max_blk, 16)   # awkward (e.g. large prime) batch: fall back to padding


def dam_forward(prems_e, hypos_e, pmask, hmask, params, block_b=None):
    """prems_e/hypos_e: L2-normalized embeddings [B, L*, E]; masks: float [B, L*]."""
    B, Lp, E = prems_e.shape
    _, Lh, _ = hypos_e.shape
    L = Lp + Lh

    Bblk = _pick_block_b(B) if block_b is None else int(block_b)
    B_pad = ((B + Bblk - 1) // Bblk) * Bblk
    G = B_pad // Bblk
    M = Bblk * L

    # stack premise + hypothesis tokens along one axis: a single input DMA per step
    x = jnp.concatenate([prems_e, hypos_e], axis=1)             # [B, L, E]
    mask = jnp.concatenate([pmask, hmask], axis=1)              # [B, L]
    if B_pad != B:
        x = jnp.pad(x, ((0, B_pad - B), (0, 0), (0, 0)))
        mask = jnp.pad(mask, ((0, B_pad - B), (0, 0)))

    x = x.astype(jnp.bfloat16).reshape(G, Bblk, L, E)
    mask_f = mask.astype(jnp.float32)
    mask_g = mask_f.reshape(G, Bblk, L)
    colb = ((1.0 - mask_f) * NEG).reshape(G, 1, M)              # additive column bias

    # constant block-direction bias [M, M]: 0 only where row/col are the two
    # different sides of the same pair, else -1e9.  Constant index_map -> resident.
    t = np.arange(M)
    pair = t // L
    is_prem = (t % L) < Lp
    blk_bias = jnp.asarray(
        np.where((pair[:, None] == pair[None, :]) &
                 (is_prem[:, None] != is_prem[None, :]), 0.0, NEG),
        dtype=jnp.float32)

    # fold the (bias-free) linear projection into the att-MLP's first layer
    fused_w = jnp.concatenate(
        [params["proj"], params["proj"] @ params["att_w1"]], axis=1)   # [E, 2H]

    # pad the 3-wide output head to a full 128-lane slab (lane-dense stores)
    n_out = params["out_w2"].shape[1]
    out_w2p = jnp.pad(params["out_w2"], ((0, 0), (0, OUT_PAD - n_out)))
    out_b2p = jnp.pad(params["out_b2"], ((0, 0), (0, OUT_PAD - n_out)))

    def bf(w):
        return w.astype(jnp.bfloat16)

    weights = [bf(fused_w), params["att_b1"],
               bf(params["att_w2"]), params["att_b2"],
               bf(params["cmp_w1"]), params["cmp_b1"],
               bf(params["cmp_w2"]), params["cmp_b2"],
               bf(params["out_w1"]), params["out_b1"],
               bf(out_w2p), out_b2p]

    def batch_spec(shape):
        n = len(shape)
        return pl.BlockSpec((1,) + tuple(shape[1:]),
                            lambda g, _n=n: (g,) + (0,) * (_n - 1))

    def const_spec(w):
        nd = w.ndim
        # TODO(synk): could add pipeline_mode=pl.Buffered(1) to avoid double-buffering
        # constants; constant index_map already keeps them resident, so skipped.
        return pl.BlockSpec(w.shape, lambda g, _nd=nd: (0,) * _nd)

    in_specs = ([batch_spec(x.shape), batch_spec(mask_g.shape),
                 batch_spec(colb.shape), const_spec(blk_bias)]
                + [const_spec(w) for w in weights])

    out = pl.pallas_call(
        functools.partial(dam_kernel, Lp=Lp),
        out_shape=jax.ShapeDtypeStruct((G, Bblk, OUT_PAD), jnp.float32),
        grid_spec=pltpu.PrefetchScalarGridSpec(
            num_scalar_prefetch=0,
            grid=(G,),
            in_specs=in_specs,
            out_specs=pl.BlockSpec((1, Bblk, OUT_PAD), lambda g: (g, 0, 0)),
        ),
        compiler_params=pltpu.CompilerParams(
            dimension_semantics=("parallel",)),
    )(x, mask_g, colb, blk_bias, *weights)

    return out.reshape(B_pad, OUT_PAD)[:B, :n_out]


# ----------------------------- pure-JAX reference -----------------------------
def dam_reference(prems_e, hypos_e, pmask, hmask, params):
    relu = jax.nn.relu
    P = prems_e @ params["proj"]
    Hh = hypos_e @ params["proj"]

    def att(x):
        return relu(relu(x @ params["att_w1"] + params["att_b1"])
                    @ params["att_w2"] + params["att_b2"])

    def comp(x):
        return relu(relu(x @ params["cmp_w1"] + params["cmp_b1"])
                    @ params["cmp_w2"] + params["cmp_b2"])

    Pa, Ha = att(P), att(Hh)
    scores = jnp.matmul(Pa, jnp.swapaxes(Ha, 1, 2))
    scores = jnp.where(pmask[:, :, None] == 0, -1e9, scores)
    scores = jnp.where(hmask[:, None, :] == 0, -1e9, scores)
    horiz = jax.nn.softmax(scores, axis=2)
    vert = jax.nn.softmax(scores, axis=1)

    hypos_att = jnp.matmul(horiz, Hh)
    comp_p = comp(jnp.concatenate([P, hypos_att], axis=-1)) * pmask[:, :, None]
    agg_p = jnp.sum(comp_p, axis=1)

    prems_att = jnp.matmul(jnp.swapaxes(vert, 1, 2), P)
    comp_h = comp(jnp.concatenate([Hh, prems_att], axis=-1)) * hmask[:, :, None]
    agg_h = jnp.sum(comp_h, axis=1)

    enc = jnp.concatenate([agg_p, agg_h], axis=-1)
    return (relu(enc @ params["out_w1"] + params["out_b1"])
            @ params["out_w2"] + params["out_b2"])


# ----------------------------- deterministic init -----------------------------
def xavier(key, fan_in, fan_out):
    limit = float(np.sqrt(6.0 / (fan_in + fan_out)))
    return jax.random.uniform(key, (fan_in, fan_out), jnp.float32, -limit, limit)


if __name__ == "__main__":
    VOCAB, E, H = 64, 64, 128   # vocab, emb dim, mlp_hidden_size (lane-aligned)
    B, Lp, Lh = 40, 8, 8

    key = jax.random.PRNGKey(0)
    keys = jax.random.split(key, 20)

    emb = jax.random.normal(keys[0], (VOCAB, E), jnp.float32)
    emb = emb.at[0].set(0.0)   # padding_idx=0

    def bias(k, n):
        return 0.05 * jax.random.normal(k, (1, n), jnp.float32)

    params = {
        "proj":   xavier(keys[1], E, H),
        "att_w1": xavier(keys[2], H, H),      "att_b1": bias(keys[3], H),
        "att_w2": xavier(keys[4], H, H),      "att_b2": bias(keys[5], H),
        "cmp_w1": xavier(keys[6], 2 * H, H),  "cmp_b1": bias(keys[7], H),
        "cmp_w2": xavier(keys[8], H, H),      "cmp_b2": bias(keys[9], H),
        "out_w1": xavier(keys[10], 2 * H, H), "out_b1": bias(keys[11], H),
        "out_w2": xavier(keys[12], H, 3),     "out_b2": bias(keys[13], 3),
    }

    prem_idx = jax.random.randint(keys[14], (B, Lp), 1, VOCAB)
    hypo_idx = jax.random.randint(keys[15], (B, Lh), 1, VOCAB)
    prem_lens = jax.random.randint(keys[16], (B,), 1, Lp + 1)
    hypo_lens = jax.random.randint(keys[17], (B,), 1, Lh + 1)
    # zero out padded token ids (past the lengths) as a real dataloader would
    prem_idx = jnp.where(jnp.arange(Lp)[None, :] < prem_lens[:, None], prem_idx, 0)
    hypo_idx = jnp.where(jnp.arange(Lh)[None, :] < hypo_lens[:, None], hypo_idx, 0)

    # glue: embedding lookup + L2 normalize + masks (plain JAX)
    # TODO(synk): embedding gather + L2 norm stay outside the kernel (host-side glue).
    def embed_norm(idx):
        x = emb[idx]
        n = jnp.linalg.norm(x, axis=-1, keepdims=True)
        return x / (n + 1e-6)

    prems_e = embed_norm(prem_idx)
    hypos_e = embed_norm(hypo_idx)
    pmask = (jnp.arange(Lp)[None, :] < prem_lens[:, None]).astype(jnp.float32)
    hmask = (jnp.arange(Lh)[None, :] < hypo_lens[:, None]).astype(jnp.float32)

    out = dam_forward(prems_e, hypos_e, pmask, hmask, params)   # Bblk auto -> 20, grid=2
    out = jax.block_until_ready(out)

    ref = dam_reference(prems_e, hypos_e, pmask, hmask, params)
    # bf16 matmuls + approx reciprocal (per perf review) -> loosened tolerance;
    # softmax/bias/accumulation stay in f32.
    np.testing.assert_allclose(np.asarray(out), np.asarray(ref), rtol=5e-2, atol=8e-2)
    assert out.shape == (B, 3)
    print("KERNEL_OK")
</pallas_src>

<mosaic_0001>
module attributes {stable_mosaic.version = 11 : i64} {
  func.func @dam_kernel(%arg0: i32, %arg1: memref<1x20x16x64xbf16, #tpu.memory_space<vmem>>, %arg2: memref<1x20x16xf32, #tpu.memory_space<vmem>>, %arg3: memref<1x1x320xf32, #tpu.memory_space<vmem>>, %arg4: memref<320x320xf32, #tpu.memory_space<vmem>>, %arg5: memref<64x256xbf16, #tpu.memory_space<vmem>>, %arg6: memref<1x128xf32, #tpu.memory_space<vmem>>, %arg7: memref<128x128xbf16, #tpu.memory_space<vmem>>, %arg8: memref<1x128xf32, #tpu.memory_space<vmem>>, %arg9: memref<256x128xbf16, #tpu.memory_space<vmem>>, %arg10: memref<1x128xf32, #tpu.memory_space<vmem>>, %arg11: memref<128x128xbf16, #tpu.memory_space<vmem>>, %arg12: memref<1x128xf32, #tpu.memory_space<vmem>>, %arg13: memref<256x128xbf16, #tpu.memory_space<vmem>>, %arg14: memref<1x128xf32, #tpu.memory_space<vmem>>, %arg15: memref<128x128xbf16, #tpu.memory_space<vmem>>, %arg16: memref<1x128xf32, #tpu.memory_space<vmem>>, %arg17: memref<1x20x128xf32, #tpu.memory_space<vmem>>) attributes {dimension_semantics = [#tpu.dimension_semantics<parallel>], iteration_bounds = array<i64: 2>, scalar_prefetch = 0 : i64, scratch_operands = 0 : i64, tpu.core_type = #tpu.core_type<tc>, window_params = [{transform_indices = @transform_0, window_bounds = array<i64: 1, 20, 16, 64>}, {transform_indices = @transform_1, window_bounds = array<i64: 1, 20, 16>}, {transform_indices = @transform_2, window_bounds = array<i64: 1, 1, 320>}, {pipeline_mode = #tpu.pipeline_mode<synchronous>, transform_indices = @transform_3, window_bounds = array<i64: 320, 320>}, {pipeline_mode = #tpu.pipeline_mode<synchronous>, transform_indices = @transform_4, window_bounds = array<i64: 64, 256>}, {pipeline_mode = #tpu.pipeline_mode<synchronous>, transform_indices = @transform_5, window_bounds = array<i64: 1, 128>}, {pipeline_mode = #tpu.pipeline_mode<synchronous>, transform_indices = @transform_6, window_bounds = array<i64: 128, 128>}, {pipeline_mode = #tpu.pipeline_mode<synchronous>, transform_indices = @transform_7, window_bounds = array<i64: 1, 128>}, {pipeline_mode = #tpu.pipeline_mode<synchronous>, transform_indices = @transform_8, window_bounds = array<i64: 256, 128>}, {pipeline_mode = #tpu.pipeline_mode<synchronous>, transform_indices = @transform_9, window_bounds = array<i64: 1, 128>}, {pipeline_mode = #tpu.pipeline_mode<synchronous>, transform_indices = @transform_10, window_bounds = array<i64: 128, 128>}, {pipeline_mode = #tpu.pipeline_mode<synchronous>, transform_indices = @transform_11, window_bounds = array<i64: 1, 128>}, {pipeline_mode = #tpu.pipeline_mode<synchronous>, transform_indices = @transform_12, window_bounds = array<i64: 256, 128>}, {pipeline_mode = #tpu.pipeline_mode<synchronous>, transform_indices = @transform_13, window_bounds = array<i64: 1, 128>}, {pipeline_mode = #tpu.pipeline_mode<synchronous>, transform_indices = @transform_14, window_bounds = array<i64: 128, 128>}, {pipeline_mode = #tpu.pipeline_mode<synchronous>, transform_indices = @transform_15, window_bounds = array<i64: 1, 128>}, {transform_indices = @transform_16, window_bounds = array<i64: 1, 20, 128>}]} {
    %c0 = arith.constant 0 : index
    %c0_0 = arith.constant 0 : index
    %c0_1 = arith.constant 0 : index
    %c0_2 = arith.constant 0 : index
    %0 = vector.load %arg1[%c0, %c0_0, %c0_1, %c0_2] : memref<1x20x16x64xbf16, #tpu.memory_space<vmem>>, vector<1x20x16x64xbf16>
    %1 = vector.shape_cast %0 : vector<1x20x16x64xbf16> to vector<320x64xbf16>
    %c0_3 = arith.constant 0 : index
    %c0_4 = arith.constant 0 : index
    %2 = vector.load %arg5[%c0_3, %c0_4] : memref<64x256xbf16, #tpu.memory_space<vmem>>, vector<64x256xbf16>
    %cst = arith.constant dense<0.000000e+00> : vector<320x256xf32>
    %3 = tpu.matmul %1, %2, %cst {dimension_numbers = #tpu.dot_dimension_numbers<[1], [0], [0], [1], [0, 0, 1, 1], [], []>} : vector<320x64xbf16>, vector<64x256xbf16>, vector<320x256xf32> -> vector<320x256xf32>
    %4 = vector.extract_strided_slice %3 {offsets = [0, 0], sizes = [320, 128], strides = [1, 1]} : vector<320x256xf32> to vector<320x128xf32>
    %5 = vector.extract_strided_slice %3 {offsets = [0, 128], sizes = [320, 128], strides = [1, 1]} : vector<320x256xf32> to vector<320x128xf32>
    %c0_5 = arith.constant 0 : index
    %c0_6 = arith.constant 0 : index
    %6 = vector.load %arg6[%c0_5, %c0_6] : memref<1x128xf32, #tpu.memory_space<vmem>>, vector<1x128xf32>
    %7 = vector.broadcast %6 : vector<1x128xf32> to vector<320x128xf32>
    %8 = arith.addf %5, %7 : vector<320x128xf32>
    %cst_7 = arith.constant 0.000000e+00 : f32
    %9 = vector.broadcast %cst_7 : f32 to vector<320x128xf32>
    %10 = arith.maximumf %8, %9 : vector<320x128xf32>
    %11 = arith.truncf %10 : vector<320x128xf32> to vector<320x128xbf16>
    %c0_8 = arith.constant 0 : index
    %c0_9 = arith.constant 0 : index
    %12 = vector.load %arg7[%c0_8, %c0_9] : memref<128x128xbf16, #tpu.memory_space<vmem>>, vector<128x128xbf16>
    %cst_10 = arith.constant dense<0.000000e+00> : vector<320x128xf32>
    %13 = tpu.matmul %11, %12, %cst_10 {dimension_numbers = #tpu.dot_dimension_numbers<[1], [0], [0], [1], [0, 0, 1, 1], [], []>} : vector<320x128xbf16>, vector<128x128xbf16>, vector<320x128xf32> -> vector<320x128xf32>
    %c0_11 = arith.constant 0 : index
    %c0_12 = arith.constant 0 : index
    %14 = vector.load %arg8[%c0_11, %c0_12] : memref<1x128xf32, #tpu.memory_space<vmem>>, vector<1x128xf32>
    %15 = vector.broadcast %14 : vector<1x128xf32> to vector<320x128xf32>
    %16 = arith.addf %13, %15 : vector<320x128xf32>
    %cst_13 = arith.constant 0.000000e+00 : f32
    %17 = vector.broadcast %cst_13 : f32 to vector<320x128xf32>
    %18 = arith.maximumf %16, %17 : vector<320x128xf32>
    %19 = arith.truncf %18 : vector<320x128xf32> to vector<320x128xbf16>
    %cst_14 = arith.constant dense<0.000000e+00> : vector<320x320xf32>
    %20 = tpu.matmul %19, %19, %cst_14 {dimension_numbers = #tpu.dot_dimension_numbers<[1], [1], [0], [0], [0, 0, 1, 0], [], []>} : vector<320x128xbf16>, vector<320x128xbf16>, vector<320x320xf32> -> vector<320x320xf32>
    %c0_15 = arith.constant 0 : index
    %c0_16 = arith.constant 0 : index
    %21 = vector.load %arg4[%c0_15, %c0_16] : memref<320x320xf32, #tpu.memory_space<vmem>>, vector<320x320xf32>
    %22 = arith.addf %20, %21 : vector<320x320xf32>
    %c0_17 = arith.constant 0 : index
    %c0_18 = arith.constant 0 : index
    %c0_19 = arith.constant 0 : index
    %23 = vector.load %arg3[%c0_17, %c0_18, %c0_19] : memref<1x1x320xf32, #tpu.memory_space<vmem>>, vector<1x1x320xf32>
    %24 = vector.shape_cast %23 : vector<1x1x320xf32> to vector<1x320xf32>
    %25 = vector.broadcast %24 : vector<1x320xf32> to vector<320x320xf32>
    %26 = arith.addf %22, %25 : vector<320x320xf32>
    %cst_20 = arith.constant dense<0xFF800000> : vector<320xf32>
    %27 = vector.multi_reduction <maximumf>, %26, %cst_20 [1] : vector<320x320xf32> to vector<320xf32>
    %28 = vector.shape_cast %27 : vector<320xf32> to vector<320x1xf32>
    %29 = vector.broadcast %28 : vector<320x1xf32> to vector<320x320xf32>
    %30 = arith.subf %26, %29 : vector<320x320xf32>
    %31 = math.exp %30 : vector<320x320xf32>
    %cst_21 = arith.constant dense<0.000000e+00> : vector<320xf32>
    %32 = vector.multi_reduction <add>, %31, %cst_21 [1] : vector<320x320xf32> to vector<320xf32>
    %33 = vector.shape_cast %32 : vector<320xf32> to vector<320x1xf32>
    %34 = tpu.reciprocal %33 {approx = true} : vector<320x1xf32> -> vector<320x1xf32>
    %35 = vector.broadcast %34 : vector<320x1xf32> to vector<320x320xf32>
    %36 = arith.mulf %31, %35 : vector<320x320xf32>
    %37 = arith.truncf %4 : vector<320x128xf32> to vector<320x128xbf16>
    %38 = arith.truncf %36 : vector<320x320xf32> to vector<320x320xbf16>
    %cst_22 = arith.constant dense<0.000000e+00> : vector<320x128xf32>
    %39 = tpu.matmul %38, %37, %cst_22 {dimension_numbers = #tpu.dot_dimension_numbers<[1], [0], [0], [1], [0, 0, 1, 1], [], []>} : vector<320x320xbf16>, vector<320x128xbf16>, vector<320x128xf32> -> vector<320x128xf32>
    %40 = arith.truncf %39 : vector<320x128xf32> to vector<320x128xbf16>
    %41 = tpu.concatenate %37, %40 in 1 : vector<320x128xbf16>, vector<320x128xbf16> -> vector<320x256xbf16>
    %c0_23 = arith.constant 0 : index
    %c0_24 = arith.constant 0 : index
    %42 = vector.load %arg9[%c0_23, %c0_24] : memref<256x128xbf16, #tpu.memory_space<vmem>>, vector<256x128xbf16>
    %cst_25 = arith.constant dense<0.000000e+00> : vector<320x128xf32>
    %43 = tpu.matmul %41, %42, %cst_25 {dimension_numbers = #tpu.dot_dimension_numbers<[1], [0], [0], [1], [0, 0, 1, 1], [], []>} : vector<320x256xbf16>, vector<256x128xbf16>, vector<320x128xf32> -> vector<320x128xf32>
    %c0_26 = arith.constant 0 : index
    %c0_27 = arith.constant 0 : index
    %44 = vector.load %arg10[%c0_26, %c0_27] : memref<1x128xf32, #tpu.memory_space<vmem>>, vector<1x128xf32>
    %45 = vector.broadcast %44 : vector<1x128xf32> to vector<320x128xf32>
    %46 = arith.addf %43, %45 : vector<320x128xf32>
    %cst_28 = arith.constant 0.000000e+00 : f32
    %47 = vector.broadcast %cst_28 : f32 to vector<320x128xf32>
    %48 = arith.maximumf %46, %47 : vector<320x128xf32>
    %49 = arith.truncf %48 : vector<320x128xf32> to vector<320x128xbf16>
    %c0_29 = arith.constant 0 : index
    %c0_30 = arith.constant 0 : index
    %50 = vector.load %arg11[%c0_29, %c0_30] : memref<128x128xbf16, #tpu.memory_space<vmem>>, vector<128x128xbf16>
    %cst_31 = arith.constant dense<0.000000e+00> : vector<320x128xf32>
    %51 = tpu.matmul %49, %50, %cst_31 {dimension_numbers = #tpu.dot_dimension_numbers<[1], [0], [0], [1], [0, 0, 1, 1], [], []>} : vector<320x128xbf16>, vector<128x128xbf16>, vector<320x128xf32> -> vector<320x128xf32>
    %c0_32 = arith.constant 0 : index
    %c0_33 = arith.constant 0 : index
    %52 = vector.load %arg12[%c0_32, %c0_33] : memref<1x128xf32, #tpu.memory_space<vmem>>, vector<1x128xf32>
    %53 = vector.broadcast %52 : vector<1x128xf32> to vector<320x128xf32>
    %54 = arith.addf %51, %53 : vector<320x128xf32>
    %cst_34 = arith.constant 0.000000e+00 : f32
    %55 = vector.broadcast %cst_34 : f32 to vector<320x128xf32>
    %56 = arith.maximumf %54, %55 : vector<320x128xf32>
    %c0_35 = arith.constant 0 : index
    %c0_36 = arith.constant 0 : index
    %c0_37 = arith.constant 0 : index
    %57 = vector.load %arg2[%c0_35, %c0_36, %c0_37] : memref<1x20x16xf32, #tpu.memory_space<vmem>>, vector<1x20x16xf32>
    %58 = vector.shape_cast %57 : vector<1x20x16xf32> to vector<20x16xf32>
    %59 = vector.shape_cast %56 : vector<320x128xf32> to vector<20x16x128xf32>
    %60 = vector.shape_cast %58 : vector<20x16xf32> to vector<20x16x1xf32>
    %61 = vector.broadcast %60 : vector<20x16x1xf32> to vector<20x16x128xf32>
    %62 = arith.mulf %59, %61 : vector<20x16x128xf32>
    %63 = vector.extract_strided_slice %62 {offsets = [0, 0, 0], sizes = [20, 8, 128], strides = [1, 1, 1]} : vector<20x16x128xf32> to vector<20x8x128xf32>
    %cst_38 = arith.constant dense<0.000000e+00> : vector<20x128xf32>
    %64 = vector.multi_reduction <add>, %63, %cst_38 [1] : vector<20x8x128xf32> to vector<20x128xf32>
    %65 = vector.extract_strided_slice %62 {offsets = [0, 8, 0], sizes = [20, 8, 128], strides = [1, 1, 1]} : vector<20x16x128xf32> to vector<20x8x128xf32>
    %cst_39 = arith.constant dense<0.000000e+00> : vector<20x128xf32>
    %66 = vector.multi_reduction <add>, %65, %cst_39 [1] : vector<20x8x128xf32> to vector<20x128xf32>
    %67 = tpu.concatenate %64, %66 in 1 : vector<20x128xf32>, vector<20x128xf32> -> vector<20x256xf32>
    %68 = arith.truncf %67 : vector<20x256xf32> to vector<20x256xbf16>
    %c0_40 = arith.constant 0 : index
    %c0_41 = arith.constant 0 : index
    %69 = vector.load %arg13[%c0_40, %c0_41] : memref<256x128xbf16, #tpu.memory_space<vmem>>, vector<256x128xbf16>
    %cst_42 = arith.constant dense<0.000000e+00> : vector<20x128xf32>
    %70 = tpu.matmul %68, %69, %cst_42 {dimension_numbers = #tpu.dot_dimension_numbers<[1], [0], [0], [1], [0, 0, 1, 1], [], []>} : vector<20x256xbf16>, vector<256x128xbf16>, vector<20x128xf32> -> vector<20x128xf32>
    %c0_43 = arith.constant 0 : index
    %c0_44 = arith.constant 0 : index
    %71 = vector.load %arg14[%c0_43, %c0_44] : memref<1x128xf32, #tpu.memory_space<vmem>>, vector<1x128xf32>
    %72 = vector.broadcast %71 : vector<1x128xf32> to vector<20x128xf32>
    %73 = arith.addf %70, %72 : vector<20x128xf32>
    %cst_45 = arith.constant 0.000000e+00 : f32
    %74 = vector.broadcast %cst_45 : f32 to vector<20x128xf32>
    %75 = arith.maximumf %73, %74 : vector<20x128xf32>
    %76 = arith.truncf %75 : vector<20x128xf32> to vector<20x128xbf16>
    %c0_46 = arith.constant 0 : index
    %c0_47 = arith.constant 0 : index
    %77 = vector.load %arg15[%c0_46, %c0_47] : memref<128x128xbf16, #tpu.memory_space<vmem>>, vector<128x128xbf16>
    %cst_48 = arith.constant dense<0.000000e+00> : vector<20x128xf32>
    %78 = tpu.matmul %76, %77, %cst_48 {dimension_numbers = #tpu.dot_dimension_numbers<[1], [0], [0], [1], [0, 0, 1, 1], [], []>} : vector<20x128xbf16>, vector<128x128xbf16>, vector<20x128xf32> -> vector<20x128xf32>
    %c0_49 = arith.constant 0 : index
    %c0_50 = arith.constant 0 : index
    %79 = vector.load %arg16[%c0_49, %c0_50] : memref<1x128xf32, #tpu.memory_space<vmem>>, vector<1x128xf32>
    %80 = vector.broadcast %79 : vector<1x128xf32> to vector<20x128xf32>
    %81 = arith.addf %78, %80 : vector<20x128xf32>
    %c0_51 = arith.constant 0 : index
    %c0_52 = arith.constant 0 : index
    %c0_53 = arith.constant 0 : index
    %82 = vector.load %arg17[%c0_51, %c0_52, %c0_53] : memref<1x20x128xf32, #tpu.memory_space<vmem>>, vector<1x20x128xf32>
    %83 = vector.shape_cast %82 : vector<1x20x128xf32> to vector<20x128xf32>
    %84 = vector.shape_cast %81 : vector<20x128xf32> to vector<1x20x128xf32>
    tpu.vector_store %arg17[%c0_51, %c0_52, %c0_53], %84 {strides = array<i32>} : memref<1x20x128xf32, #tpu.memory_space<vmem>>, vector<1x20x128xf32>,
    return
  }
  func.func @transform_0(%arg0: i32) -> (i32, i32, i32, i32) {
    %c0_i32 = arith.constant 0 : i32
    %c0_i32_0 = arith.constant 0 : i32
    %c0_i32_1 = arith.constant 0 : i32
    %c0_i32_2 = arith.constant 0 : i32
    return %arg0, %c0_i32, %c0_i32_0, %c0_i32_1 : i32, i32, i32, i32
  }
  func.func @transform_1(%arg0: i32) -> (i32, i32, i32) {
    %c0_i32 = arith.constant 0 : i32
    %c0_i32_0 = arith.constant 0 : i32
    %c0_i32_1 = arith.constant 0 : i32
    return %arg0, %c0_i32, %c0_i32_0 : i32, i32, i32
  }
  func.func @transform_2(%arg0: i32) -> (i32, i32, i32) {
    %c0_i32 = arith.constant 0 : i32
    %c0_i32_0 = arith.constant 0 : i32
    %c0_i32_1 = arith.constant 0 : i32
    return %arg0, %c0_i32, %c0_i32_0 : i32, i32, i32
  }
  func.func @transform_3(%arg0: i32) -> (i32, i32) {
    %c0_i32 = arith.constant 0 : i32
    %c0_i32_0 = arith.constant 0 : i32
    %c0_i32_1 = arith.constant 0 : i32
    return %c0_i32, %c0_i32_0 : i32, i32
  }
  func.func @transform_4(%arg0: i32) -> (i32, i32) {
    %c0_i32 = arith.constant 0 : i32
    %c0_i32_0 = arith.constant 0 : i32
    %c0_i32_1 = arith.constant 0 : i32
    return %c0_i32, %c0_i32_0 : i32, i32
  }
  func.func @transform_5(%arg0: i32) -> (i32, i32) {
    %c0_i32 = arith.constant 0 : i32
    %c0_i32_0 = arith.constant 0 : i32
    %c0_i32_1 = arith.constant 0 : i32
    return %c0_i32, %c0_i32_0 : i32, i32
  }
  func.func @transform_6(%arg0: i32) -> (i32, i32) {
    %c0_i32 = arith.constant 0 : i32
    %c0_i32_0 = arith.constant 0 : i32
    %c0_i32_1 = arith.constant 0 : i32
    return %c0_i32, %c0_i32_0 : i32, i32
  }
  func.func @transform_7(%arg0: i32) -> (i32, i32) {
    %c0_i32 = arith.constant 0 : i32
    %c0_i32_0 = arith.constant 0 : i32
    %c0_i32_1 = arith.constant 0 : i32
    return %c0_i32, %c0_i32_0 : i32, i32
  }
  func.func @transform_8(%arg0: i32) -> (i32, i32) {
    %c0_i32 = arith.constant 0 : i32
    %c0_i32_0 = arith.constant 0 : i32
    %c0_i32_1 = arith.constant 0 : i32
    return %c0_i32, %c0_i32_0 : i32, i32
  }
  func.func @transform_9(%arg0: i32) -> (i32, i32) {
    %c0_i32 = arith.constant 0 : i32
    %c0_i32_0 = arith.constant 0 : i32
    %c0_i32_1 = arith.constant 0 : i32
    return %c0_i32, %c0_i32_0 : i32, i32
  }
  func.func @transform_10(%arg0: i32) -> (i32, i32) {
    %c0_i32 = arith.constant 0 : i32
    %c0_i32_0 = arith.constant 0 : i32
    %c0_i32_1 = arith.constant 0 : i32
    return %c0_i32, %c0_i32_0 : i32, i32
  }
  func.func @transform_11(%arg0: i32) -> (i32, i32) {
    %c0_i32 = arith.constant 0 : i32
    %c0_i32_0 = arith.constant 0 : i32
    %c0_i32_1 = arith.constant 0 : i32
    return %c0_i32, %c0_i32_0 : i32, i32
  }
  func.func @transform_12(%arg0: i32) -> (i32, i32) {
    %c0_i32 = arith.constant 0 : i32
    %c0_i32_0 = arith.constant 0 : i32
    %c0_i32_1 = arith.constant 0 : i32
    return %c0_i32, %c0_i32_0 : i32, i32
  }
  func.func @transform_13(%arg0: i32) -> (i32, i32) {
    %c0_i32 = arith.constant 0 : i32
    %c0_i32_0 = arith.constant 0 : i32
    %c0_i32_1 = arith.constant 0 : i32
    return %c0_i32, %c0_i32_0 : i32, i32
  }
  func.func @transform_14(%arg0: i32) -> (i32, i32) {
    %c0_i32 = arith.constant 0 : i32
    %c0_i32_0 = arith.constant 0 : i32
    %c0_i32_1 = arith.constant 0 : i32
    return %c0_i32, %c0_i32_0 : i32, i32
  }
  func.func @transform_15(%arg0: i32) -> (i32, i32) {
    %c0_i32 = arith.constant 0 : i32
    %c0_i32_0 = arith.constant 0 : i32
    %c0_i32_1 = arith.constant 0 : i32
    return %c0_i32, %c0_i32_0 : i32, i32
  }
  func.func @transform_16(%arg0: i32) -> (i32, i32, i32) {
    %c0_i32 = arith.constant 0 : i32
    %c0_i32_0 = arith.constant 0 : i32
    %c0_i32_1 = arith.constant 0 : i32
    return %arg0, %c0_i32, %c0_i32_0 : i32, i32, i32
  }
}

</mosaic_0001>

<llo_original>
// kernel: tpu_custom_call.1
$region0: #{tpu_custom_call.1}
  #allocation0 [shape = 'u32[]', space=smem, size = 0x4, offset = 0x4, fixed_abs, tag = 'smem constant byte address 0x4 - core index']
  #allocation1 [shape = 'u32[144,128]{1,0:T(1,128)}', space=vmem, size = 0x12000, scoped, tag = 'internal scratch']
  %s0 = inlined_call_operand.hbm [shape: bf16[2,20,16,64], index: 0, kind: input, shape index: {}]
  %s1 = inlined_call_operand.vmem [shape: f32[2,20,16], index: 1, kind: input, shape index: {}]
  %s2 = inlined_call_operand.vmem [shape: f32[2,1,320], index: 2, kind: input, shape index: {}]
  %s3 = inlined_call_operand.hbm [shape: f32[320,320], index: 3, kind: input, shape index: {}]
  %s4 = inlined_call_operand.vmem [shape: bf16[64,256], index: 4, kind: input, shape index: {}]
  %s5 = inlined_call_operand.vmem [shape: f32[1,128], index: 5, kind: input, shape index: {}]
  %s6 = inlined_call_operand.hbm [shape: bf16[128,128], index: 6, kind: input, shape index: {}]
  %s7 = inlined_call_operand.vmem [shape: f32[1,128], index: 7, kind: input, shape index: {}]
  %s8 = inlined_call_operand.hbm [shape: bf16[256,128], index: 8, kind: input, shape index: {}]
  %s9 = inlined_call_operand.vmem [shape: f32[1,128], index: 9, kind: input, shape index: {}]
  %s10 = inlined_call_operand.hbm [shape: bf16[128,128], index: 10, kind: input, shape index: {}]
  %s11 = inlined_call_operand.vmem [shape: f32[1,128], index: 11, kind: input, shape index: {}]
  %s12 = inlined_call_operand.hbm [shape: bf16[256,128], index: 12, kind: input, shape index: {}]
  %s13 = inlined_call_operand.vmem [shape: f32[1,128], index: 13, kind: input, shape index: {}]
  %s14 = inlined_call_operand.hbm [shape: bf16[128,128], index: 14, kind: input, shape index: {}]
  %s15 = inlined_call_operand.vmem [shape: f32[1,128], index: 15, kind: input, shape index: {}]
  %s16 = inlined_call_operand.vmem [shape: f32[2,20,128], index: 16, kind: output, shape index: {}]
  %s17 = sld [smem:[#allocation0]]
  $region125: #{tpu_custom_call.1} parent=0
    _
  %s19 = ssub.s32 1, %s17
  %s20 = scalar_select 0, %s19, %s17
  $region1: #{tpu_custom_call.1} parent=0
    #allocation2 [shape = 'u8[163840]{0}', space=vmem, size = 0x28000, scoped, tag = 'input window, operand 0']
    #allocation3 [shape = 's32[2]{0}', space=sflag, size = 0x8, scoped, tag = 'scoped memory for tpu_custom_call.1']
    #allocation4 [shape = 'u8[491520]{0}', space=vmem, size = 0x78000, scoped, tag = 'input window, operand 3, single buffered']
    #allocation5 [shape = 's32[1]{0}', space=sflag, size = 0x4, scoped, tag = 'scoped memory for tpu_custom_call.1']
    #allocation6 [shape = 'u8[32768]{0}', space=vmem, size = 0x8000, scoped, tag = 'input window, operand 6, single buffered']
    #allocation7 [shape = 'u8[65536]{0}', space=vmem, size = 0x10000, scoped, tag = 'input window, operand 8, single buffered']
    #allocation8 [shape = 's32[1]{0}', space=sflag, size = 0x4, scoped, tag = 'scoped memory for tpu_custom_call.1']
    #allocation9 [shape = 'u8[32768]{0}', space=vmem, size = 0x8000, scoped, tag = 'input window, operand 10, single buffered']
    #allocation10 [shape = 'u8[65536]{0}', space=vmem, size = 0x10000, scoped, tag = 'input window, operand 12, single buffered']
    #allocation11 [shape = 's32[1]{0}', space=sflag, size = 0x4, scoped, tag = 'scoped memory for tpu_custom_call.1']
    #allocation12 [shape = 'u8[32768]{0}', space=vmem, size = 0x8000, scoped, tag = 'input window, operand 14, single buffered']
    %21 = vsyncpa [#allocation3], 0
    %s22 = scalar_lea.sflag [#allocation3], 1
    %23 = vsyncpa %s22, 0
    %24 = vsyncpa [#allocation5], 0
    %25 = vsyncpa [#allocation8], 0
    %26 = vsyncpa [#allocation11], 0
    loop: start=0, step=1, limit=4
    $region2: #{tpu_custom_call.1} parent=1 // loop_pre_header
      _
    $region3: #{tpu_custom_call.1} parent=1 // loop_header
      %s28 = sphi 0, %s32
      %p29 = scmp.ge.s32.totalorder %s28, 4
      %s38 = sphi 0, %s40
      %s41 = sphi 0, %s38
      %s42 = sphi 0, %s41
      %s58 = sphi 0, %s42
      %s64 = sphi 0, %s66
      %s67 = sphi 0, %s64
      %s68 = sphi 0, %s67
      %s84 = sphi 0, %s68
      %s90 = sphi 0, %s92
      %s93 = sphi 0, %s90
      %s94 = sphi 0, %s93
      %s110 = sphi 0, %s94
      %s114 = sphi 0, %s114
      %s116 = sphi 0, %s114
      %s117 = sphi 0, %s116
      %s131 = sphi 0, %s117
      %s135 = sphi 0, %s135
      %s137 = sphi 0, %s135
      %s138 = sphi 0, %s137
      %s152 = sphi 0, %s138
      %s156 = sphi 0, %s156
      %s158 = sphi 0, %s156
      %s159 = sphi 0, %s158
      %s173 = sphi 0, %s159
      %s177 = sphi 0, %s177
      %s179 = sphi 0, %s177
      %s180 = sphi 0, %s179
      %s194 = sphi 0, %s180
      %s198 = sphi 0, %s198
      %s200 = sphi 0, %s198
      %s201 = sphi 0, %s200
      %s215 = sphi 0, %s201
      %s219 = sphi 0, %s219
      %s221 = sphi 0, %s219
      %s222 = sphi 0, %s221
      %s236 = sphi 0, %s222
      %s240 = sphi 0, %s240
      %s242 = sphi 0, %s240
      %s243 = sphi 0, %s242
      %s257 = sphi 0, %s243
      %s261 = sphi 0, %s261
      %s263 = sphi 0, %s261
      %s264 = sphi 0, %s263
      %s278 = sphi 0, %s264
      %s282 = sphi 0, %s282
      %s284 = sphi 0, %s282
      %s285 = sphi 0, %s284
      %s299 = sphi 0, %s285
      %s303 = sphi 0, %s303
      %s305 = sphi 0, %s303
      %s306 = sphi 0, %s305
      %s320 = sphi 0, %s306
      %s324 = sphi 0, %s324
      %s326 = sphi 0, %s324
      %s327 = sphi 0, %s326
      %s341 = sphi 0, %s327
      %s345 = sphi 0, %s345
      %s347 = sphi 0, %s345
      %s348 = sphi 0, %s347
      %s362 = sphi 0, %s348
      %s366 = sphi 0, %s366
      %s368 = sphi 0, %s366
      %s369 = sphi 0, %s368
      %s383 = sphi 0, %s369
      %s389 = sphi 0, %s391
      %s392 = sphi 0, %s389
      %s393 = sphi 0, %s392
      %s409 = sphi 0, %s393
    $region4: #{tpu_custom_call.1} parent=1 // loop_header_branch
      %31 = sbr.rel (%p29) target = $region8
    $region5: #{tpu_custom_call.1} parent=1 // loop_body
      %s33 = ssub.s32 %s28, 1
      %s34 = ssub.s32 %s28, 2
      %s35 = sadd.s32 %s28, 1
      %s36 = ssub.s32 %s28, %s35
      %p37 = scmp.eq.s32.totalorder %s36, 0
      %s39 = sadd.s32 %s38, 1
      %s40 = scalar_select %p37, %s38, %s39
      %p43 = pneg %p37
      %p44 = scmp.eq.s32.totalorder %s28, 1
      %p45 = por %p43, %p44
      %p46 = scmp.ne.s32.totalorder %s38, %s41
      %p47 = scmp.eq.s32.totalorder %s28, 0
      %p48 = por %p46, %p47
      %p49 = scmp.ne.s32.totalorder %s38, %s41
      %p50 = scmp.eq.s32.totalorder %s33, 1
      %p51 = por %p49, %p50
      %p52 = scmp.ne.s32.totalorder %s41, %s42
      %p53 = scmp.eq.s32.totalorder %s33, 0
      %p54 = por %p52, %p53
      %p55 = scmp.ne.s32.totalorder %s41, %s42
      %p56 = scmp.eq.s32.totalorder %s34, 1
      %p57 = por %p55, %p56
      %p59 = scmp.ne.s32.totalorder %s42, %s58
      %p60 = scmp.eq.s32.totalorder %s34, 0
      %p61 = por %p59, %p60
      %s62 = ssub.s32 %s28, %s35
      %p63 = scmp.eq.s32.totalorder %s62, 0
      %s65 = sadd.s32 %s64, 1
      %s66 = scalar_select %p63, %s64, %s65
      %p69 = pneg %p63
      %p70 = scmp.eq.s32.totalorder %s28, 1
      %p71 = por %p69, %p70
      %p72 = scmp.ne.s32.totalorder %s64, %s67
      %p73 = scmp.eq.s32.totalorder %s28, 0
      %p74 = por %p72, %p73
      %p75 = scmp.ne.s32.totalorder %s64, %s67
      %p76 = scmp.eq.s32.totalorder %s33, 1
      %p77 = por %p75, %p76
      %p78 = scmp.ne.s32.totalorder %s67, %s68
      %p79 = scmp.eq.s32.totalorder %s33, 0
      %p80 = por %p78, %p79
      %p81 = scmp.ne.s32.totalorder %s67, %s68
      %p82 = scmp.eq.s32.totalorder %s34, 1
      %p83 = por %p81, %p82
      %p85 = scmp.ne.s32.totalorder %s68, %s84
      %p86 = scmp.eq.s32.totalorder %s34, 0
      %p87 = por %p85, %p86
      %s88 = ssub.s32 %s28, %s35
      %p89 = scmp.eq.s32.totalorder %s88, 0
      %s91 = sadd.s32 %s90, 1
      %s92 = scalar_select %p89, %s90, %s91
      %p95 = pneg %p89
      %p96 = scmp.eq.s32.totalorder %s28, 1
      %p97 = por %p95, %p96
      %p98 = scmp.ne.s32.totalorder %s90, %s93
      %p99 = scmp.eq.s32.totalorder %s28, 0
      %p100 = por %p98, %p99
      %p101 = scmp.ne.s32.totalorder %s90, %s93
      %p102 = scmp.eq.s32.totalorder %s33, 1
      %p103 = por %p101, %p102
      %p104 = scmp.ne.s32.totalorder %s93, %s94
      %p105 = scmp.eq.s32.totalorder %s33, 0
      %p106 = por %p104, %p105
      %p107 = scmp.ne.s32.totalorder %s93, %s94
      %p108 = scmp.eq.s32.totalorder %s34, 1
      %p109 = por %p107, %p108
      %p111 = scmp.ne.s32.totalorder %s94, %s110
      %p112 = scmp.eq.s32.totalorder %s34, 0
      %p113 = por %p111, %p112
      %s115 = sadd.s32 %s114, 1
      %p118 = scmp.eq.s32.totalorder %s28, 1
      %p119 = scmp.ne.s32.totalorder %s114, %s116
      %p120 = scmp.eq.s32.totalorder %s28, 0
      %p121 = por %p119, %p120
      %p122 = scmp.ne.s32.totalorder %s114, %s116
      %p123 = scmp.eq.s32.totalorder %s33, 1
      %p124 = por %p122, %p123
      %p125 = scmp.ne.s32.totalorder %s116, %s117
      %p126 = scmp.eq.s32.totalorder %s33, 0
      %p127 = por %p125, %p126
      %p128 = scmp.ne.s32.totalorder %s116, %s117
      %p129 = scmp.eq.s32.totalorder %s34, 1
      %p130 = por %p128, %p129
      %p132 = scmp.ne.s32.totalorder %s117, %s131
      %p133 = scmp.eq.s32.totalorder %s34, 0
      %p134 = por %p132, %p133
      %s136 = sadd.s32 %s135, 1
      %p139 = scmp.eq.s32.totalorder %s28, 1
      %p140 = scmp.ne.s32.totalorder %s135, %s137
      %p141 = scmp.eq.s32.totalorder %s28, 0
      %p142 = por %p140, %p141
      %p143 = scmp.ne.s32.totalorder %s135, %s137
      %p144 = scmp.eq.s32.totalorder %s33, 1
      %p145 = por %p143, %p144
      %p146 = scmp.ne.s32.totalorder %s137, %s138
      %p147 = scmp.eq.s32.totalorder %s33, 0
      %p148 = por %p146, %p147
      %p149 = scmp.ne.s32.totalorder %s137, %s138
      %p150 = scmp.eq.s32.totalorder %s34, 1
      %p151 = por %p149, %p150
      %p153 = scmp.ne.s32.totalorder %s138, %s152
      %p154 = scmp.eq.s32.totalorder %s34, 0
      %p155 = por %p153, %p154
      %s157 = sadd.s32 %s156, 1
      %p160 = scmp.eq.s32.totalorder %s28, 1
      %p161 = scmp.ne.s32.totalorder %s156, %s158
      %p162 = scmp.eq.s32.totalorder %s28, 0
      %p163 = por %p161, %p162
      %p164 = scmp.ne.s32.totalorder %s156, %s158
      %p165 = scmp.eq.s32.totalorder %s33, 1
      %p166 = por %p164, %p165
      %p167 = scmp.ne.s32.totalorder %s158, %s159
      %p168 = scmp.eq.s32.totalorder %s33, 0
      %p169 = por %p167, %p168
      %p170 = scmp.ne.s32.totalorder %s158, %s159
      %p171 = scmp.eq.s32.totalorder %s34, 1
      %p172 = por %p170, %p171
      %p174 = scmp.ne.s32.totalorder %s159, %s173
      %p175 = scmp.eq.s32.totalorder %s34, 0
      %p176 = por %p174, %p175
      %s178 = sadd.s32 %s177, 1
      %p181 = scmp.eq.s32.totalorder %s28, 1
      %p182 = scmp.ne.s32.totalorder %s177, %s179
      %p183 = scmp.eq.s32.totalorder %s28, 0
      %p184 = por %p182, %p183
      %p185 = scmp.ne.s32.totalorder %s177, %s179
      %p186 = scmp.eq.s32.totalorder %s33, 1
      %p187 = por %p185, %p186
      %p188 = scmp.ne.s32.totalorder %s179, %s180
      %p189 = scmp.eq.s32.totalorder %s33, 0
      %p190 = por %p188, %p189
      %p191 = scmp.ne.s32.totalorder %s179, %s180
      %p192 = scmp.eq.s32.totalorder %s34, 1
      %p193 = por %p191, %p192
      %p195 = scmp.ne.s32.totalorder %s180, %s194
      %p196 = scmp.eq.s32.totalorder %s34, 0
      %p197 = por %p195, %p196
      %s199 = sadd.s32 %s198, 1
      %p202 = scmp.eq.s32.totalorder %s28, 1
      %p203 = scmp.ne.s32.totalorder %s198, %s200
      %p204 = scmp.eq.s32.totalorder %s28, 0
      %p205 = por %p203, %p204
      %p206 = scmp.ne.s32.totalorder %s198, %s200
      %p207 = scmp.eq.s32.totalorder %s33, 1
      %p208 = por %p206, %p207
      %p209 = scmp.ne.s32.totalorder %s200, %s201
      %p210 = scmp.eq.s32.totalorder %s33, 0
      %p211 = por %p209, %p210
      %p212 = scmp.ne.s32.totalorder %s200, %s201
      %p213 = scmp.eq.s32.totalorder %s34, 1
      %p214 = por %p212, %p213
      %p216 = scmp.ne.s32.totalorder %s201, %s215
      %p217 = scmp.eq.s32.totalorder %s34, 0
      %p218 = por %p216, %p217
      %s220 = sadd.s32 %s219, 1
      %p223 = scmp.eq.s32.totalorder %s28, 1
      %p224 = scmp.ne.s32.totalorder %s219, %s221
      %p225 = scmp.eq.s32.totalorder %s28, 0
      %p226 = por %p224, %p225
      %p227 = scmp.ne.s32.totalorder %s219, %s221
      %p228 = scmp.eq.s32.totalorder %s33, 1
      %p229 = por %p227, %p228
      %p230 = scmp.ne.s32.totalorder %s221, %s222
      %p231 = scmp.eq.s32.totalorder %s33, 0
      %p232 = por %p230, %p231
      %p233 = scmp.ne.s32.totalorder %s221, %s222
      %p234 = scmp.eq.s32.totalorder %s34, 1
      %p235 = por %p233, %p234
      %p237 = scmp.ne.s32.totalorder %s222, %s236
      %p238 = scmp.eq.s32.totalorder %s34, 0
      %p239 = por %p237, %p238
      %s241 = sadd.s32 %s240, 1
      %p244 = scmp.eq.s32.totalorder %s28, 1
      %p245 = scmp.ne.s32.totalorder %s240, %s242
      %p246 = scmp.eq.s32.totalorder %s28, 0
      %p247 = por %p245, %p246
      %p248 = scmp.ne.s32.totalorder %s240, %s242
      %p249 = scmp.eq.s32.totalorder %s33, 1
      %p250 = por %p248, %p249
      %p251 = scmp.ne.s32.totalorder %s242, %s243
      %p252 = scmp.eq.s32.totalorder %s33, 0
      %p253 = por %p251, %p252
      %p254 = scmp.ne.s32.totalorder %s242, %s243
      %p255 = scmp.eq.s32.totalorder %s34, 1
      %p256 = por %p254, %p255
      %p258 = scmp.ne.s32.totalorder %s243, %s257
      %p259 = scmp.eq.s32.totalorder %s34, 0
      %p260 = por %p258, %p259
      %s262 = sadd.s32 %s261, 1
      %p265 = scmp.eq.s32.totalorder %s28, 1
      %p266 = scmp.ne.s32.totalorder %s261, %s263
      %p267 = scmp.eq.s32.totalorder %s28, 0
      %p268 = por %p266, %p267
      %p269 = scmp.ne.s32.totalorder %s261, %s263
      %p270 = scmp.eq.s32.totalorder %s33, 1
      %p271 = por %p269, %p270
      %p272 = scmp.ne.s32.totalorder %s263, %s264
      %p273 = scmp.eq.s32.totalorder %s33, 0
      %p274 = por %p272, %p273
      %p275 = scmp.ne.s32.totalorder %s263, %s264
      %p276 = scmp.eq.s32.totalorder %s34, 1
      %p277 = por %p275, %p276
      %p279 = scmp.ne.s32.totalorder %s264, %s278
      %p280 = scmp.eq.s32.totalorder %s34, 0
      %p281 = por %p279, %p280
      %s283 = sadd.s32 %s282, 1
      %p286 = scmp.eq.s32.totalorder %s28, 1
      %p287 = scmp.ne.s32.totalorder %s282, %s284
      %p288 = scmp.eq.s32.totalorder %s28, 0
      %p289 = por %p287, %p288
      %p290 = scmp.ne.s32.totalorder %s282, %s284
      %p291 = scmp.eq.s32.totalorder %s33, 1
      %p292 = por %p290, %p291
      %p293 = scmp.ne.s32.totalorder %s284, %s285
      %p294 = scmp.eq.s32.totalorder %s33, 0
      %p295 = por %p293, %p294
      %p296 = scmp.ne.s32.totalorder %s284, %s285
      %p297 = scmp.eq.s32.totalorder %s34, 1
      %p298 = por %p296, %p297
      %p300 = scmp.ne.s32.totalorder %s285, %s299
      %p301 = scmp.eq.s32.totalorder %s34, 0
      %p302 = por %p300, %p301
      %s304 = sadd.s32 %s303, 1
      %p307 = scmp.eq.s32.totalorder %s28, 1
      %p308 = scmp.ne.s32.totalorder %s303, %s305
      %p309 = scmp.eq.s32.totalorder %s28, 0
      %p310 = por %p308, %p309
      %p311 = scmp.ne.s32.totalorder %s303, %s305
      %p312 = scmp.eq.s32.totalorder %s33, 1
      %p313 = por %p311, %p312
      %p314 = scmp.ne.s32.totalorder %s305, %s306
      %p315 = scmp.eq.s32.totalorder %s33, 0
      %p316 = por %p314, %p315
      %p317 = scmp.ne.s32.totalorder %s305, %s306
      %p318 = scmp.eq.s32.totalorder %s34, 1
      %p319 = por %p317, %p318
      %p321 = scmp.ne.s32.totalorder %s306, %s320
      %p322 = scmp.eq.s32.totalorder %s34, 0
      %p323 = por %p321, %p322
      %s325 = sadd.s32 %s324, 1
      %p328 = scmp.eq.s32.totalorder %s28, 1
      %p329 = scmp.ne.s32.totalorder %s324, %s326
      %p330 = scmp.eq.s32.totalorder %s28, 0
      %p331 = por %p329, %p330
      %p332 = scmp.ne.s32.totalorder %s324, %s326
      %p333 = scmp.eq.s32.totalorder %s33, 1
      %p334 = por %p332, %p333
      %p335 = scmp.ne.s32.totalorder %s326, %s327
      %p336 = scmp.eq.s32.totalorder %s33, 0
      %p337 = por %p335, %p336
      %p338 = scmp.ne.s32.totalorder %s326, %s327
      %p339 = scmp.eq.s32.totalorder %s34, 1
      %p340 = por %p338, %p339
      %p342 = scmp.ne.s32.totalorder %s327, %s341
      %p343 = scmp.eq.s32.totalorder %s34, 0
      %p344 = por %p342, %p343
      %s346 = sadd.s32 %s345, 1
      %p349 = scmp.eq.s32.totalorder %s28, 1
      %p350 = scmp.ne.s32.totalorder %s345, %s347
      %p351 = scmp.eq.s32.totalorder %s28, 0
      %p352 = por %p350, %p351
      %p353 = scmp.ne.s32.totalorder %s345, %s347
      %p354 = scmp.eq.s32.totalorder %s33, 1
      %p355 = por %p353, %p354
      %p356 = scmp.ne.s32.totalorder %s347, %s348
      %p357 = scmp.eq.s32.totalorder %s33, 0
      %p358 = por %p356, %p357
      %p359 = scmp.ne.s32.totalorder %s347, %s348
      %p360 = scmp.eq.s32.totalorder %s34, 1
      %p361 = por %p359, %p360
      %p363 = scmp.ne.s32.totalorder %s348, %s362
      %p364 = scmp.eq.s32.totalorder %s34, 0
      %p365 = por %p363, %p364
      %s367 = sadd.s32 %s366, 1
      %p370 = scmp.eq.s32.totalorder %s28, 1
      %p371 = scmp.ne.s32.totalorder %s366, %s368
      %p372 = scmp.eq.s32.totalorder %s28, 0
      %p373 = por %p371, %p372
      %p374 = scmp.ne.s32.totalorder %s366, %s368
      %p375 = scmp.eq.s32.totalorder %s33, 1
      %p376 = por %p374, %p375
      %p377 = scmp.ne.s32.totalorder %s368, %s369
      %p378 = scmp.eq.s32.totalorder %s33, 0
      %p379 = por %p377, %p378
      %p380 = scmp.ne.s32.totalorder %s368, %s369
      %p381 = scmp.eq.s32.totalorder %s34, 1
      %p382 = por %p380, %p381
      %p384 = scmp.ne.s32.totalorder %s369, %s383
      %p385 = scmp.eq.s32.totalorder %s34, 0
      %p386 = por %p384, %p385
      %s387 = ssub.s32 %s28, %s35
      %p388 = scmp.eq.s32.totalorder %s387, 0
      %s390 = sadd.s32 %s389, 1
      %s391 = scalar_select %p388, %s389, %s390
      %p394 = pneg %p388
      %p395 = scmp.eq.s32.totalorder %s28, 1
      %p396 = por %p394, %p395
      %p397 = scmp.ne.s32.totalorder %s389, %s392
      %p398 = scmp.eq.s32.totalorder %s28, 0
      %p399 = por %p397, %p398
      %p400 = scmp.ne.s32.totalorder %s389, %s392
      %p401 = scmp.eq.s32.totalorder %s33, 1
      %p402 = por %p400, %p401
      %p403 = scmp.ne.s32.totalorder %s392, %s393
      %p404 = scmp.eq.s32.totalorder %s33, 0
      %p405 = por %p403, %p404
      %p406 = scmp.ne.s32.totalorder %s392, %s393
      %p407 = scmp.eq.s32.totalorder %s34, 1
      %p408 = por %p406, %p407
      %p410 = scmp.ne.s32.totalorder %s393, %s409
      %p411 = scmp.eq.s32.totalorder %s34, 0
      %p412 = por %p410, %p411
      %p413 = scmp.le.s32.totalorder 1, %s28
      %p414 = scmp.lt.s32.totalorder %s28, 3
      %p415 = pnand %p413, %p414
      %p416 = pneg %p415
      // Predicated region
      $region9: #{tpu_custom_call.1} parent=5 // pred_check
        _
      $region10: #{tpu_custom_call.1} parent=5 // pred_check_branch
        %418 = sbr.rel (%p415) target = $region12
      $region11: #{tpu_custom_call.1} parent=5 // pred_region
        %s419 = ssub.s32 %s28, 1
        // Predicated region
        $region13: #{tpu_custom_call.1} parent=11 // pred_check
          %p420 = pneg %p127
        $region14: #{tpu_custom_call.1} parent=11 // pred_check_branch
          %422 = sbr.rel (%p420) target = $region16
        $region15: #{tpu_custom_call.1} parent=11 // pred_region
          %s424 = ssub.s32 15360, 15360
          %425 = vsyncadd [#allocation5], %s424
          %s426 = sshll.u32 [#allocation4], 4
          %s427 = int_to_ptr.vmem [resolvable:$true] %s426
          %432 = dma.hbm_to_vmem [thread:$0]  %s3, 15360, %s427, [#allocation5], 384, 384, 24
        $region16: #{tpu_custom_call.1} parent=11 // pred_fallthru
          _
        // Predicated region
        $region17: #{tpu_custom_call.1} parent=11 // pred_check
          %p433 = pneg %p148
        $region18: #{tpu_custom_call.1} parent=11 // pred_check_branch
          %435 = sbr.rel (%p433) target = $region20
        $region19: #{tpu_custom_call.1} parent=11 // pred_region
          _
        $region20: #{tpu_custom_call.1} parent=11 // pred_fallthru
          _
        // Predicated region
        $region21: #{tpu_custom_call.1} parent=11 // pred_check
          %p436 = pneg %p169
        $region22: #{tpu_custom_call.1} parent=11 // pred_check_branch
          %438 = sbr.rel (%p436) target = $region24
        $region23: #{tpu_custom_call.1} parent=11 // pred_region
          _
        $region24: #{tpu_custom_call.1} parent=11 // pred_fallthru
          _
        // Predicated region
        $region25: #{tpu_custom_call.1} parent=11 // pred_check
          %p439 = pneg %p190
        $region26: #{tpu_custom_call.1} parent=11 // pred_check_branch
          %441 = sbr.rel (%p439) target = $region28
        $region27: #{tpu_custom_call.1} parent=11 // pred_region
          %s443 = ssub.s32 1024, 1024
          %444 = vsyncadd [#allocation5], %s443
          %s445 = sshll.u32 [#allocation6], 4
          %s446 = int_to_ptr.vmem [resolvable:$true] %s445
          %451 = dma.hbm_to_vmem [thread:$0]  %s6, 1024, %s446, [#allocation5], 64, 64, 4
        $region28: #{tpu_custom_call.1} parent=11 // pred_fallthru
          _
        // Predicated region
        $region29: #{tpu_custom_call.1} parent=11 // pred_check
          %p452 = pneg %p211
        $region30: #{tpu_custom_call.1} parent=11 // pred_check_branch
          %454 = sbr.rel (%p452) target = $region32
        $region31: #{tpu_custom_call.1} parent=11 // pred_region
          _
        $region32: #{tpu_custom_call.1} parent=11 // pred_fallthru
          _
        // Predicated region
        $region33: #{tpu_custom_call.1} parent=11 // pred_check
          %p455 = pneg %p232
        $region34: #{tpu_custom_call.1} parent=11 // pred_check_branch
          %457 = sbr.rel (%p455) target = $region36
        $region35: #{tpu_custom_call.1} parent=11 // pred_region
          %s459 = ssub.s32 2048, 2048
          %460 = vsyncadd [#allocation8], %s459
          %s461 = sshll.u32 [#allocation7], 4
          %s462 = int_to_ptr.vmem [resolvable:$true] %s461
          %467 = dma.hbm_to_vmem [thread:$0]  %s8, 2048, %s462, [#allocation8], 64, 64, 4
        $region36: #{tpu_custom_call.1} parent=11 // pred_fallthru
          _
        // Predicated region
        $region37: #{tpu_custom_call.1} parent=11 // pred_check
          %p468 = pneg %p253
        $region38: #{tpu_custom_call.1} parent=11 // pred_check_branch
          %470 = sbr.rel (%p468) target = $region40
        $region39: #{tpu_custom_call.1} parent=11 // pred_region
          _
        $region40: #{tpu_custom_call.1} parent=11 // pred_fallthru
          _
        // Predicated region
        $region41: #{tpu_custom_call.1} parent=11 // pred_check
          %p471 = pneg %p274
        $region42: #{tpu_custom_call.1} parent=11 // pred_check_branch
          %473 = sbr.rel (%p471) target = $region44
        $region43: #{tpu_custom_call.1} parent=11 // pred_region
          %s475 = ssub.s32 1024, 1024
          %476 = vsyncadd [#allocation8], %s475
          %s477 = sshll.u32 [#allocation9], 4
          %s478 = int_to_ptr.vmem [resolvable:$true] %s477
          %483 = dma.hbm_to_vmem [thread:$0]  %s10, 1024, %s478, [#allocation8], 64, 64, 4
        $region44: #{tpu_custom_call.1} parent=11 // pred_fallthru
          _
        // Predicated region
        $region45: #{tpu_custom_call.1} parent=11 // pred_check
          %p484 = pneg %p295
        $region46: #{tpu_custom_call.1} parent=11 // pred_check_branch
          %486 = sbr.rel (%p484) target = $region48
        $region47: #{tpu_custom_call.1} parent=11 // pred_region
          _
        $region48: #{tpu_custom_call.1} parent=11 // pred_fallthru
          _
        // Predicated region
        $region49: #{tpu_custom_call.1} parent=11 // pred_check
          %p487 = pneg %p316
        $region50: #{tpu_custom_call.1} parent=11 // pred_check_branch
          %489 = sbr.rel (%p487) target = $region52
        $region51: #{tpu_custom_call.1} parent=11 // pred_region
          %s491 = ssub.s32 2048, 2048
          %492 = vsyncadd [#allocation11], %s491
          %s493 = sshll.u32 [#allocation10], 4
          %s494 = int_to_ptr.vmem [resolvable:$true] %s493
          %499 = dma.hbm_to_vmem [thread:$0]  %s12, 2048, %s494, [#allocation11], 64, 64, 4
        $region52: #{tpu_custom_call.1} parent=11 // pred_fallthru
          _
        // Predicated region
        $region53: #{tpu_custom_call.1} parent=11 // pred_check
          %p500 = pneg %p337
        $region54: #{tpu_custom_call.1} parent=11 // pred_check_branch
          %502 = sbr.rel (%p500) target = $region56
        $region55: #{tpu_custom_call.1} parent=11 // pred_region
          _
        $region56: #{tpu_custom_call.1} parent=11 // pred_fallthru
          _
        // Predicated region
        $region57: #{tpu_custom_call.1} parent=11 // pred_check
          %p503 = pneg %p358
        $region58: #{tpu_custom_call.1} parent=11 // pred_check_branch
          %505 = sbr.rel (%p503) target = $region60
        $region59: #{tpu_custom_call.1} parent=11 // pred_region
          %s507 = ssub.s32 1024, 1024
          %508 = vsyncadd [#allocation11], %s507
          %s509 = sshll.u32 [#allocation12], 4
          %s510 = int_to_ptr.vmem [resolvable:$true] %s509
          %515 = dma.hbm_to_vmem [thread:$0]  %s14, 1024, %s510, [#allocation11], 64, 64, 4
        $region60: #{tpu_custom_call.1} parent=11 // pred_fallthru
          _
        // Predicated region
        $region61: #{tpu_custom_call.1} parent=11 // pred_check
          %p516 = pneg %p379
        $region62: #{tpu_custom_call.1} parent=11 // pred_check_branch
          %518 = sbr.rel (%p516) target = $region64
        $region63: #{tpu_custom_call.1} parent=11 // pred_region
          _
        $region64: #{tpu_custom_call.1} parent=11 // pred_fallthru
          _
      $region12: #{tpu_custom_call.1} parent=5 // pred_fallthru
        _
      %p519 = scmp.lt.s32.totalorder %s28, 2
      // Predicated region
      $region65: #{tpu_custom_call.1} parent=5 // pred_check
        %p520 = pneg %p519
      $region66: #{tpu_custom_call.1} parent=5 // pred_check_branch
        %522 = sbr.rel (%p520) target = $region68
      $region67: #{tpu_custom_call.1} parent=5 // pred_region
        // Predicated region
        $region69: #{tpu_custom_call.1} parent=67 // pred_check
          %p523 = pneg %p48
        $region70: #{tpu_custom_call.1} parent=67 // pred_check_branch
          %525 = sbr.rel (%p523) target = $region72
        $region71: #{tpu_custom_call.1} parent=67 // pred_region
          %s526 = sand.u32 %s38, 1
          %s527 = scalar_lea.sflag [#allocation3], %s526
          %s528 = sand.u32 %s38, 1
          %s529 = smul.addr %s528, 160
          %s530 = scalar_lea.vmem [#allocation2], %s529
          %s532 = ssub.s32 2560, 2560
          %533 = vsyncadd %s527, %s532
          %s534 = smul.addr %s28, 40
          %s535 = smul.addr %s534, 64
          %s536 = scalar_lea.hbm %s0, %s535
          %s537 = sshll.u32 %s530, 4
          %s538 = int_to_ptr.vmem [resolvable:$true] %s537
          %543 = dma.hbm_to_vmem [thread:$0]  %s536, 2560, %s538, %s527, 64, 64, 4
        $region72: #{tpu_custom_call.1} parent=67 // pred_fallthru
          _
        // Predicated region
        $region73: #{tpu_custom_call.1} parent=67 // pred_check
          %p544 = pneg %p74
        $region74: #{tpu_custom_call.1} parent=67 // pred_check_branch
          %546 = sbr.rel (%p544) target = $region76
        $region75: #{tpu_custom_call.1} parent=67 // pred_region
          %p547 = scmp.lt.s32.totalorder %s28, 1
          %s548 = scalar_select %p547, %s28, 1
          %s549 = smul.addr %s548, 3
          %s550 = smul.addr %s549, 8
          %s551 = scalar_lea.vmem %s1, %s550
        $region76: #{tpu_custom_call.1} parent=67 // pred_fallthru
          _
        // Predicated region
        $region77: #{tpu_custom_call.1} parent=67 // pred_check
          %p552 = pneg %p100
        $region78: #{tpu_custom_call.1} parent=67 // pred_check_branch
          %554 = sbr.rel (%p552) target = $region80
        $region79: #{tpu_custom_call.1} parent=67 // pred_region
          %p555 = scmp.lt.s32.totalorder %s28, 1
          %s556 = scalar_select %p555, %s28, 1
          %s557 = smul.addr %s556, 3
          %s558 = scalar_lea.vmem %s2, %s557
        $region80: #{tpu_custom_call.1} parent=67 // pred_fallthru
          _
      $region68: #{tpu_custom_call.1} parent=5 // pred_fallthru
        _
      %p559 = scmp.le.s32.totalorder 1, %s28
      %p560 = scmp.lt.s32.totalorder %s28, 3
      %p561 = pnand %p559, %p560
      %p562 = pneg %p561
      // Predicated region
      $region81: #{tpu_custom_call.1} parent=5 // pred_check
        _
      $region82: #{tpu_custom_call.1} parent=5 // pred_check_branch
        %564 = sbr.rel (%p561) target = $region84
      $region83: #{tpu_custom_call.1} parent=5 // pred_region
        %s565 = ssub.s32 %s28, 1
        %s566 = sand.u32 %s41, 1
        %s567 = scalar_lea.sflag [#allocation3], %s566
        %s568 = sand.u32 %s41, 1
        %s569 = smul.addr %s568, 160
        %s570 = scalar_lea.vmem [#allocation2], %s569
        // Predicated region
        $region85: #{tpu_custom_call.1} parent=83 // pred_check
          %p571 = pneg %p54
        $region86: #{tpu_custom_call.1} parent=83 // pred_check_branch
          %573 = sbr.rel (%p571) target = $region88
        $region87: #{tpu_custom_call.1} parent=83 // pred_region
          %574 = dma.done %s567, 2560
        $region88: #{tpu_custom_call.1} parent=83 // pred_fallthru
          _
        // Predicated region
        $region89: #{tpu_custom_call.1} parent=83 // pred_check
          %p575 = pneg %p127
        $region90: #{tpu_custom_call.1} parent=83 // pred_check_branch
          %577 = sbr.rel (%p575) target = $region92
        $region91: #{tpu_custom_call.1} parent=83 // pred_region
          %578 = dma.done [#allocation5], 15360
        $region92: #{tpu_custom_call.1} parent=83 // pred_fallthru
          _
        // Predicated region
        $region93: #{tpu_custom_call.1} parent=83 // pred_check
          %p579 = pneg %p190
        $region94: #{tpu_custom_call.1} parent=83 // pred_check_branch
          %581 = sbr.rel (%p579) target = $region96
        $region95: #{tpu_custom_call.1} parent=83 // pred_region
          %582 = dma.done [#allocation5], 1024
        $region96: #{tpu_custom_call.1} parent=83 // pred_fallthru
          _
        // Predicated region
        $region97: #{tpu_custom_call.1} parent=83 // pred_check
          %p583 = pneg %p232
        $region98: #{tpu_custom_call.1} parent=83 // pred_check_branch
          %585 = sbr.rel (%p583) target = $region100
        $region99: #{tpu_custom_call.1} parent=83 // pred_region
          %586 = dma.done [#allocation8], 2048
        $region100: #{tpu_custom_call.1} parent=83 // pred_fallthru
          _
        // Predicated region
        $region101: #{tpu_custom_call.1} parent=83 // pred_check
          %p587 = pneg %p274
        $region102: #{tpu_custom_call.1} parent=83 // pred_check_branch
          %589 = sbr.rel (%p587) target = $region104
        $region103: #{tpu_custom_call.1} parent=83 // pred_region
          %590 = dma.done [#allocation8], 1024
        $region104: #{tpu_custom_call.1} parent=83 // pred_fallthru
          _
        // Predicated region
        $region105: #{tpu_custom_call.1} parent=83 // pred_check
          %p591 = pneg %p316
        $region106: #{tpu_custom_call.1} parent=83 // pred_check_branch
          %593 = sbr.rel (%p591) target = $region108
        $region107: #{tpu_custom_call.1} parent=83 // pred_region
          %594 = dma.done [#allocation11], 2048
        $region108: #{tpu_custom_call.1} parent=83 // pred_fallthru
          _
        // Predicated region
        $region109: #{tpu_custom_call.1} parent=83 // pred_check
          %p595 = pneg %p358
        $region110: #{tpu_custom_call.1} parent=83 // pred_check_branch
          %597 = sbr.rel (%p595) target = $region112
        $region111: #{tpu_custom_call.1} parent=83 // pred_region
          %598 = dma.done [#allocation11], 1024
        $region112: #{tpu_custom_call.1} parent=83 // pred_fallthru
          _
        %s599 = sand.u32 %s41, 1
        %s600 = scalar_lea.sflag [#allocation3], %s599
        %s601 = sand.u32 %s41, 1
        %s602 = smul.addr %s601, 160
        %s603 = scalar_lea.vmem [#allocation2], %s602
        %p604 = pneg %p54
        %p605 = pneg %p51
        %p606 = scmp.lt.s32.totalorder %s33, 1
        %s607 = scalar_select %p606, %s33, 1
        %s608 = smul.addr %s607, 3
        %s609 = smul.addr %s608, 8
        %s610 = scalar_lea.vmem %s1, %s609
        %p611 = pneg %p80
        %p612 = pneg %p77
        %p613 = scmp.lt.s32.totalorder %s33, 1
        %s614 = scalar_select %p613, %s33, 1
        %s615 = smul.addr %s614, 3
        %s616 = scalar_lea.vmem %s2, %s615
        %p617 = pneg %p106
        %p618 = pneg %p103
        %p619 = pneg %p127
        %p620 = pneg %p124
        %p621 = pneg %p148
        %p622 = pneg %p145
        %p623 = pneg %p169
        %p624 = pneg %p166
        %p625 = pneg %p190
        %p626 = pneg %p187
        %p627 = pneg %p211
        %p628 = pneg %p208
        %p629 = pneg %p232
        %p630 = pneg %p229
        %p631 = pneg %p253
        %p632 = pneg %p250
        %p633 = pneg %p274
        %p634 = pneg %p271
        %p635 = pneg %p295
        %p636 = pneg %p292
        %p637 = pneg %p316
        %p638 = pneg %p313
        %p639 = pneg %p337
        %p640 = pneg %p334
        %p641 = pneg %p358
        %p642 = pneg %p355
        %p643 = pneg %p379
        %p644 = pneg %p376
        %p645 = pneg %p405
        %p646 = pneg %p402
        %p647 = scmp.lt.s32.totalorder %s33, 1
        %s648 = scalar_select %p647, %s33, 1
        %s649 = smul.addr %s648, 3
        %s650 = smul.addr %s649, 8
        %s651 = scalar_lea.vmem %s16, %s650
        %p652 = scmp.lt.s32.totalorder %s33, 1
        %s653 = scalar_select %p652, %s33, 1
        %s654 = smul.addr %s653, 3
        %s655 = smul.addr %s654, 8
        %s656 = scalar_lea.vmem %s1, %s655
        %p657 = scmp.lt.s32.totalorder %s33, 1
        %s658 = scalar_select %p657, %s33, 1
        %s659 = smul.addr %s658, 3
        %s660 = scalar_lea.vmem %s2, %s659
        %p661 = scmp.lt.s32.totalorder %s33, 1
        %s662 = scalar_select %p661, %s33, 1
        %s663 = smul.addr %s662, 3
        %s664 = smul.addr %s663, 8
        %s665 = scalar_lea.vmem %s16, %s664
        %v667 = vld [vmem:[%s570] sm:$0xf]
        %v668 = vld [vmem:[%s570 + $0x4] sm:$0xf]
        %v669 = vld [vmem:[%s570 + $0x8] sm:$0xf]
        %v670 = vld [vmem:[%s570 + $0xc] sm:$0xf]
        %v671 = vld [vmem:[%s570 + $0x10] sm:$0xf]
        %v672 = vld [vmem:[%s570 + $0x14] sm:$0xf]
        %v673 = vld [vmem:[%s570 + $0x18] sm:$0xf]
        %v674 = vld [vmem:[%s570 + $0x1c] sm:$0xf]
        %v675 = vld [vmem:[%s570 + $0x20] sm:$0xf]
        %v676 = vld [vmem:[%s570 + $0x24] sm:$0xf]
        %v677 = vld [vmem:[%s570 + $0x28] sm:$0xf]
        %v678 = vld [vmem:[%s570 + $0x2c] sm:$0xf]
        %v679 = vld [vmem:[%s570 + $0x30] sm:$0xf]
        %v680 = vld [vmem:[%s570 + $0x34] sm:$0xf]
        %v681 = vld [vmem:[%s570 + $0x38] sm:$0xf]
        %v682 = vld [vmem:[%s570 + $0x3c] sm:$0xf]
        %v683 = vld [vmem:[%s570 + $0x40] sm:$0xf]
        %v684 = vld [vmem:[%s570 + $0x44] sm:$0xf]
        %v685 = vld [vmem:[%s570 + $0x48] sm:$0xf]
        %v686 = vld [vmem:[%s570 + $0x4c] sm:$0xf]
        %v687 = vld [vmem:[%s570 + $0x50] sm:$0xf]
        %v688 = vld [vmem:[%s570 + $0x54] sm:$0xf]
        %v689 = vld [vmem:[%s570 + $0x58] sm:$0xf]
        %v690 = vld [vmem:[%s570 + $0x5c] sm:$0xf]
        %v691 = vld [vmem:[%s570 + $0x60] sm:$0xf]
        %v692 = vld [vmem:[%s570 + $0x64] sm:$0xf]
        %v693 = vld [vmem:[%s570 + $0x68] sm:$0xf]
        %v694 = vld [vmem:[%s570 + $0x6c] sm:$0xf]
        %v695 = vld [vmem:[%s570 + $0x70] sm:$0xf]
        %v696 = vld [vmem:[%s570 + $0x74] sm:$0xf]
        %v697 = vld [vmem:[%s570 + $0x78] sm:$0xf]
        %v698 = vld [vmem:[%s570 + $0x7c] sm:$0xf]
        %v699 = vld [vmem:[%s570 + $0x80] sm:$0xf]
        %v700 = vld [vmem:[%s570 + $0x84] sm:$0xf]
        %v701 = vld [vmem:[%s570 + $0x88] sm:$0xf]
        %v702 = vld [vmem:[%s570 + $0x8c] sm:$0xf]
        %v703 = vld [vmem:[%s570 + $0x90] sm:$0xf]
        %v704 = vld [vmem:[%s570 + $0x94] sm:$0xf]
        %v705 = vld [vmem:[%s570 + $0x98] sm:$0xf]
        %v706 = vld [vmem:[%s570 + $0x9c] sm:$0xf]
        %v707 = vld [vmem:[%s4] sm:$0xff]
        %v708 = vld [vmem:[%s4 + $0x8] sm:$0xff]
        %v709 = vld [vmem:[%s4 + $0x10] sm:$0xff]
        %v710 = vld [vmem:[%s4 + $0x18] sm:$0xff]
        %v711 = vld [vmem:[%s4 + $0x20] sm:$0xff]
        %v712 = vld [vmem:[%s4 + $0x28] sm:$0xff]
        %v713 = vld [vmem:[%s4 + $0x30] sm:$0xff]
        %v714 = vld [vmem:[%s4 + $0x38] sm:$0xff]
        %v755 = vunpack.c.l.b16 %v667
        %v756 = vunpack.c.l.b16 %v668
        %v757 = vunpack.c.l.b16 %v669
        %v758 = vunpack.c.l.b16 %v670
        %v759 = vunpack.c.l.b16 %v671
        %v760 = vunpack.c.l.b16 %v672
        %v761 = vunpack.c.l.b16 %v673
        %v762 = vunpack.c.l.b16 %v674
        %v763 = vunpack.c.l.b16 %v675
        %v764 = vunpack.c.l.b16 %v676
        %v765 = vunpack.c.l.b16 %v677
        %v766 = vunpack.c.l.b16 %v678
        %v767 = vunpack.c.l.b16 %v679
        %v768 = vunpack.c.l.b16 %v680
        %v769 = vunpack.c.l.b16 %v681
        %v770 = vunpack.c.l.b16 %v682
        %v771 = vunpack.c.l.b16 %v683
        %v772 = vunpack.c.l.b16 %v684
        %v773 = vunpack.c.l.b16 %v685
        %v774 = vunpack.c.l.b16 %v686
        %v775 = vunpack.c.l.b16 %v687
        %v776 = vunpack.c.l.b16 %v688
        %v777 = vunpack.c.l.b16 %v689
        %v778 = vunpack.c.l.b16 %v690
        %v779 = vunpack.c.l.b16 %v691
        %v780 = vunpack.c.l.b16 %v692
        %v781 = vunpack.c.l.b16 %v693
        %v782 = vunpack.c.l.b16 %v694
        %v783 = vunpack.c.l.b16 %v695
        %v784 = vunpack.c.l.b16 %v696
        %v785 = vunpack.c.l.b16 %v697
        %v786 = vunpack.c.l.b16 %v698
        %v787 = vunpack.c.l.b16 %v699
        %v788 = vunpack.c.l.b16 %v700
        %v789 = vunpack.c.l.b16 %v701
        %v790 = vunpack.c.l.b16 %v702
        %v791 = vunpack.c.l.b16 %v703
        %v792 = vunpack.c.l.b16 %v704
        %v793 = vunpack.c.l.b16 %v705
        %v794 = vunpack.c.l.b16 %v706
        %v795 = vpack.c.b16 %v756, %v755
        %v796 = vpack.c.b16 %v758, %v757
        %v797 = vpack.c.b16 %v760, %v759
        %v798 = vpack.c.b16 %v762, %v761
        %v799 = vpack.c.b16 %v764, %v763
        %v800 = vpack.c.b16 %v766, %v765
        %v801 = vpack.c.b16 %v768, %v767
        %v802 = vpack.c.b16 %v770, %v769
        %v803 = vpack.c.b16 %v772, %v771
        %v804 = vpack.c.b16 %v774, %v773
        %v805 = vpack.c.b16 %v776, %v775
        %v806 = vpack.c.b16 %v778, %v777
        %v807 = vpack.c.b16 %v780, %v779
        %v808 = vpack.c.b16 %v782, %v781
        %v809 = vpack.c.b16 %v784, %v783
        %v810 = vpack.c.b16 %v786, %v785
        %v811 = vpack.c.b16 %v788, %v787
        %v812 = vpack.c.b16 %v790, %v789
        %v813 = vpack.c.b16 %v792, %v791
        %v814 = vpack.c.b16 %v794, %v793
        %v823 = vunpack.c.l.b16 %v707
        %v824 = vunpack.c.h.b16 %v707
        %v825 = vunpack.c.l.b16 %v708
        %v826 = vunpack.c.h.b16 %v708
        %v827 = vunpack.c.l.b16 %v709
        %v828 = vunpack.c.h.b16 %v709
        %v829 = vunpack.c.l.b16 %v710
        %v830 = vunpack.c.h.b16 %v710
        %v831 = vunpack.c.l.b16 %v711
        %v832 = vunpack.c.h.b16 %v711
        %v833 = vunpack.c.l.b16 %v712
        %v834 = vunpack.c.h.b16 %v712
        %v835 = vunpack.c.l.b16 %v713
        %v836 = vunpack.c.h.b16 %v713
        %v837 = vunpack.c.l.b16 %v714
        %v838 = vunpack.c.h.b16 %v714
        %v839 = vpack.c.b16 %v825, %v823
        %v840 = vpack.c.b16 %v826, %v824
        %v841 = vpack.c.b16 %v829, %v827
        %v842 = vpack.c.b16 %v830, %v828
        %v843 = vpack.c.b16 %v833, %v831
        %v844 = vpack.c.b16 %v834, %v832
        %v845 = vpack.c.b16 %v837, %v835
        %v846 = vpack.c.b16 %v838, %v836
        %vm855 = vcmask 523264
        %v857 = vsel %vm855, %v795, 0
        %v860 = vsel %vm855, %v796, 0
        %v863 = vsel %vm855, %v797, 0
        %v866 = vsel %vm855, %v798, 0
        %v869 = vsel %vm855, %v799, 0
        %v872 = vsel %vm855, %v800, 0
        %v875 = vsel %vm855, %v801, 0
        %v878 = vsel %vm855, %v802, 0
        %v881 = vsel %vm855, %v803, 0
        %v884 = vsel %vm855, %v804, 0
        %v887 = vsel %vm855, %v805, 0
        %v890 = vsel %vm855, %v806, 0
        %v893 = vsel %vm855, %v807, 0
        %v896 = vsel %vm855, %v808, 0
        %v899 = vsel %vm855, %v809, 0
        %v902 = vsel %vm855, %v810, 0
        %v905 = vsel %vm855, %v811, 0
        %v908 = vsel %vm855, %v812, 0
        %v911 = vsel %vm855, %v813, 0
        %v914 = vsel %vm855, %v814, 0
        %916 = vmatprep.subr.bf16.mxu0 0
        %917 = vmatpush1.bf16.msra.mxu0 0
        %918 = vmatprep.subr.bf16.mxu0 0
        %919 = vmatpush1.bf16.msra.mxu0 0
        %920 = vmatprep.subr.bf16.mxu0 0
        %921 = vmatpush1.bf16.msra.mxu0 0
        %922 = vmatprep.subr.bf16.mxu0 0
        %923 = vmatpush1.bf16.msra.mxu0 0
        %924 = vmatprep.subr.bf16.mxu0 %v846
        %925 = vmatpush1.bf16.msra.mxu0 %v845
        %926 = vmatprep.subr.bf16.mxu0 %v844
        %927 = vmatpush1.bf16.msra.mxu0 %v843
        %928 = vmatprep.subr.bf16.mxu0 %v842
        %929 = vmatpush1.bf16.msra.mxu0 %v841
        %930 = vmatprep.subr.bf16.mxu0 %v840
        %931 = vmatpush1.bf16.msra.mxu0 %v839
        %932 = vmatprep.subr.bf16.mxu0 0
        %933 = vmatpush2.bf16.msra.mxu0 0
        %934 = vmatprep.subr.bf16.mxu0 0
        %935 = vmatpush2.bf16.msra.mxu0 0
        %936 = vmatprep.subr.bf16.mxu0 0
        %937 = vmatpush2.bf16.msra.mxu0 0
        %938 = vmatprep.subr.bf16.mxu0 0
        %939 = vmatpush2.bf16.msra.mxu0 0
        %940 = vmatprep.subr.bf16.mxu0 0
        %941 = vmatpush2.bf16.msra.mxu0 0
        %942 = vmatprep.subr.bf16.mxu0 0
        %943 = vmatpush2.bf16.msra.mxu0 0
        %944 = vmatprep.subr.bf16.mxu0 0
        %945 = vmatpush2.bf16.msra.mxu0 0
        %946 = vmatprep.subr.bf16.mxu0 0
        %947 = vmatpush2.bf16.msra.mxu0 0
        %948 = vmatprep.mubr.bf16.mxu0 0
        %949 = vmatmul.mubr.bf16.gmra.mxu0 %v857
        %v950 = vpop.f32.mrf.mxu0
        %v951 = vadd.f32 0.0, %v950
        %v952 = vpop.f32.mrf.mxu0
        %v953 = vadd.f32 0.0, %v952
        %v954 = vpop.f32.mrf.mxu0
        %v955 = vadd.f32 0.0, %v954
        %v956 = vpop.f32.mrf.mxu0
        %v957 = vadd.f32 0.0, %v956
        %958 = vmatprep.mubr.bf16.mxu0 0
        %959 = vmatmul.mubr.bf16.gmra.mxu0 %v860
        %v960 = vpop.f32.mrf.mxu0
        %v961 = vadd.f32 0.0, %v960
        %v962 = vpop.f32.mrf.mxu0
        %v963 = vadd.f32 0.0, %v962
        %v964 = vpop.f32.mrf.mxu0
        %v965 = vadd.f32 0.0, %v964
        %v966 = vpop.f32.mrf.mxu0
        %v967 = vadd.f32 0.0, %v966
        %968 = vmatprep.mubr.bf16.mxu0 0
        %969 = vmatmul.mubr.bf16.gmra.mxu0 %v863
        %v970 = vpop.f32.mrf.mxu0
        %v971 = vadd.f32 0.0, %v970
        %v972 = vpop.f32.mrf.mxu0
        %v973 = vadd.f32 0.0, %v972
        %v974 = vpop.f32.mrf.mxu0
        %v975 = vadd.f32 0.0, %v974
        %v976 = vpop.f32.mrf.mxu0
        %v977 = vadd.f32 0.0, %v976
        %978 = vmatprep.mubr.bf16.mxu0 0
        %979 = vmatmul.mubr.bf16.gmra.mxu0 %v866
        %v980 = vpop.f32.mrf.mxu0
        %v981 = vadd.f32 0.0, %v980
        %v982 = vpop.f32.mrf.mxu0
        %v983 = vadd.f32 0.0, %v982
        %v984 = vpop.f32.mrf.mxu0
        %v985 = vadd.f32 0.0, %v984
        %v986 = vpop.f32.mrf.mxu0
        %v987 = vadd.f32 0.0, %v986
        %988 = vmatprep.mubr.bf16.mxu0 0
        %989 = vmatmul.mubr.bf16.gmra.mxu0 %v869
        %v990 = vpop.f32.mrf.mxu0
        %v991 = vadd.f32 0.0, %v990
        %v992 = vpop.f32.mrf.mxu0
        %v993 = vadd.f32 0.0, %v992
        %v994 = vpop.f32.mrf.mxu0
        %v995 = vadd.f32 0.0, %v994
        %v996 = vpop.f32.mrf.mxu0
        %v997 = vadd.f32 0.0, %v996
        %998 = vmatprep.mubr.bf16.mxu0 0
        %999 = vmatmul.mubr.bf16.gmra.mxu0 %v872
        %v1000 = vpop.f32.mrf.mxu0
        %v1001 = vadd.f32 0.0, %v1000
        %v1002 = vpop.f32.mrf.mxu0
        %v1003 = vadd.f32 0.0, %v1002
        %v1004 = vpop.f32.mrf.mxu0
        %v1005 = vadd.f32 0.0, %v1004
        %v1006 = vpop.f32.mrf.mxu0
        %v1007 = vadd.f32 0.0, %v1006
        %1008 = vmatprep.mubr.bf16.mxu0 0
        %1009 = vmatmul.mubr.bf16.gmra.mxu0 %v875
        %v1010 = vpop.f32.mrf.mxu0
        %v1011 = vadd.f32 0.0, %v1010
        %v1012 = vpop.f32.mrf.mxu0
        %v1013 = vadd.f32 0.0, %v1012
        %v1014 = vpop.f32.mrf.mxu0
        %v1015 = vadd.f32 0.0, %v1014
        %v1016 = vpop.f32.mrf.mxu0
        %v1017 = vadd.f32 0.0, %v1016
        %1018 = vmatprep.mubr.bf16.mxu0 0
        %1019 = vmatmul.mubr.bf16.gmra.mxu0 %v878
        %v1020 = vpop.f32.mrf.mxu0
        %v1021 = vadd.f32 0.0, %v1020
        %v1022 = vpop.f32.mrf.mxu0
        %v1023 = vadd.f32 0.0, %v1022
        %v1024 = vpop.f32.mrf.mxu0
        %v1025 = vadd.f32 0.0, %v1024
        %v1026 = vpop.f32.mrf.mxu0
        %v1027 = vadd.f32 0.0, %v1026
        %1028 = vmatprep.mubr.bf16.mxu0 0
        %1029 = vmatmul.mubr.bf16.gmra.mxu0 %v881
        %v1030 = vpop.f32.mrf.mxu0
        %v1031 = vadd.f32 0.0, %v1030
        %v1032 = vpop.f32.mrf.mxu0
        %v1033 = vadd.f32 0.0, %v1032
        %v1034 = vpop.f32.mrf.mxu0
        %v1035 = vadd.f32 0.0, %v1034
        %v1036 = vpop.f32.mrf.mxu0
        %v1037 = vadd.f32 0.0, %v1036
        %1038 = vmatprep.mubr.bf16.mxu0 0
        %1039 = vmatmul.mubr.bf16.gmra.mxu0 %v884
        %v1040 = vpop.f32.mrf.mxu0
        %v1041 = vadd.f32 0.0, %v1040
        %v1042 = vpop.f32.mrf.mxu0
        %v1043 = vadd.f32 0.0, %v1042
        %v1044 = vpop.f32.mrf.mxu0
        %v1045 = vadd.f32 0.0, %v1044
        %v1046 = vpop.f32.mrf.mxu0
        %v1047 = vadd.f32 0.0, %v1046
        %1048 = vmatprep.mubr.bf16.mxu0 0
        %1049 = vmatmul.mubr.bf16.gmra.mxu0 %v887
        %v1050 = vpop.f32.mrf.mxu0
        %v1051 = vadd.f32 0.0, %v1050
        %v1052 = vpop.f32.mrf.mxu0
        %v1053 = vadd.f32 0.0, %v1052
        %v1054 = vpop.f32.mrf.mxu0
        %v1055 = vadd.f32 0.0, %v1054
        %v1056 = vpop.f32.mrf.mxu0
        %v1057 = vadd.f32 0.0, %v1056
        %1058 = vmatprep.mubr.bf16.mxu0 0
        %1059 = vmatmul.mubr.bf16.gmra.mxu0 %v890
        %v1060 = vpop.f32.mrf.mxu0
        %v1061 = vadd.f32 0.0, %v1060
        %v1062 = vpop.f32.mrf.mxu0
        %v1063 = vadd.f32 0.0, %v1062
        %v1064 = vpop.f32.mrf.mxu0
        %v1065 = vadd.f32 0.0, %v1064
        %v1066 = vpop.f32.mrf.mxu0
        %v1067 = vadd.f32 0.0, %v1066
        %1068 = vmatprep.mubr.bf16.mxu0 0
        %1069 = vmatmul.mubr.bf16.gmra.mxu0 %v893
        %v1070 = vpop.f32.mrf.mxu0
        %v1071 = vadd.f32 0.0, %v1070
        %v1072 = vpop.f32.mrf.mxu0
        %v1073 = vadd.f32 0.0, %v1072
        %v1074 = vpop.f32.mrf.mxu0
        %v1075 = vadd.f32 0.0, %v1074
        %v1076 = vpop.f32.mrf.mxu0
        %v1077 = vadd.f32 0.0, %v1076
        %1078 = vmatprep.mubr.bf16.mxu0 0
        %1079 = vmatmul.mubr.bf16.gmra.mxu0 %v896
        %v1080 = vpop.f32.mrf.mxu0
        %v1081 = vadd.f32 0.0, %v1080
        %v1082 = vpop.f32.mrf.mxu0
        %v1083 = vadd.f32 0.0, %v1082
        %v1084 = vpop.f32.mrf.mxu0
        %v1085 = vadd.f32 0.0, %v1084
        %v1086 = vpop.f32.mrf.mxu0
        %v1087 = vadd.f32 0.0, %v1086
        %1088 = vmatprep.mubr.bf16.mxu0 0
        %1089 = vmatmul.mubr.bf16.gmra.mxu0 %v899
        %v1090 = vpop.f32.mrf.mxu0
        %v1091 = vadd.f32 0.0, %v1090
        %v1092 = vpop.f32.mrf.mxu0
        %v1093 = vadd.f32 0.0, %v1092
        %v1094 = vpop.f32.mrf.mxu0
        %v1095 = vadd.f32 0.0, %v1094
        %v1096 = vpop.f32.mrf.mxu0
        %v1097 = vadd.f32 0.0, %v1096
        %1098 = vmatprep.mubr.bf16.mxu0 0
        %1099 = vmatmul.mubr.bf16.gmra.mxu0 %v902
        %v1100 = vpop.f32.mrf.mxu0
        %v1101 = vadd.f32 0.0, %v1100
        %v1102 = vpop.f32.mrf.mxu0
        %v1103 = vadd.f32 0.0, %v1102
        %v1104 = vpop.f32.mrf.mxu0
        %v1105 = vadd.f32 0.0, %v1104
        %v1106 = vpop.f32.mrf.mxu0
        %v1107 = vadd.f32 0.0, %v1106
        %1108 = vmatprep.mubr.bf16.mxu0 0
        %1109 = vmatmul.mubr.bf16.gmra.mxu0 %v905
        %v1110 = vpop.f32.mrf.mxu0
        %v1111 = vadd.f32 0.0, %v1110
        %v1112 = vpop.f32.mrf.mxu0
        %v1113 = vadd.f32 0.0, %v1112
        %v1114 = vpop.f32.mrf.mxu0
        %v1115 = vadd.f32 0.0, %v1114
        %v1116 = vpop.f32.mrf.mxu0
        %v1117 = vadd.f32 0.0, %v1116
        %1118 = vmatprep.mubr.bf16.mxu0 0
        %1119 = vmatmul.mubr.bf16.gmra.mxu0 %v908
        %v1120 = vpop.f32.mrf.mxu0
        %v1121 = vadd.f32 0.0, %v1120
        %v1122 = vpop.f32.mrf.mxu0
        %v1123 = vadd.f32 0.0, %v1122
        %v1124 = vpop.f32.mrf.mxu0
        %v1125 = vadd.f32 0.0, %v1124
        %v1126 = vpop.f32.mrf.mxu0
        %v1127 = vadd.f32 0.0, %v1126
        %1128 = vmatprep.mubr.bf16.mxu0 0
        %1129 = vmatmul.mubr.bf16.gmra.mxu0 %v911
        %v1130 = vpop.f32.mrf.mxu0
        %v1131 = vadd.f32 0.0, %v1130
        %v1132 = vpop.f32.mrf.mxu0
        %v1133 = vadd.f32 0.0, %v1132
        %v1134 = vpop.f32.mrf.mxu0
        %v1135 = vadd.f32 0.0, %v1134
        %v1136 = vpop.f32.mrf.mxu0
        %v1137 = vadd.f32 0.0, %v1136
        %1138 = vmatprep.mubr.bf16.mxu0 0
        %1139 = vmatmul.mubr.bf16.gmra.mxu0 %v914
        %v1140 = vpop.f32.mrf.mxu0
        %v1141 = vadd.f32 0.0, %v1140
        %v1142 = vpop.f32.mrf.mxu0
        %v1143 = vadd.f32 0.0, %v1142
        %v1144 = vpop.f32.mrf.mxu0
        %v1145 = vadd.f32 0.0, %v1144
        %v1146 = vpop.f32.mrf.mxu0
        %v1147 = vadd.f32 0.0, %v1146
        %1148 = vdwg.mxu0
        %v1149 = vld [vmem:[%s5] sm:$0x1]
        %v1151 = vlaneseq
        %v1152 = vshrl.u32 %v1151, 7
        %v1153 = vsub.s32 0, %v1152
        %v1154 = vrot.slane %v1149, %v1153
        %v1156 = vadd.f32 %v953, %v1154
        %v1157 = vadd.f32 %v957, %v1154
        %v1158 = vadd.f32 %v963, %v1154
        %v1159 = vadd.f32 %v967, %v1154
        %v1160 = vadd.f32 %v973, %v1154
        %v1161 = vadd.f32 %v977, %v1154
        %v1162 = vadd.f32 %v983, %v1154
        %v1163 = vadd.f32 %v987, %v1154
        %v1164 = vadd.f32 %v993, %v1154
        %v1165 = vadd.f32 %v997, %v1154
        %v1166 = vadd.f32 %v1003, %v1154
        %v1167 = vadd.f32 %v1007, %v1154
        %v1168 = vadd.f32 %v1013, %v1154
        %v1169 = vadd.f32 %v1017, %v1154
        %v1170 = vadd.f32 %v1023, %v1154
        %v1171 = vadd.f32 %v1027, %v1154
        %v1172 = vadd.f32 %v1033, %v1154
        %v1173 = vadd.f32 %v1037, %v1154
        %v1174 = vadd.f32 %v1043, %v1154
        %v1175 = vadd.f32 %v1047, %v1154
        %v1176 = vadd.f32 %v1053, %v1154
        %v1177 = vadd.f32 %v1057, %v1154
        %v1178 = vadd.f32 %v1063, %v1154
        %v1179 = vadd.f32 %v1067, %v1154
        %v1180 = vadd.f32 %v1073, %v1154
        %v1181 = vadd.f32 %v1077, %v1154
        %v1182 = vadd.f32 %v1083, %v1154
        %v1183 = vadd.f32 %v1087, %v1154
        %v1184 = vadd.f32 %v1093, %v1154
        %v1185 = vadd.f32 %v1097, %v1154
        %v1186 = vadd.f32 %v1103, %v1154
        %v1187 = vadd.f32 %v1107, %v1154
        %v1188 = vadd.f32 %v1113, %v1154
        %v1189 = vadd.f32 %v1117, %v1154
        %v1190 = vadd.f32 %v1123, %v1154
        %v1191 = vadd.f32 %v1127, %v1154
        %v1192 = vadd.f32 %v1133, %v1154
        %v1193 = vadd.f32 %v1137, %v1154
        %v1194 = vadd.f32 %v1143, %v1154
        %v1195 = vadd.f32 %v1147, %v1154
        %v1196 = vmax.f32 %v1156, 0.0
        %v1197 = vmax.f32 %v1157, 0.0
        %v1198 = vmax.f32 %v1158, 0.0
        %v1199 = vmax.f32 %v1159, 0.0
        %v1200 = vmax.f32 %v1160, 0.0
        %v1201 = vmax.f32 %v1161, 0.0
        %v1202 = vmax.f32 %v1162, 0.0
        %v1203 = vmax.f32 %v1163, 0.0
        %v1204 = vmax.f32 %v1164, 0.0
        %v1205 = vmax.f32 %v1165, 0.0
        %v1206 = vmax.f32 %v1166, 0.0
        %v1207 = vmax.f32 %v1167, 0.0
        %v1208 = vmax.f32 %v1168, 0.0
        %v1209 = vmax.f32 %v1169, 0.0
        %v1210 = vmax.f32 %v1170, 0.0
        %v1211 = vmax.f32 %v1171, 0.0
        %v1212 = vmax.f32 %v1172, 0.0
        %v1213 = vmax.f32 %v1173, 0.0
        %v1214 = vmax.f32 %v1174, 0.0
        %v1215 = vmax.f32 %v1175, 0.0
        %v1216 = vmax.f32 %v1176, 0.0
        %v1217 = vmax.f32 %v1177, 0.0
        %v1218 = vmax.f32 %v1178, 0.0
        %v1219 = vmax.f32 %v1179, 0.0
        %v1220 = vmax.f32 %v1180, 0.0
        %v1221 = vmax.f32 %v1181, 0.0
        %v1222 = vmax.f32 %v1182, 0.0
        %v1223 = vmax.f32 %v1183, 0.0
        %v1224 = vmax.f32 %v1184, 0.0
        %v1225 = vmax.f32 %v1185, 0.0
        %v1226 = vmax.f32 %v1186, 0.0
        %v1227 = vmax.f32 %v1187, 0.0
        %v1228 = vmax.f32 %v1188, 0.0
        %v1229 = vmax.f32 %v1189, 0.0
        %v1230 = vmax.f32 %v1190, 0.0
        %v1231 = vmax.f32 %v1191, 0.0
        %v1232 = vmax.f32 %v1192, 0.0
        %v1233 = vmax.f32 %v1193, 0.0
        %v1234 = vmax.f32 %v1194, 0.0
        %v1235 = vmax.f32 %v1195, 0.0
        %v1236 = vpack.c.bf16 %v1197, %v1196
        %v1237 = vpack.c.bf16 %v1199, %v1198
        %v1238 = vpack.c.bf16 %v1201, %v1200
        %v1239 = vpack.c.bf16 %v1203, %v1202
        %v1240 = vpack.c.bf16 %v1205, %v1204
        %v1241 = vpack.c.bf16 %v1207, %v1206
        %v1242 = vpack.c.bf16 %v1209, %v1208
        %v1243 = vpack.c.bf16 %v1211, %v1210
        %v1244 = vpack.c.bf16 %v1213, %v1212
        %v1245 = vpack.c.bf16 %v1215, %v1214
        %v1246 = vpack.c.bf16 %v1217, %v1216
        %v1247 = vpack.c.bf16 %v1219, %v1218
        %v1248 = vpack.c.bf16 %v1221, %v1220
        %v1249 = vpack.c.bf16 %v1223, %v1222
        %v1250 = vpack.c.bf16 %v1225, %v1224
        %v1251 = vpack.c.bf16 %v1227, %v1226
        %v1252 = vpack.c.bf16 %v1229, %v1228
        %v1253 = vpack.c.bf16 %v1231, %v1230
        %v1254 = vpack.c.bf16 %v1233, %v1232
        %v1255 = vpack.c.bf16 %v1235, %v1234
        %v1256 = vld [vmem:[#allocation6] sm:$0xf]
        %v1257 = vld [vmem:[#allocation6 + $0x4] sm:$0xf]
        %v1258 = vld [vmem:[#allocation6 + $0x8] sm:$0xf]
        %v1259 = vld [vmem:[#allocation6 + $0xc] sm:$0xf]
        %v1260 = vld [vmem:[#allocation6 + $0x10] sm:$0xf]
        %v1261 = vld [vmem:[#allocation6 + $0x14] sm:$0xf]
        %v1262 = vld [vmem:[#allocation6 + $0x18] sm:$0xf]
        %v1263 = vld [vmem:[#allocation6 + $0x1c] sm:$0xf]
        %v1264 = vld [vmem:[#allocation6 + $0x20] sm:$0xf]
        %v1265 = vld [vmem:[#allocation6 + $0x24] sm:$0xf]
        %v1266 = vld [vmem:[#allocation6 + $0x28] sm:$0xf]
        %v1267 = vld [vmem:[#allocation6 + $0x2c] sm:$0xf]
        %v1268 = vld [vmem:[#allocation6 + $0x30] sm:$0xf]
        %v1269 = vld [vmem:[#allocation6 + $0x34] sm:$0xf]
        %v1270 = vld [vmem:[#allocation6 + $0x38] sm:$0xf]
        %v1271 = vld [vmem:[#allocation6 + $0x3c] sm:$0xf]
        %v1272 = vld [vmem:[%s7] sm:$0x1]
        %v1274 = vlaneseq
        %v1275 = vshrl.u32 %v1274, 7
        %v1276 = vsub.s32 0, %v1275
        %v1277 = vrot.slane %v1272, %v1276
        %v1295 = vunpack.c.l.b16 %v1256
        %v1296 = vunpack.c.l.b16 %v1257
        %v1297 = vunpack.c.l.b16 %v1258
        %v1298 = vunpack.c.l.b16 %v1259
        %v1299 = vunpack.c.l.b16 %v1260
        %v1300 = vunpack.c.l.b16 %v1261
        %v1301 = vunpack.c.l.b16 %v1262
        %v1302 = vunpack.c.l.b16 %v1263
        %v1303 = vunpack.c.l.b16 %v1264
        %v1304 = vunpack.c.l.b16 %v1265
        %v1305 = vunpack.c.l.b16 %v1266
        %v1306 = vunpack.c.l.b16 %v1267
        %v1307 = vunpack.c.l.b16 %v1268
        %v1308 = vunpack.c.l.b16 %v1269
        %v1309 = vunpack.c.l.b16 %v1270
        %v1310 = vunpack.c.l.b16 %v1271
        %v1311 = vpack.c.b16 %v1296, %v1295
        %v1312 = vpack.c.b16 %v1298, %v1297
        %v1313 = vpack.c.b16 %v1300, %v1299
        %v1314 = vpack.c.b16 %v1302, %v1301
        %v1315 = vpack.c.b16 %v1304, %v1303
        %v1316 = vpack.c.b16 %v1306, %v1305
        %v1317 = vpack.c.b16 %v1308, %v1307
        %v1318 = vpack.c.b16 %v1310, %v1309
        %1327 = vmatprep.subr.bf16.mxu0 0
        %1328 = vmatpush1.bf16.msra.mxu0 %v1318
        %1329 = vmatprep.subr.bf16.mxu0 0
        %1330 = vmatpush1.bf16.msra.mxu0 %v1317
        %1331 = vmatprep.subr.bf16.mxu0 0
        %1332 = vmatpush1.bf16.msra.mxu0 %v1316
        %1333 = vmatprep.subr.bf16.mxu0 0
        %1334 = vmatpush1.bf16.msra.mxu0 %v1315
        %1335 = vmatprep.subr.bf16.mxu0 0
        %1336 = vmatpush1.bf16.msra.mxu0 %v1314
        %1337 = vmatprep.subr.bf16.mxu0 0
        %1338 = vmatpush1.bf16.msra.mxu0 %v1313
        %1339 = vmatprep.subr.bf16.mxu0 0
        %1340 = vmatpush1.bf16.msra.mxu0 %v1312
        %1341 = vmatprep.subr.bf16.mxu0 0
        %1342 = vmatpush1.bf16.msra.mxu0 %v1311
        %1343 = vmatprep.subr.bf16.mxu0 0
        %1344 = vmatpush2.bf16.msra.mxu0 0
        %1345 = vmatprep.subr.bf16.mxu0 0
        %1346 = vmatpush2.bf16.msra.mxu0 0
        %1347 = vmatprep.subr.bf16.mxu0 0
        %1348 = vmatpush2.bf16.msra.mxu0 0
        %1349 = vmatprep.subr.bf16.mxu0 0
        %1350 = vmatpush2.bf16.msra.mxu0 0
        %1351 = vmatprep.subr.bf16.mxu0 0
        %1352 = vmatpush2.bf16.msra.mxu0 0
        %1353 = vmatprep.subr.bf16.mxu0 0
        %1354 = vmatpush2.bf16.msra.mxu0 0
        %1355 = vmatprep.subr.bf16.mxu0 0
        %1356 = vmatpush2.bf16.msra.mxu0 0
        %1357 = vmatprep.subr.bf16.mxu0 0
        %1358 = vmatpush2.bf16.msra.mxu0 0
        %1359 = vmatprep.mubr.bf16.mxu0 0
        %1360 = vmatmul.mubr.bf16.gmra.mxu0 %v1236
        %v1361 = vpop.f32.mrf.mxu0
        %v1362 = vadd.f32 %v1277, %v1361
        %v1363 = vpop.f32.mrf.mxu0
        %v1364 = vpop.f32.mrf.mxu0
        %v1365 = vadd.f32 %v1277, %v1364
        %v1366 = vpop.f32.mrf.mxu0
        %1367 = vmatprep.mubr.bf16.mxu0 0
        %1368 = vmatmul.mubr.bf16.gmra.mxu0 %v1237
        %v1369 = vpop.f32.mrf.mxu0
        %v1370 = vadd.f32 %v1277, %v1369
        %v1371 = vpop.f32.mrf.mxu0
        %v1372 = vpop.f32.mrf.mxu0
        %v1373 = vadd.f32 %v1277, %v1372
        %v1374 = vpop.f32.mrf.mxu0
        %1375 = vmatprep.mubr.bf16.mxu0 0
        %1376 = vmatmul.mubr.bf16.gmra.mxu0 %v1238
        %v1377 = vpop.f32.mrf.mxu0
        %v1378 = vadd.f32 %v1277, %v1377
        %v1379 = vpop.f32.mrf.mxu0
        %v1380 = vpop.f32.mrf.mxu0
        %v1381 = vadd.f32 %v1277, %v1380
        %v1382 = vpop.f32.mrf.mxu0
        %1383 = vmatprep.mubr.bf16.mxu0 0
        %1384 = vmatmul.mubr.bf16.gmra.mxu0 %v1239
        %v1385 = vpop.f32.mrf.mxu0
        %v1386 = vadd.f32 %v1277, %v1385
        %v1387 = vpop.f32.mrf.mxu0
        %v1388 = vpop.f32.mrf.mxu0
        %v1389 = vadd.f32 %v1277, %v1388
        %v1390 = vpop.f32.mrf.mxu0
        %1391 = vmatprep.mubr.bf16.mxu0 0
        %1392 = vmatmul.mubr.bf16.gmra.mxu0 %v1240
        %v1393 = vpop.f32.mrf.mxu0
        %v1394 = vadd.f32 %v1277, %v1393
        %v1395 = vpop.f32.mrf.mxu0
        %v1396 = vpop.f32.mrf.mxu0
        %v1397 = vadd.f32 %v1277, %v1396
        %v1398 = vpop.f32.mrf.mxu0
        %1399 = vmatprep.mubr.bf16.mxu0 0
        %1400 = vmatmul.mubr.bf16.gmra.mxu0 %v1241
        %v1401 = vpop.f32.mrf.mxu0
        %v1402 = vadd.f32 %v1277, %v1401
        %v1403 = vpop.f32.mrf.mxu0
        %v1404 = vpop.f32.mrf.mxu0
        %v1405 = vadd.f32 %v1277, %v1404
        %v1406 = vpop.f32.mrf.mxu0
        %1407 = vmatprep.mubr.bf16.mxu0 0
        %1408 = vmatmul.mubr.bf16.gmra.mxu0 %v1242
        %v1409 = vpop.f32.mrf.mxu0
        %v1410 = vadd.f32 %v1277, %v1409
        %v1411 = vpop.f32.mrf.mxu0
        %v1412 = vpop.f32.mrf.mxu0
        %v1413 = vadd.f32 %v1277, %v1412
        %v1414 = vpop.f32.mrf.mxu0
        %1415 = vmatprep.mubr.bf16.mxu0 0
        %1416 = vmatmul.mubr.bf16.gmra.mxu0 %v1243
        %v1417 = vpop.f32.mrf.mxu0
        %v1418 = vadd.f32 %v1277, %v1417
        %v1419 = vpop.f32.mrf.mxu0
        %v1420 = vpop.f32.mrf.mxu0
        %v1421 = vadd.f32 %v1277, %v1420
        %v1422 = vpop.f32.mrf.mxu0
        %1423 = vmatprep.mubr.bf16.mxu0 0
        %1424 = vmatmul.mubr.bf16.gmra.mxu0 %v1244
        %v1425 = vpop.f32.mrf.mxu0
        %v1426 = vadd.f32 %v1277, %v1425
        %v1427 = vpop.f32.mrf.mxu0
        %v1428 = vpop.f32.mrf.mxu0
        %v1429 = vadd.f32 %v1277, %v1428
        %v1430 = vpop.f32.mrf.mxu0
        %1431 = vmatprep.mubr.bf16.mxu0 0
        %1432 = vmatmul.mubr.bf16.gmra.mxu0 %v1245
        %v1433 = vpop.f32.mrf.mxu0
        %v1434 = vadd.f32 %v1277, %v1433
        %v1435 = vpop.f32.mrf.mxu0
        %v1436 = vpop.f32.mrf.mxu0
        %v1437 = vadd.f32 %v1277, %v1436
        %v1438 = vpop.f32.mrf.mxu0
        %1439 = vmatprep.mubr.bf16.mxu0 0
        %1440 = vmatmul.mubr.bf16.gmra.mxu0 %v1246
        %v1441 = vpop.f32.mrf.mxu0
        %v1442 = vadd.f32 %v1277, %v1441
        %v1443 = vpop.f32.mrf.mxu0
        %v1444 = vpop.f32.mrf.mxu0
        %v1445 = vadd.f32 %v1277, %v1444
        %v1446 = vpop.f32.mrf.mxu0
        %1447 = vmatprep.mubr.bf16.mxu0 0
        %1448 = vmatmul.mubr.bf16.gmra.mxu0 %v1247
        %v1449 = vpop.f32.mrf.mxu0
        %v1450 = vadd.f32 %v1277, %v1449
        %v1451 = vpop.f32.mrf.mxu0
        %v1452 = vpop.f32.mrf.mxu0
        %v1453 = vadd.f32 %v1277, %v1452
        %v1454 = vpop.f32.mrf.mxu0
        %1455 = vmatprep.mubr.bf16.mxu0 0
        %1456 = vmatmul.mubr.bf16.gmra.mxu0 %v1248
        %v1457 = vpop.f32.mrf.mxu0
        %v1458 = vadd.f32 %v1277, %v1457
        %v1459 = vpop.f32.mrf.mxu0
        %v1460 = vpop.f32.mrf.mxu0
        %v1461 = vadd.f32 %v1277, %v1460
        %v1462 = vpop.f32.mrf.mxu0
        %1463 = vmatprep.mubr.bf16.mxu0 0
        %1464 = vmatmul.mubr.bf16.gmra.mxu0 %v1249
        %v1465 = vpop.f32.mrf.mxu0
        %v1466 = vadd.f32 %v1277, %v1465
        %v1467 = vpop.f32.mrf.mxu0
        %v1468 = vpop.f32.mrf.mxu0
        %v1469 = vadd.f32 %v1277, %v1468
        %v1470 = vpop.f32.mrf.mxu0
        %1471 = vmatprep.mubr.bf16.mxu0 0
        %1472 = vmatmul.mubr.bf16.gmra.mxu0 %v1250
        %v1473 = vpop.f32.mrf.mxu0
        %v1474 = vadd.f32 %v1277, %v1473
        %v1475 = vpop.f32.mrf.mxu0
        %v1476 = vpop.f32.mrf.mxu0
        %v1477 = vadd.f32 %v1277, %v1476
        %v1478 = vpop.f32.mrf.mxu0
        %1479 = vmatprep.mubr.bf16.mxu0 0
        %1480 = vmatmul.mubr.bf16.gmra.mxu0 %v1251
        %v1481 = vpop.f32.mrf.mxu0
        %v1482 = vadd.f32 %v1277, %v1481
        %v1483 = vpop.f32.mrf.mxu0
        %v1484 = vpop.f32.mrf.mxu0
        %v1485 = vadd.f32 %v1277, %v1484
        %v1486 = vpop.f32.mrf.mxu0
        %1487 = vmatprep.mubr.bf16.mxu0 0
        %1488 = vmatmul.mubr.bf16.gmra.mxu0 %v1252
        %v1489 = vpop.f32.mrf.mxu0
        %v1490 = vadd.f32 %v1277, %v1489
        %v1491 = vpop.f32.mrf.mxu0
        %v1492 = vpop.f32.mrf.mxu0
        %v1493 = vadd.f32 %v1277, %v1492
        %v1494 = vpop.f32.mrf.mxu0
        %1495 = vmatprep.mubr.bf16.mxu0 0
        %1496 = vmatmul.mubr.bf16.gmra.mxu0 %v1253
        %v1497 = vpop.f32.mrf.mxu0
        %v1498 = vadd.f32 %v1277, %v1497
        %v1499 = vpop.f32.mrf.mxu0
        %v1500 = vpop.f32.mrf.mxu0
        %v1501 = vadd.f32 %v1277, %v1500
        %v1502 = vpop.f32.mrf.mxu0
        %1503 = vmatprep.mubr.bf16.mxu0 0
        %1504 = vmatmul.mubr.bf16.gmra.mxu0 %v1254
        %v1505 = vpop.f32.mrf.mxu0
        %v1506 = vadd.f32 %v1277, %v1505
        %v1507 = vpop.f32.mrf.mxu0
        %v1508 = vpop.f32.mrf.mxu0
        %v1509 = vadd.f32 %v1277, %v1508
        %v1510 = vpop.f32.mrf.mxu0
        %1511 = vmatprep.mubr.bf16.mxu0 0
        %1512 = vmatmul.mubr.bf16.gmra.mxu0 %v1255
        %v1513 = vpop.f32.mrf.mxu0
        %v1514 = vadd.f32 %v1277, %v1513
        %v1515 = vpop.f32.mrf.mxu0
        %v1516 = vpop.f32.mrf.mxu0
        %v1517 = vadd.f32 %v1277, %v1516
        %v1518 = vpop.f32.mrf.mxu0
        %1519 = vdwg.mxu0
        %v1520 = vmax.f32 %v1362, 0.0
        %v1521 = vmax.f32 %v1365, 0.0
        %v1522 = vmax.f32 %v1370, 0.0
        %v1523 = vmax.f32 %v1373, 0.0
        %v1524 = vmax.f32 %v1378, 0.0
        %v1525 = vmax.f32 %v1381, 0.0
        %v1526 = vmax.f32 %v1386, 0.0
        %v1527 = vmax.f32 %v1389, 0.0
        %v1528 = vmax.f32 %v1394, 0.0
        %v1529 = vmax.f32 %v1397, 0.0
        %v1530 = vmax.f32 %v1402, 0.0
        %v1531 = vmax.f32 %v1405, 0.0
        %v1532 = vmax.f32 %v1410, 0.0
        %v1533 = vmax.f32 %v1413, 0.0
        %v1534 = vmax.f32 %v1418, 0.0
        %v1535 = vmax.f32 %v1421, 0.0
        %v1536 = vmax.f32 %v1426, 0.0
        %v1537 = vmax.f32 %v1429, 0.0
        %v1538 = vmax.f32 %v1434, 0.0
        %v1539 = vmax.f32 %v1437, 0.0
        %v1540 = vmax.f32 %v1442, 0.0
        %v1541 = vmax.f32 %v1445, 0.0
        %v1542 = vmax.f32 %v1450, 0.0
        %v1543 = vmax.f32 %v1453, 0.0
        %v1544 = vmax.f32 %v1458, 0.0
        %v1545 = vmax.f32 %v1461, 0.0
        %v1546 = vmax.f32 %v1466, 0.0
        %v1547 = vmax.f32 %v1469, 0.0
        %v1548 = vmax.f32 %v1474, 0.0
        %v1549 = vmax.f32 %v1477, 0.0
        %v1550 = vmax.f32 %v1482, 0.0
        %v1551 = vmax.f32 %v1485, 0.0
        %v1552 = vmax.f32 %v1490, 0.0
        %v1553 = vmax.f32 %v1493, 0.0
        %v1554 = vmax.f32 %v1498, 0.0
        %v1555 = vmax.f32 %v1501, 0.0
        %v1556 = vmax.f32 %v1506, 0.0
        %v1557 = vmax.f32 %v1509, 0.0
        %v1558 = vmax.f32 %v1514, 0.0
        %v1559 = vmax.f32 %v1517, 0.0
        %v1560 = vpack.c.bf16 %v1521, %v1520
        %v1561 = vpack.c.bf16 %v1523, %v1522
        %v1562 = vpack.c.bf16 %v1525, %v1524
        %v1563 = vpack.c.bf16 %v1527, %v1526
        %v1564 = vpack.c.bf16 %v1529, %v1528
        %v1565 = vpack.c.bf16 %v1531, %v1530
        %v1566 = vpack.c.bf16 %v1533, %v1532
        %v1567 = vpack.c.bf16 %v1535, %v1534
        %v1568 = vpack.c.bf16 %v1537, %v1536
        %v1569 = vpack.c.bf16 %v1539, %v1538
        %v1570 = vpack.c.bf16 %v1541, %v1540
        %v1571 = vpack.c.bf16 %v1543, %v1542
        %v1572 = vpack.c.bf16 %v1545, %v1544
        %v1573 = vpack.c.bf16 %v1547, %v1546
        %v1574 = vpack.c.bf16 %v1549, %v1548
        %v1575 = vpack.c.bf16 %v1551, %v1550
        %v1576 = vpack.c.bf16 %v1553, %v1552
        %v1577 = vpack.c.bf16 %v1555, %v1554
        %v1578 = vpack.c.bf16 %v1557, %v1556
        %v1579 = vpack.c.bf16 %v1559, %v1558
        %v1580 = vld [vmem:[#allocation4] sm:$0xff]
        %v1581 = vld [vmem:[#allocation4 + $0x8] sm:$0xff]
        %v1582 = vld [vmem:[#allocation4 + $0x10] sm:$0xff]
        %v1583 = vld [vmem:[#allocation4 + $0x18] sm:$0xff]
        %v1584 = vld [vmem:[#allocation4 + $0x20] sm:$0xff]
        %v1585 = vld [vmem:[#allocation4 + $0x28] sm:$0xff]
        %v1586 = vld [vmem:[#allocation4 + $0x30] sm:$0xff]
        %v1587 = vld [vmem:[#allocation4 + $0x38] sm:$0xff]
        %v1588 = vld [vmem:[#allocation4 + $0x40] sm:$0xff]
        %v1589 = vld [vmem:[#allocation4 + $0x48] sm:$0xff]
        %v1590 = vld [vmem:[#allocation4 + $0x50] sm:$0xff]
        %v1591 = vld [vmem:[#allocation4 + $0x58] sm:$0xff]
        %v1592 = vld [vmem:[#allocation4 + $0x60] sm:$0xff]
        %v1593 = vld [vmem:[#allocation4 + $0x68] sm:$0xff]
        %v1594 = vld [vmem:[#allocation4 + $0x70] sm:$0xff]
        %v1595 = vld [vmem:[#allocation4 + $0x78] sm:$0xff]
        %v1596 = vld [vmem:[#allocation4 + $0x80] sm:$0xff]
        %v1597 = vld [vmem:[#allocation4 + $0x88] sm:$0xff]
        %v1598 = vld [vmem:[#allocation4 + $0x90] sm:$0xff]
        %v1599 = vld [vmem:[#allocation4 + $0x98] sm:$0xff]
        %v1600 = vld [vmem:[#allocation4 + $0xa0] sm:$0xff]
        %v1601 = vld [vmem:[#allocation4 + $0xa8] sm:$0xff]
        %v1602 = vld [vmem:[#allocation4 + $0xb0] sm:$0xff]
        %v1603 = vld [vmem:[#allocation4 + $0xb8] sm:$0xff]
        %v1604 = vld [vmem:[#allocation4 + $0xc0] sm:$0xff]
        %v1605 = vld [vmem:[#allocation4 + $0xc8] sm:$0xff]
        %v1606 = vld [vmem:[#allocation4 + $0xd0] sm:$0xff]
        %v1607 = vld [vmem:[#allocation4 + $0xd8] sm:$0xff]
        %v1608 = vld [vmem:[#allocation4 + $0xe0] sm:$0xff]
        %v1609 = vld [vmem:[#allocation4 + $0xe8] sm:$0xff]
        %v1610 = vld [vmem:[#allocation4 + $0xf0] sm:$0xff]
        %v1611 = vld [vmem:[#allocation4 + $0xf8] sm:$0xff]
        %v1612 = vld [vmem:[#allocation4 + $0x100] sm:$0xff]
        %v1613 = vld [vmem:[#allocation4 + $0x108] sm:$0xff]
        %v1614 = vld [vmem:[#allocation4 + $0x110] sm:$0xff]
        %v1615 = vld [vmem:[#allocation4 + $0x118] sm:$0xff]
        %v1616 = vld [vmem:[#allocation4 + $0x120] sm:$0xff]
        %v1617 = vld [vmem:[#allocation4 + $0x128] sm:$0xff]
        %v1618 = vld [vmem:[#allocation4 + $0x130] sm:$0xff]
        %v1619 = vld [vmem:[#allocation4 + $0x138] sm:$0xff]
        %v1620 = vld [vmem:[#allocation4 + $0x140] sm:$0xff]
        %v1621 = vld [vmem:[#allocation4 + $0x148] sm:$0xff]
        %v1622 = vld [vmem:[#allocation4 + $0x150] sm:$0xff]
        %v1623 = vld [vmem:[#allocation4 + $0x158] sm:$0xff]
        %v1624 = vld [vmem:[#allocation4 + $0x160] sm:$0xff]
        %v1625 = vld [vmem:[#allocation4 + $0x168] sm:$0xff]
        %v1626 = vld [vmem:[#allocation4 + $0x170] sm:$0xff]
        %v1627 = vld [vmem:[#allocation4 + $0x178] sm:$0xff]
        %v1628 = vld [vmem:[#allocation4 + $0x180] sm:$0xff]
        %v1629 = vld [vmem:[#allocation4 + $0x188] sm:$0xff]
        %v1630 = vld [vmem:[#allocation4 + $0x190] sm:$0xff]
        %v1631 = vld [vmem:[#allocation4 + $0x198] sm:$0xff]
        %v1632 = vld [vmem:[#allocation4 + $0x1a0] sm:$0xff]
        %v1633 = vld [vmem:[#allocation4 + $0x1a8] sm:$0xff]
        %v1634 = vld [vmem:[#allocation4 + $0x1b0] sm:$0xff]
        %v1635 = vld [vmem:[#allocation4 + $0x1b8] sm:$0xff]
        %v1636 = vld [vmem:[#allocation4 + $0x1c0] sm:$0xff]
        %v1637 = vld [vmem:[#allocation4 + $0x1c8] sm:$0xff]
        %v1638 = vld [vmem:[#allocation4 + $0x1d0] sm:$0xff]
        %v1639 = vld [vmem:[#allocation4 + $0x1d8] sm:$0xff]
        %v1640 = vld [vmem:[#allocation4 + $0x1e0] sm:$0xff]
        %v1641 = vld [vmem:[#allocation4 + $0x1e8] sm:$0xff]
        %v1642 = vld [vmem:[#allocation4 + $0x1f0] sm:$0xff]
        %v1643 = vld [vmem:[#allocation4 + $0x1f8] sm:$0xff]
        %v1644 = vld [vmem:[#allocation4 + $0x200] sm:$0xff]
        %v1645 = vld [vmem:[#allocation4 + $0x208] sm:$0xff]
        %v1646 = vld [vmem:[#allocation4 + $0x210] sm:$0xff]
        %v1647 = vld [vmem:[#allocation4 + $0x218] sm:$0xff]
        %v1648 = vld [vmem:[#allocation4 + $0x220] sm:$0xff]
        %v1649 = vld [vmem:[#allocation4 + $0x228] sm:$0xff]
        %v1650 = vld [vmem:[#allocation4 + $0x230] sm:$0xff]
        %v1651 = vld [vmem:[#allocation4 + $0x238] sm:$0xff]
        %v1652 = vld [vmem:[#allocation4 + $0x240] sm:$0xff]
        %v1653 = vld [vmem:[#allocation4 + $0x248] sm:$0xff]
        %v1654 = vld [vmem:[#allocation4 + $0x250] sm:$0xff]
        %v1655 = vld [vmem:[#allocation4 + $0x258] sm:$0xff]
        %v1656 = vld [vmem:[#allocation4 + $0x260] sm:$0xff]
        %v1657 = vld [vmem:[#allocation4 + $0x268] sm:$0xff]
        %v1658 = vld [vmem:[#allocation4 + $0x270] sm:$0xff]
        %v1659 = vld [vmem:[#allocation4 + $0x278] sm:$0xff]
        %v1660 = vld [vmem:[#allocation4 + $0x280] sm:$0xff]
        %v1661 = vld [vmem:[#allocation4 + $0x288] sm:$0xff]
        %v1662 = vld [vmem:[#allocation4 + $0x290] sm:$0xff]
        %v1663 = vld [vmem:[#allocation4 + $0x298] sm:$0xff]
        %v1664 = vld [vmem:[#allocation4 + $0x2a0] sm:$0xff]
        %v1665 = vld [vmem:[#allocation4 + $0x2a8] sm:$0xff]
        %v1666 = vld [vmem:[#allocation4 + $0x2b0] sm:$0xff]
        %v1667 = vld [vmem:[#allocation4 + $0x2b8] sm:$0xff]
        %v1668 = vld [vmem:[#allocation4 + $0x2c0] sm:$0xff]
        %v1669 = vld [vmem:[#allocation4 + $0x2c8] sm:$0xff]
        %v1670 = vld [vmem:[#allocation4 + $0x2d0] sm:$0xff]
        %v1671 = vld [vmem:[#allocation4 + $0x2d8] sm:$0xff]
        %v1672 = vld [vmem:[#allocation4 + $0x2e0] sm:$0xff]
        %v1673 = vld [vmem:[#allocation4 + $0x2e8] sm:$0xff]
        %v1674 = vld [vmem:[#allocation4 + $0x2f0] sm:$0xff]
        %v1675 = vld [vmem:[#allocation4 + $0x2f8] sm:$0xff]
        %v1676 = vld [vmem:[#allocation4 + $0x300] sm:$0xff]
        %v1677 = vld [vmem:[#allocation4 + $0x308] sm:$0xff]
        %v1678 = vld [vmem:[#allocation4 + $0x310] sm:$0xff]
        %v1679 = vld [vmem:[#allocation4 + $0x318] sm:$0xff]
        %v1680 = vld [vmem:[#allocation4 + $0x320] sm:$0xff]
        %v1681 = vld [vmem:[#allocation4 + $0x328] sm:$0xff]
        %v1682 = vld [vmem:[#allocation4 + $0x330] sm:$0xff]
        %v1683 = vld [vmem:[#allocation4 + $0x338] sm:$0xff]
        %v1684 = vld [vmem:[#allocation4 + $0x340] sm:$0xff]
        %v1685 = vld [vmem:[#allocation4 + $0x348] sm:$0xff]
        %v1686 = vld [vmem:[#allocation4 + $0x350] sm:$0xff]
        %v1687 = vld [vmem:[#allocation4 + $0x358] sm:$0xff]
        %v1688 = vld [vmem:[#allocation4 + $0x360] sm:$0xff]
        %v1689 = vld [vmem:[#allocation4 + $0x368] sm:$0xff]
        %v1690 = vld [vmem:[#allocation4 + $0x370] sm:$0xff]
        %v1691 = vld [vmem:[#allocation4 + $0x378] sm:$0xff]
        %v1692 = vld [vmem:[#allocation4 + $0x380] sm:$0xff]
        %v1693 = vld [vmem:[#allocation4 + $0x388] sm:$0xff]
        %v1694 = vld [vmem:[#allocation4 + $0x390] sm:$0xff]
        %v1695 = vld [vmem:[#allocation4 + $0x398] sm:$0xff]
        %v1696 = vld [vmem:[#allocation4 + $0x3a0] sm:$0xff]
        %v1697 = vld [vmem:[#allocation4 + $0x3a8] sm:$0xff]
        %v1698 = vld [vmem:[#allocation4 + $0x3b0] sm:$0xff]
        %v1699 = vld [vmem:[#allocation4 + $0x3b8] sm:$0xff]
        %1700 = vmatprep.subr.bf16.mxu0 0
        %1701 = vmatpush1.bf16.xpose.msra.mxu0 %v1567
        %1702 = vmatprep.subr.bf16.mxu0 0
        %1703 = vmatpush1.bf16.xpose.msra.mxu0 %v1566
        %1704 = vmatprep.subr.bf16.mxu0 0
        %1705 = vmatpush1.bf16.xpose.msra.mxu0 %v1565
        %1706 = vmatprep.subr.bf16.mxu0 0
        %1707 = vmatpush1.bf16.xpose.msra.mxu0 %v1564
        %1708 = vmatprep.subr.bf16.mxu0 0
        %1709 = vmatpush1.bf16.xpose.msra.mxu0 %v1563
        %1710 = vmatprep.subr.bf16.mxu0 0
        %1711 = vmatpush1.bf16.xpose.msra.mxu0 %v1562
        %1712 = vmatprep.subr.bf16.mxu0 0
        %1713 = vmatpush1.bf16.xpose.msra.mxu0 %v1561
        %1714 = vmatprep.subr.bf16.mxu0 0
        %1715 = vmatpush1.bf16.xpose.msra.mxu0 %v1560
        %1716 = vmatprep.subr.bf16.mxu0 0
        %1717 = vmatpush2.bf16.xpose.msra.mxu0 %v1575
        %1718 = vmatprep.subr.bf16.mxu0 0
        %1719 = vmatpush2.bf16.xpose.msra.mxu0 %v1574
        %1720 = vmatprep.subr.bf16.mxu0 0
        %1721 = vmatpush2.bf16.xpose.msra.mxu0 %v1573
        %1722 = vmatprep.subr.bf16.mxu0 0
        %1723 = vmatpush2.bf16.xpose.msra.mxu0 %v1572
        %1724 = vmatprep.subr.bf16.mxu0 0
        %1725 = vmatpush2.bf16.xpose.msra.mxu0 %v1571
        %1726 = vmatprep.subr.bf16.mxu0 0
        %1727 = vmatpush2.bf16.xpose.msra.mxu0 %v1570
        %1728 = vmatprep.subr.bf16.mxu0 0
        %1729 = vmatpush2.bf16.xpose.msra.mxu0 %v1569
        %1730 = vmatprep.subr.bf16.mxu0 0
        %1731 = vmatpush2.bf16.xpose.msra.mxu0 %v1568
        %1732 = vmatprep.mubr.bf16.mxu0 0
        %1733 = vmatmul.mubr.bf16.gmra.mxu0 %v1560
        %v1734 = vpop.f32.mrf.mxu0
        %v1735 = vadd.f32 %v1580, %v1734
        %v1736 = vpop.f32.mrf.mxu0
        %v1737 = vadd.f32 %v1581, %v1736
        %v1738 = vpop.f32.mrf.mxu0
        %v1739 = vadd.f32 %v1583, %v1738
        %v1740 = vpop.f32.mrf.mxu0
        %v1741 = vadd.f32 %v1584, %v1740
        %1742 = vmatprep.mubr.bf16.mxu0 0
        %1743 = vmatmul.mubr.bf16.gmra.mxu0 %v1561
        %v1744 = vpop.f32.mrf.mxu0
        %v1745 = vadd.f32 %v1586, %v1744
        %v1746 = vpop.f32.mrf.mxu0
        %v1747 = vadd.f32 %v1587, %v1746
        %v1748 = vpop.f32.mrf.mxu0
        %v1749 = vadd.f32 %v1589, %v1748
        %v1750 = vpop.f32.mrf.mxu0
        %v1751 = vadd.f32 %v1590, %v1750
        %1752 = vmatprep.mubr.bf16.mxu0 0
        %1753 = vmatmul.mubr.bf16.gmra.mxu0 %v1562
        %v1754 = vpop.f32.mrf.mxu0
        %v1755 = vadd.f32 %v1592, %v1754
        %v1756 = vpop.f32.mrf.mxu0
        %v1757 = vadd.f32 %v1593, %v1756
        %v1758 = vpop.f32.mrf.mxu0
        %v1759 = vadd.f32 %v1595, %v1758
        %v1760 = vpop.f32.mrf.mxu0
        %v1761 = vadd.f32 %v1596, %v1760
        %1762 = vmatprep.mubr.bf16.mxu0 0
        %1763 = vmatmul.mubr.bf16.gmra.mxu0 %v1563
        %v1764 = vpop.f32.mrf.mxu0
        %v1765 = vadd.f32 %v1598, %v1764
        %v1766 = vpop.f32.mrf.mxu0
        %v1767 = vadd.f32 %v1599, %v1766
        %v1768 = vpop.f32.mrf.mxu0
        %v1769 = vadd.f32 %v1601, %v1768
        %v1770 = vpop.f32.mrf.mxu0
        %v1771 = vadd.f32 %v1602, %v1770
        %1772 = vmatprep.mubr.bf16.mxu0 0
        %1773 = vmatmul.mubr.bf16.gmra.mxu0 %v1564
        %v1774 = vpop.f32.mrf.mxu0
        %v1775 = vadd.f32 %v1604, %v1774
        %v1776 = vpop.f32.mrf.mxu0
        %v1777 = vadd.f32 %v1605, %v1776
        %v1778 = vpop.f32.mrf.mxu0
        %v1779 = vadd.f32 %v1607, %v1778
        %v1780 = vpop.f32.mrf.mxu0
        %v1781 = vadd.f32 %v1608, %v1780
        %1782 = vmatprep.mubr.bf16.mxu0 0
        %1783 = vmatmul.mubr.bf16.gmra.mxu0 %v1565
        %v1784 = vpop.f32.mrf.mxu0
        %v1785 = vadd.f32 %v1610, %v1784
        %v1786 = vpop.f32.mrf.mxu0
        %v1787 = vadd.f32 %v1611, %v1786
        %v1788 = vpop.f32.mrf.mxu0
        %v1789 = vadd.f32 %v1613, %v1788
        %v1790 = vpop.f32.mrf.mxu0
        %v1791 = vadd.f32 %v1614, %v1790
        %1792 = vmatprep.mubr.bf16.mxu0 0
        %1793 = vmatmul.mubr.bf16.gmra.mxu0 %v1566
        %v1794 = vpop.f32.mrf.mxu0
        %v1795 = vadd.f32 %v1616, %v1794
        %v1796 = vpop.f32.mrf.mxu0
        %v1797 = vadd.f32 %v1617, %v1796
        %v1798 = vpop.f32.mrf.mxu0
        %v1799 = vadd.f32 %v1619, %v1798
        %v1800 = vpop.f32.mrf.mxu0
        %v1801 = vadd.f32 %v1620, %v1800
        %1802 = vmatprep.mubr.bf16.mxu0 0
        %1803 = vmatmul.mubr.bf16.gmra.mxu0 %v1567
        %v1804 = vpop.f32.mrf.mxu0
        %v1805 = vadd.f32 %v1622, %v1804
        %v1806 = vpop.f32.mrf.mxu0
        %v1807 = vadd.f32 %v1623, %v1806
        %v1808 = vpop.f32.mrf.mxu0
        %v1809 = vadd.f32 %v1625, %v1808
        %v1810 = vpop.f32.mrf.mxu0
        %v1811 = vadd.f32 %v1626, %v1810
        %1812 = vmatprep.mubr.bf16.mxu0 0
        %1813 = vmatmul.mubr.bf16.gmra.mxu0 %v1568
        %v1814 = vpop.f32.mrf.mxu0
        %v1815 = vadd.f32 %v1628, %v1814
        %v1816 = vpop.f32.mrf.mxu0
        %v1817 = vadd.f32 %v1629, %v1816
        %v1818 = vpop.f32.mrf.mxu0
        %v1819 = vadd.f32 %v1631, %v1818
        %v1820 = vpop.f32.mrf.mxu0
        %v1821 = vadd.f32 %v1632, %v1820
        %1822 = vmatprep.mubr.bf16.mxu0 0
        %1823 = vmatmul.mubr.bf16.gmra.mxu0 %v1569
        %v1824 = vpop.f32.mrf.mxu0
        %v1825 = vadd.f32 %v1634, %v1824
        %v1826 = vpop.f32.mrf.mxu0
        %v1827 = vadd.f32 %v1635, %v1826
        %v1828 = vpop.f32.mrf.mxu0
        %v1829 = vadd.f32 %v1637, %v1828
        %v1830 = vpop.f32.mrf.mxu0
        %v1831 = vadd.f32 %v1638, %v1830
        %1832 = vmatprep.mubr.bf16.mxu0 0
        %1833 = vmatmul.mubr.bf16.gmra.mxu0 %v1570
        %v1834 = vpop.f32.mrf.mxu0
        %v1835 = vadd.f32 %v1640, %v1834
        %v1836 = vpop.f32.mrf.mxu0
        %v1837 = vadd.f32 %v1641, %v1836
        %v1838 = vpop.f32.mrf.mxu0
        %v1839 = vadd.f32 %v1643, %v1838
        %v1840 = vpop.f32.mrf.mxu0
        %v1841 = vadd.f32 %v1644, %v1840
        %1842 = vmatprep.mubr.bf16.mxu0 0
        %1843 = vmatmul.mubr.bf16.gmra.mxu0 %v1571
        %v1844 = vpop.f32.mrf.mxu0
        %v1845 = vadd.f32 %v1646, %v1844
        %v1846 = vpop.f32.mrf.mxu0
        %v1847 = vadd.f32 %v1647, %v1846
        %v1848 = vpop.f32.mrf.mxu0
        %v1849 = vadd.f32 %v1649, %v1848
        %v1850 = vpop.f32.mrf.mxu0
        %v1851 = vadd.f32 %v1650, %v1850
        %1852 = vmatprep.mubr.bf16.mxu0 0
        %1853 = vmatmul.mubr.bf16.gmra.mxu0 %v1572
        %v1854 = vpop.f32.mrf.mxu0
        %v1855 = vadd.f32 %v1652, %v1854
        %v1856 = vpop.f32.mrf.mxu0
        %v1857 = vadd.f32 %v1653, %v1856
        %v1858 = vpop.f32.mrf.mxu0
        %v1859 = vadd.f32 %v1655, %v1858
        %v1860 = vpop.f32.mrf.mxu0
        %v1861 = vadd.f32 %v1656, %v1860
        %1862 = vmatprep.mubr.bf16.mxu0 0
        %1863 = vmatmul.mubr.bf16.gmra.mxu0 %v1573
        %v1864 = vpop.f32.mrf.mxu0
        %v1865 = vadd.f32 %v1658, %v1864
        %v1866 = vpop.f32.mrf.mxu0
        %v1867 = vadd.f32 %v1659, %v1866
        %v1868 = vpop.f32.mrf.mxu0
        %v1869 = vadd.f32 %v1661, %v1868
        %v1870 = vpop.f32.mrf.mxu0
        %v1871 = vadd.f32 %v1662, %v1870
        %1872 = vmatprep.mubr.bf16.mxu0 0
        %1873 = vmatmul.mubr.bf16.gmra.mxu0 %v1574
        %v1874 = vpop.f32.mrf.mxu0
        %v1875 = vadd.f32 %v1664, %v1874
        %v1876 = vpop.f32.mrf.mxu0
        %v1877 = vadd.f32 %v1665, %v1876
        %v1878 = vpop.f32.mrf.mxu0
        %v1879 = vadd.f32 %v1667, %v1878
        %v1880 = vpop.f32.mrf.mxu0
        %v1881 = vadd.f32 %v1668, %v1880
        %1882 = vmatprep.mubr.bf16.mxu0 0
        %1883 = vmatmul.mubr.bf16.gmra.mxu0 %v1575
        %v1884 = vpop.f32.mrf.mxu0
        %v1885 = vadd.f32 %v1670, %v1884
        %v1886 = vpop.f32.mrf.mxu0
        %v1887 = vadd.f32 %v1671, %v1886
        %v1888 = vpop.f32.mrf.mxu0
        %v1889 = vadd.f32 %v1673, %v1888
        %v1890 = vpop.f32.mrf.mxu0
        %v1891 = vadd.f32 %v1674, %v1890
        %1892 = vmatprep.mubr.bf16.mxu0 0
        %1893 = vmatmul.mubr.bf16.gmra.mxu0 %v1576
        %v1894 = vpop.f32.mrf.mxu0
        %v1895 = vadd.f32 %v1676, %v1894
        %v1896 = vpop.f32.mrf.mxu0
        %v1897 = vadd.f32 %v1677, %v1896
        %v1898 = vpop.f32.mrf.mxu0
        %v1899 = vadd.f32 %v1679, %v1898
        %v1900 = vpop.f32.mrf.mxu0
        %v1901 = vadd.f32 %v1680, %v1900
        %1902 = vmatprep.mubr.bf16.mxu0 0
        %1903 = vmatmul.mubr.bf16.gmra.mxu0 %v1577
        %v1904 = vpop.f32.mrf.mxu0
        %v1905 = vadd.f32 %v1682, %v1904
        %v1906 = vpop.f32.mrf.mxu0
        %v1907 = vadd.f32 %v1683, %v1906
        %v1908 = vpop.f32.mrf.mxu0
        %v1909 = vadd.f32 %v1685, %v1908
        %v1910 = vpop.f32.mrf.mxu0
        %v1911 = vadd.f32 %v1686, %v1910
        %1912 = vmatprep.mubr.bf16.mxu0 0
        %1913 = vmatmul.mubr.bf16.gmra.mxu0 %v1578
        %v1914 = vpop.f32.mrf.mxu0
        %v1915 = vadd.f32 %v1688, %v1914
        %v1916 = vpop.f32.mrf.mxu0
        %v1917 = vadd.f32 %v1689, %v1916
        %v1918 = vpop.f32.mrf.mxu0
        %v1919 = vadd.f32 %v1691, %v1918
        %v1920 = vpop.f32.mrf.mxu0
        %v1921 = vadd.f32 %v1692, %v1920
        %1922 = vmatprep.mubr.bf16.mxu0 0
        %1923 = vmatmul.mubr.bf16.gmra.mxu0 %v1579
        %v1924 = vpop.f32.mrf.mxu0
        %v1925 = vadd.f32 %v1694, %v1924
        %v1926 = vpop.f32.mrf.mxu0
        %v1927 = vadd.f32 %v1695, %v1926
        %v1928 = vpop.f32.mrf.mxu0
        %v1929 = vadd.f32 %v1697, %v1928
        %v1930 = vpop.f32.mrf.mxu0
        %v1931 = vadd.f32 %v1698, %v1930
        %1932 = vdwg.mxu0
        %1933 = vmatprep.subr.bf16.mxu0 0
        %1934 = vmatpush1.bf16.xpose.msra.mxu0 0
        %1935 = vmatprep.subr.bf16.mxu0 0
        %1936 = vmatpush1.bf16.xpose.msra.mxu0 0
        %1937 = vmatprep.subr.bf16.mxu0 0
        %1938 = vmatpush1.bf16.xpose.msra.mxu0 0
        %1939 = vmatprep.subr.bf16.mxu0 0
        %1940 = vmatpush1.bf16.xpose.msra.mxu0 0
        %1941 = vmatprep.subr.bf16.mxu0 0
        %1942 = vmatpush1.bf16.xpose.msra.mxu0 %v1579
        %1943 = vmatprep.subr.bf16.mxu0 0
        %1944 = vmatpush1.bf16.xpose.msra.mxu0 %v1578
        %1945 = vmatprep.subr.bf16.mxu0 0
        %1946 = vmatpush1.bf16.xpose.msra.mxu0 %v1577
        %1947 = vmatprep.subr.bf16.mxu0 0
        %1948 = vmatpush1.bf16.xpose.msra.mxu0 %v1576
        %1949 = vmatprep.subr.bf16.mxu0 0
        %1950 = vmatpush2.bf16.xpose.msra.mxu0 0
        %1951 = vmatprep.subr.bf16.mxu0 0
        %1952 = vmatpush2.bf16.xpose.msra.mxu0 0
        %1953 = vmatprep.subr.bf16.mxu0 0
        %1954 = vmatpush2.bf16.xpose.msra.mxu0 0
        %1955 = vmatprep.subr.bf16.mxu0 0
        %1956 = vmatpush2.bf16.xpose.msra.mxu0 0
        %1957 = vmatprep.subr.bf16.mxu0 0
        %1958 = vmatpush2.bf16.xpose.msra.mxu0 0
        %1959 = vmatprep.subr.bf16.mxu0 0
        %1960 = vmatpush2.bf16.xpose.msra.mxu0 0
        %1961 = vmatprep.subr.bf16.mxu0 0
        %1962 = vmatpush2.bf16.xpose.msra.mxu0 0
        %1963 = vmatprep.subr.bf16.mxu0 0
        %1964 = vmatpush2.bf16.xpose.msra.mxu0 0
        %1965 = vmatprep.mubr.bf16.mxu0 0
        %1966 = vmatmul.mubr.bf16.gmra.mxu0 %v1560
        %v1967 = vpop.f32.mrf.mxu0
        %v1968 = vadd.f32 %v1582, %v1967
        %v1969 = vpop.f32.mrf.mxu0
        %v1970 = vpop.f32.mrf.mxu0
        %v1971 = vadd.f32 %v1585, %v1970
        %v1972 = vpop.f32.mrf.mxu0
        %1973 = vmatprep.mubr.bf16.mxu0 0
        %1974 = vmatmul.mubr.bf16.gmra.mxu0 %v1561
        %v1975 = vpop.f32.mrf.mxu0
        %v1976 = vadd.f32 %v1588, %v1975
        %v1977 = vpop.f32.mrf.mxu0
        %v1978 = vpop.f32.mrf.mxu0
        %v1979 = vadd.f32 %v1591, %v1978
        %v1980 = vpop.f32.mrf.mxu0
        %1981 = vmatprep.mubr.bf16.mxu0 0
        %1982 = vmatmul.mubr.bf16.gmra.mxu0 %v1562
        %v1983 = vpop.f32.mrf.mxu0
        %v1984 = vadd.f32 %v1594, %v1983
        %v1985 = vpop.f32.mrf.mxu0
        %v1986 = vpop.f32.mrf.mxu0
        %v1987 = vadd.f32 %v1597, %v1986
        %v1988 = vpop.f32.mrf.mxu0
        %1989 = vmatprep.mubr.bf16.mxu0 0
        %1990 = vmatmul.mubr.bf16.gmra.mxu0 %v1563
        %v1991 = vpop.f32.mrf.mxu0
        %v1992 = vadd.f32 %v1600, %v1991
        %v1993 = vpop.f32.mrf.mxu0
        %v1994 = vpop.f32.mrf.mxu0
        %v1995 = vadd.f32 %v1603, %v1994
        %v1996 = vpop.f32.mrf.mxu0
        %1997 = vmatprep.mubr.bf16.mxu0 0
        %1998 = vmatmul.mubr.bf16.gmra.mxu0 %v1564
        %v1999 = vpop.f32.mrf.mxu0
        %v2000 = vadd.f32 %v1606, %v1999
        %v2001 = vpop.f32.mrf.mxu0
        %v2002 = vpop.f32.mrf.mxu0
        %v2003 = vadd.f32 %v1609, %v2002
        %v2004 = vpop.f32.mrf.mxu0
        %2005 = vmatprep.mubr.bf16.mxu0 0
        %2006 = vmatmul.mubr.bf16.gmra.mxu0 %v1565
        %v2007 = vpop.f32.mrf.mxu0
        %v2008 = vadd.f32 %v1612, %v2007
        %v2009 = vpop.f32.mrf.mxu0
        %v2010 = vpop.f32.mrf.mxu0
        %v2011 = vadd.f32 %v1615, %v2010
        %v2012 = vpop.f32.mrf.mxu0
        %2013 = vmatprep.mubr.bf16.mxu0 0
        %2014 = vmatmul.mubr.bf16.gmra.mxu0 %v1566
        %v2015 = vpop.f32.mrf.mxu0
        %v2016 = vadd.f32 %v1618, %v2015
        %v2017 = vpop.f32.mrf.mxu0
        %v2018 = vpop.f32.mrf.mxu0
        %v2019 = vadd.f32 %v1621, %v2018
        %v2020 = vpop.f32.mrf.mxu0
        %2021 = vmatprep.mubr.bf16.mxu0 0
        %2022 = vmatmul.mubr.bf16.gmra.mxu0 %v1567
        %v2023 = vpop.f32.mrf.mxu0
        %v2024 = vadd.f32 %v1624, %v2023
        %v2025 = vpop.f32.mrf.mxu0
        %v2026 = vpop.f32.mrf.mxu0
        %v2027 = vadd.f32 %v1627, %v2026
        %v2028 = vpop.f32.mrf.mxu0
        %2029 = vmatprep.mubr.bf16.mxu0 0
        %2030 = vmatmul.mubr.bf16.gmra.mxu0 %v1568
        %v2031 = vpop.f32.mrf.mxu0
        %v2032 = vadd.f32 %v1630, %v2031
        %v2033 = vpop.f32.mrf.mxu0
        %v2034 = vpop.f32.mrf.mxu0
        %v2035 = vadd.f32 %v1633, %v2034
        %v2036 = vpop.f32.mrf.mxu0
        %2037 = vmatprep.mubr.bf16.mxu0 0
        %2038 = vmatmul.mubr.bf16.gmra.mxu0 %v1569
        %v2039 = vpop.f32.mrf.mxu0
        %v2040 = vadd.f32 %v1636, %v2039
        %v2041 = vpop.f32.mrf.mxu0
        %v2042 = vpop.f32.mrf.mxu0
        %v2043 = vadd.f32 %v1639, %v2042
        %v2044 = vpop.f32.mrf.mxu0
        %2045 = vmatprep.mubr.bf16.mxu0 0
        %2046 = vmatmul.mubr.bf16.gmra.mxu0 %v1570
        %v2047 = vpop.f32.mrf.mxu0
        %v2048 = vadd.f32 %v1642, %v2047
        %v2049 = vpop.f32.mrf.mxu0
        %v2050 = vpop.f32.mrf.mxu0
        %v2051 = vadd.f32 %v1645, %v2050
        %v2052 = vpop.f32.mrf.mxu0
        %2053 = vmatprep.mubr.bf16.mxu0 0
        %2054 = vmatmul.mubr.bf16.gmra.mxu0 %v1571
        %v2055 = vpop.f32.mrf.mxu0
        %v2056 = vadd.f32 %v1648, %v2055
        %v2057 = vpop.f32.mrf.mxu0
        %v2058 = vpop.f32.mrf.mxu0
        %v2059 = vadd.f32 %v1651, %v2058
        %v2060 = vpop.f32.mrf.mxu0
        %2061 = vmatprep.mubr.bf16.mxu0 0
        %2062 = vmatmul.mubr.bf16.gmra.mxu0 %v1572
        %v2063 = vpop.f32.mrf.mxu0
        %v2064 = vadd.f32 %v1654, %v2063
        %v2065 = vpop.f32.mrf.mxu0
        %v2066 = vpop.f32.mrf.mxu0
        %v2067 = vadd.f32 %v1657, %v2066
        %v2068 = vpop.f32.mrf.mxu0
        %2069 = vmatprep.mubr.bf16.mxu0 0
        %2070 = vmatmul.mubr.bf16.gmra.mxu0 %v1573
        %v2071 = vpop.f32.mrf.mxu0
        %v2072 = vadd.f32 %v1660, %v2071
        %v2073 = vpop.f32.mrf.mxu0
        %v2074 = vpop.f32.mrf.mxu0
        %v2075 = vadd.f32 %v1663, %v2074
        %v2076 = vpop.f32.mrf.mxu0
        %2077 = vmatprep.mubr.bf16.mxu0 0
        %2078 = vmatmul.mubr.bf16.gmra.mxu0 %v1574
        %v2079 = vpop.f32.mrf.mxu0
        %v2080 = vadd.f32 %v1666, %v2079
        %v2081 = vpop.f32.mrf.mxu0
        %v2082 = vpop.f32.mrf.mxu0
        %v2083 = vadd.f32 %v1669, %v2082
        %v2084 = vpop.f32.mrf.mxu0
        %2085 = vmatprep.mubr.bf16.mxu0 0
        %2086 = vmatmul.mubr.bf16.gmra.mxu0 %v1575
        %v2087 = vpop.f32.mrf.mxu0
        %v2088 = vadd.f32 %v1672, %v2087
        %v2089 = vpop.f32.mrf.mxu0
        %v2090 = vpop.f32.mrf.mxu0
        %v2091 = vadd.f32 %v1675, %v2090
        %v2092 = vpop.f32.mrf.mxu0
        %2093 = vmatprep.mubr.bf16.mxu0 0
        %2094 = vmatmul.mubr.bf16.gmra.mxu0 %v1576
        %v2095 = vpop.f32.mrf.mxu0
        %v2096 = vadd.f32 %v1678, %v2095
        %v2097 = vpop.f32.mrf.mxu0
        %v2098 = vpop.f32.mrf.mxu0
        %v2099 = vadd.f32 %v1681, %v2098
        %v2100 = vpop.f32.mrf.mxu0
        %2101 = vmatprep.mubr.bf16.mxu0 0
        %2102 = vmatmul.mubr.bf16.gmra.mxu0 %v1577
        %v2103 = vpop.f32.mrf.mxu0
        %v2104 = vadd.f32 %v1684, %v2103
        %v2105 = vpop.f32.mrf.mxu0
        %v2106 = vpop.f32.mrf.mxu0
        %v2107 = vadd.f32 %v1687, %v2106
        %v2108 = vpop.f32.mrf.mxu0
        %2109 = vmatprep.mubr.bf16.mxu0 0
        %2110 = vmatmul.mubr.bf16.gmra.mxu0 %v1578
        %v2111 = vpop.f32.mrf.mxu0
        %v2112 = vadd.f32 %v1690, %v2111
        %v2113 = vpop.f32.mrf.mxu0
        %v2114 = vpop.f32.mrf.mxu0
        %v2115 = vadd.f32 %v1693, %v2114
        %v2116 = vpop.f32.mrf.mxu0
        %2117 = vmatprep.mubr.bf16.mxu0 0
        %2118 = vmatmul.mubr.bf16.gmra.mxu0 %v1579
        %v2119 = vpop.f32.mrf.mxu0
        %v2120 = vadd.f32 %v1696, %v2119
        %v2121 = vpop.f32.mrf.mxu0
        %v2122 = vpop.f32.mrf.mxu0
        %v2123 = vadd.f32 %v1699, %v2122
        %v2124 = vpop.f32.mrf.mxu0
        %2125 = vdwg.mxu0
        %v2126 = vld [vmem:[%s660] sm:$0x7]
        %v2128 = vlaneseq
        %v2129 = vshrl.u32 %v2128, 7
        %v2130 = vsub.s32 0, %v2129
        %v2131 = vrot.slane %v2126, %v2130
        %v2132 = vlaneseq
        %v2133 = vshrl.u32 %v2132, 7
        %v2134 = vsub.s32 1, %v2133
        %v2135 = vrot.slane %v2126, %v2134
        %v2136 = vlaneseq
        %v2137 = vshrl.u32 %v2136, 7
        %v2138 = vsub.s32 2, %v2137
        %v2139 = vrot.slane %v2126, %v2138
        %v2143 = vadd.f32 %v1735, %v2131
        %v2144 = vadd.f32 %v1737, %v2135
        %v2145 = vadd.f32 %v1968, %v2139
        %v2146 = vadd.f32 %v1739, %v2131
        %v2147 = vadd.f32 %v1741, %v2135
        %v2148 = vadd.f32 %v1971, %v2139
        %v2149 = vadd.f32 %v1745, %v2131
        %v2150 = vadd.f32 %v1747, %v2135
        %v2151 = vadd.f32 %v1976, %v2139
        %v2152 = vadd.f32 %v1749, %v2131
        %v2153 = vadd.f32 %v1751, %v2135
        %v2154 = vadd.f32 %v1979, %v2139
        %v2155 = vadd.f32 %v1755, %v2131
        %v2156 = vadd.f32 %v1757, %v2135
        %v2157 = vadd.f32 %v1984, %v2139
        %v2158 = vadd.f32 %v1759, %v2131
        %v2159 = vadd.f32 %v1761, %v2135
        %v2160 = vadd.f32 %v1987, %v2139
        %v2161 = vadd.f32 %v1765, %v2131
        %v2162 = vadd.f32 %v1767, %v2135
        %v2163 = vadd.f32 %v1992, %v2139
        %v2164 = vadd.f32 %v1769, %v2131
        %v2165 = vadd.f32 %v1771, %v2135
        %v2166 = vadd.f32 %v1995, %v2139
        %v2167 = vadd.f32 %v1775, %v2131
        %v2168 = vadd.f32 %v1777, %v2135
        %v2169 = vadd.f32 %v2000, %v2139
        %v2170 = vadd.f32 %v1779, %v2131
        %v2171 = vadd.f32 %v1781, %v2135
        %v2172 = vadd.f32 %v2003, %v2139
        %v2173 = vadd.f32 %v1785, %v2131
        %v2174 = vadd.f32 %v1787, %v2135
        %v2175 = vadd.f32 %v2008, %v2139
        %v2176 = vadd.f32 %v1789, %v2131
        %v2177 = vadd.f32 %v1791, %v2135
        %v2178 = vadd.f32 %v2011, %v2139
        %v2179 = vadd.f32 %v1795, %v2131
        %v2180 = vadd.f32 %v1797, %v2135
        %v2181 = vadd.f32 %v2016, %v2139
        %v2182 = vadd.f32 %v1799, %v2131
        %v2183 = vadd.f32 %v1801, %v2135
        %v2184 = vadd.f32 %v2019, %v2139
        %v2185 = vadd.f32 %v1805, %v2131
        %v2186 = vadd.f32 %v1807, %v2135
        %v2187 = vadd.f32 %v2024, %v2139
        %v2188 = vadd.f32 %v1809, %v2131
        %v2189 = vadd.f32 %v1811, %v2135
        %v2190 = vadd.f32 %v2027, %v2139
        %v2191 = vadd.f32 %v1815, %v2131
        %v2192 = vadd.f32 %v1817, %v2135
        %v2193 = vadd.f32 %v2032, %v2139
        %v2194 = vadd.f32 %v1819, %v2131
        %v2195 = vadd.f32 %v1821, %v2135
        %v2196 = vadd.f32 %v2035, %v2139
        %v2197 = vadd.f32 %v1825, %v2131
        %v2198 = vadd.f32 %v1827, %v2135
        %v2199 = vadd.f32 %v2040, %v2139
        %v2200 = vadd.f32 %v1829, %v2131
        %v2201 = vadd.f32 %v1831, %v2135
        %v2202 = vadd.f32 %v2043, %v2139
        %v2203 = vadd.f32 %v1835, %v2131
        %v2204 = vadd.f32 %v1837, %v2135
        %v2205 = vadd.f32 %v2048, %v2139
        %v2206 = vadd.f32 %v1839, %v2131
        %v2207 = vadd.f32 %v1841, %v2135
        %v2208 = vadd.f32 %v2051, %v2139
        %v2209 = vadd.f32 %v1845, %v2131
        %v2210 = vadd.f32 %v1847, %v2135
        %v2211 = vadd.f32 %v2056, %v2139
        %v2212 = vadd.f32 %v1849, %v2131
        %v2213 = vadd.f32 %v1851, %v2135
        %v2214 = vadd.f32 %v2059, %v2139
        %v2215 = vadd.f32 %v1855, %v2131
        %v2216 = vadd.f32 %v1857, %v2135
        %v2217 = vadd.f32 %v2064, %v2139
        %v2218 = vadd.f32 %v1859, %v2131
        %v2219 = vadd.f32 %v1861, %v2135
        %v2220 = vadd.f32 %v2067, %v2139
        %v2221 = vadd.f32 %v1865, %v2131
        %v2222 = vadd.f32 %v1867, %v2135
        %v2223 = vadd.f32 %v2072, %v2139
        %v2224 = vadd.f32 %v1869, %v2131
        %v2225 = vadd.f32 %v1871, %v2135
        %v2226 = vadd.f32 %v2075, %v2139
        %v2227 = vadd.f32 %v1875, %v2131
        %v2228 = vadd.f32 %v1877, %v2135
        %v2229 = vadd.f32 %v2080, %v2139
        %v2230 = vadd.f32 %v1879, %v2131
        %v2231 = vadd.f32 %v1881, %v2135
        %v2232 = vadd.f32 %v2083, %v2139
        %v2233 = vadd.f32 %v1885, %v2131
        %v2234 = vadd.f32 %v1887, %v2135
        %v2235 = vadd.f32 %v2088, %v2139
        %v2236 = vadd.f32 %v1889, %v2131
        %v2237 = vadd.f32 %v1891, %v2135
        %v2238 = vadd.f32 %v2091, %v2139
        %v2239 = vadd.f32 %v1895, %v2131
        %v2240 = vadd.f32 %v1897, %v2135
        %v2241 = vadd.f32 %v2096, %v2139
        %v2242 = vadd.f32 %v1899, %v2131
        %v2243 = vadd.f32 %v1901, %v2135
        %v2244 = vadd.f32 %v2099, %v2139
        %v2245 = vadd.f32 %v1905, %v2131
        %v2246 = vadd.f32 %v1907, %v2135
        %v2247 = vadd.f32 %v2104, %v2139
        %v2248 = vadd.f32 %v1909, %v2131
        %v2249 = vadd.f32 %v1911, %v2135
        %v2250 = vadd.f32 %v2107, %v2139
        %v2251 = vadd.f32 %v1915, %v2131
        %v2252 = vadd.f32 %v1917, %v2135
        %v2253 = vadd.f32 %v2112, %v2139
        %v2254 = vadd.f32 %v1919, %v2131
        %v2255 = vadd.f32 %v1921, %v2135
        %v2256 = vadd.f32 %v2115, %v2139
        %v2257 = vadd.f32 %v1925, %v2131
        %v2258 = vadd.f32 %v1927, %v2135
        %v2259 = vadd.f32 %v2120, %v2139
        %v2260 = vadd.f32 %v1929, %v2131
        %v2261 = vadd.f32 %v1931, %v2135
        %v2262 = vadd.f32 %v2123, %v2139
        %v2263 = vmax.f32 %v2143, %v2144
        %v2264 = vsel %vm855, %v2145, -inf
        %v2265 = vmax.f32 %v2263, %v2264
        %2266 = vmax.xlane.f32.xlu0 %v2265
        %v2267 = vpop.xlane.xlu0 %2266
        %v2268 = vmax.f32 %v2146, %v2147
        %v2269 = vsel %vm855, %v2148, -inf
        %v2270 = vmax.f32 %v2268, %v2269
        %2271 = vmax.xlane.f32.xlu0 %v2270
        %v2272 = vpop.xlane.xlu0 %2271
        %v2273 = vmax.f32 %v2149, %v2150
        %v2274 = vsel %vm855, %v2151, -inf
        %v2275 = vmax.f32 %v2273, %v2274
        %2276 = vmax.xlane.f32.xlu0 %v2275
        %v2277 = vpop.xlane.xlu0 %2276
        %v2278 = vmax.f32 %v2152, %v2153
        %v2279 = vsel %vm855, %v2154, -inf
        %v2280 = vmax.f32 %v2278, %v2279
        %2281 = vmax.xlane.f32.xlu0 %v2280
        %v2282 = vpop.xlane.xlu0 %2281
        %v2283 = vmax.f32 %v2155, %v2156
        %v2284 = vsel %vm855, %v2157, -inf
        %v2285 = vmax.f32 %v2283, %v2284
        %2286 = vmax.xlane.f32.xlu0 %v2285
        %v2287 = vpop.xlane.xlu0 %2286
        %v2288 = vmax.f32 %v2158, %v2159
        %v2289 = vsel %vm855, %v2160, -inf
        %v2290 = vmax.f32 %v2288, %v2289
        %2291 = vmax.xlane.f32.xlu0 %v2290
        %v2292 = vpop.xlane.xlu0 %2291
        %v2293 = vmax.f32 %v2161, %v2162
        %v2294 = vsel %vm855, %v2163, -inf
        %v2295 = vmax.f32 %v2293, %v2294
        %2296 = vmax.xlane.f32.xlu0 %v2295
        %v2297 = vpop.xlane.xlu0 %2296
        %v2298 = vmax.f32 %v2164, %v2165
        %v2299 = vsel %vm855, %v2166, -inf
        %v2300 = vmax.f32 %v2298, %v2299
        %2301 = vmax.xlane.f32.xlu0 %v2300
        %v2302 = vpop.xlane.xlu0 %2301
        %v2303 = vmax.f32 %v2167, %v2168
        %v2304 = vsel %vm855, %v2169, -inf
        %v2305 = vmax.f32 %v2303, %v2304
        %2306 = vmax.xlane.f32.xlu0 %v2305
        %v2307 = vpop.xlane.xlu0 %2306
        %v2308 = vmax.f32 %v2170, %v2171
        %v2309 = vsel %vm855, %v2172, -inf
        %v2310 = vmax.f32 %v2308, %v2309
        %2311 = vmax.xlane.f32.xlu0 %v2310
        %v2312 = vpop.xlane.xlu0 %2311
        %v2313 = vmax.f32 %v2173, %v2174
        %v2314 = vsel %vm855, %v2175, -inf
        %v2315 = vmax.f32 %v2313, %v2314
        %2316 = vmax.xlane.f32.xlu0 %v2315
        %v2317 = vpop.xlane.xlu0 %2316
        %v2318 = vmax.f32 %v2176, %v2177
        %v2319 = vsel %vm855, %v2178, -inf
        %v2320 = vmax.f32 %v2318, %v2319
        %2321 = vmax.xlane.f32.xlu0 %v2320
        %v2322 = vpop.xlane.xlu0 %2321
        %v2323 = vmax.f32 %v2179, %v2180
        %v2324 = vsel %vm855, %v2181, -inf
        %v2325 = vmax.f32 %v2323, %v2324
        %2326 = vmax.xlane.f32.xlu0 %v2325
        %v2327 = vpop.xlane.xlu0 %2326
        %v2328 = vmax.f32 %v2182, %v2183
        %v2329 = vsel %vm855, %v2184, -inf
        %v2330 = vmax.f32 %v2328, %v2329
        %2331 = vmax.xlane.f32.xlu0 %v2330
        %v2332 = vpop.xlane.xlu0 %2331
        %v2333 = vmax.f32 %v2185, %v2186
        %v2334 = vsel %vm855, %v2187, -inf
        %v2335 = vmax.f32 %v2333, %v2334
        %2336 = vmax.xlane.f32.xlu0 %v2335
        %v2337 = vpop.xlane.xlu0 %2336
        %v2338 = vmax.f32 %v2188, %v2189
        %v2339 = vsel %vm855, %v2190, -inf
        %v2340 = vmax.f32 %v2338, %v2339
        %2341 = vmax.xlane.f32.xlu0 %v2340
        %v2342 = vpop.xlane.xlu0 %2341
        %v2343 = vmax.f32 %v2191, %v2192
        %v2344 = vsel %vm855, %v2193, -inf
        %v2345 = vmax.f32 %v2343, %v2344
        %2346 = vmax.xlane.f32.xlu0 %v2345
        %v2347 = vpop.xlane.xlu0 %2346
        %v2348 = vmax.f32 %v2194, %v2195
        %v2349 = vsel %vm855, %v2196, -inf
        %v2350 = vmax.f32 %v2348, %v2349
        %2351 = vmax.xlane.f32.xlu0 %v2350
        %v2352 = vpop.xlane.xlu0 %2351
        %v2353 = vmax.f32 %v2197, %v2198
        %v2354 = vsel %vm855, %v2199, -inf
        %v2355 = vmax.f32 %v2353, %v2354
        %2356 = vmax.xlane.f32.xlu0 %v2355
        %v2357 = vpop.xlane.xlu0 %2356
        %v2358 = vmax.f32 %v2200, %v2201
        %v2359 = vsel %vm855, %v2202, -inf
        %v2360 = vmax.f32 %v2358, %v2359
        %2361 = vmax.xlane.f32.xlu0 %v2360
        %v2362 = vpop.xlane.xlu0 %2361
        %v2363 = vmax.f32 %v2203, %v2204
        %v2364 = vsel %vm855, %v2205, -inf
        %v2365 = vmax.f32 %v2363, %v2364
        %2366 = vmax.xlane.f32.xlu0 %v2365
        %v2367 = vpop.xlane.xlu0 %2366
        %v2368 = vmax.f32 %v2206, %v2207
        %v2369 = vsel %vm855, %v2208, -inf
        %v2370 = vmax.f32 %v2368, %v2369
        %2371 = vmax.xlane.f32.xlu0 %v2370
        %v2372 = vpop.xlane.xlu0 %2371
        %v2373 = vmax.f32 %v2209, %v2210
        %v2374 = vsel %vm855, %v2211, -inf
        %v2375 = vmax.f32 %v2373, %v2374
        %2376 = vmax.xlane.f32.xlu0 %v2375
        %v2377 = vpop.xlane.xlu0 %2376
        %v2378 = vmax.f32 %v2212, %v2213
        %v2379 = vsel %vm855, %v2214, -inf
        %v2380 = vmax.f32 %v2378, %v2379
        %2381 = vmax.xlane.f32.xlu0 %v2380
        %v2382 = vpop.xlane.xlu0 %2381
        %v2383 = vmax.f32 %v2215, %v2216
        %v2384 = vsel %vm855, %v2217, -inf
        %v2385 = vmax.f32 %v2383, %v2384
        %2386 = vmax.xlane.f32.xlu0 %v2385
        %v2387 = vpop.xlane.xlu0 %2386
        %v2388 = vmax.f32 %v2218, %v2219
        %v2389 = vsel %vm855, %v2220, -inf
        %v2390 = vmax.f32 %v2388, %v2389
        %2391 = vmax.xlane.f32.xlu0 %v2390
        %v2392 = vpop.xlane.xlu0 %2391
        %v2393 = vmax.f32 %v2221, %v2222
        %v2394 = vsel %vm855, %v2223, -inf
        %v2395 = vmax.f32 %v2393, %v2394
        %2396 = vmax.xlane.f32.xlu0 %v2395
        %v2397 = vpop.xlane.xlu0 %2396
        %v2398 = vmax.f32 %v2224, %v2225
        %v2399 = vsel %vm855, %v2226, -inf
        %v2400 = vmax.f32 %v2398, %v2399
        %2401 = vmax.xlane.f32.xlu0 %v2400
        %v2402 = vpop.xlane.xlu0 %2401
        %v2403 = vmax.f32 %v2227, %v2228
        %v2404 = vsel %vm855, %v2229, -inf
        %v2405 = vmax.f32 %v2403, %v2404
        %2406 = vmax.xlane.f32.xlu0 %v2405
        %v2407 = vpop.xlane.xlu0 %2406
        %v2408 = vmax.f32 %v2230, %v2231
        %v2409 = vsel %vm855, %v2232, -inf
        %v2410 = vmax.f32 %v2408, %v2409
        %2411 = vmax.xlane.f32.xlu0 %v2410
        %v2412 = vpop.xlane.xlu0 %2411
        %v2413 = vmax.f32 %v2233, %v2234
        %v2414 = vsel %vm855, %v2235, -inf
        %v2415 = vmax.f32 %v2413, %v2414
        %2416 = vmax.xlane.f32.xlu0 %v2415
        %v2417 = vpop.xlane.xlu0 %2416
        %v2418 = vmax.f32 %v2236, %v2237
        %v2419 = vsel %vm855, %v2238, -inf
        %v2420 = vmax.f32 %v2418, %v2419
        %2421 = vmax.xlane.f32.xlu0 %v2420
        %v2422 = vpop.xlane.xlu0 %2421
        %v2423 = vmax.f32 %v2239, %v2240
        %v2424 = vsel %vm855, %v2241, -inf
        %v2425 = vmax.f32 %v2423, %v2424
        %2426 = vmax.xlane.f32.xlu0 %v2425
        %v2427 = vpop.xlane.xlu0 %2426
        %v2428 = vmax.f32 %v2242, %v2243
        %v2429 = vsel %vm855, %v2244, -inf
        %v2430 = vmax.f32 %v2428, %v2429
        %2431 = vmax.xlane.f32.xlu0 %v2430
        %v2432 = vpop.xlane.xlu0 %2431
        %v2433 = vmax.f32 %v2245, %v2246
        %v2434 = vsel %vm855, %v2247, -inf
        %v2435 = vmax.f32 %v2433, %v2434
        %2436 = vmax.xlane.f32.xlu0 %v2435
        %v2437 = vpop.xlane.xlu0 %2436
        %v2438 = vmax.f32 %v2248, %v2249
        %v2439 = vsel %vm855, %v2250, -inf
        %v2440 = vmax.f32 %v2438, %v2439
        %2441 = vmax.xlane.f32.xlu0 %v2440
        %v2442 = vpop.xlane.xlu0 %2441
        %v2443 = vmax.f32 %v2251, %v2252
        %v2444 = vsel %vm855, %v2253, -inf
        %v2445 = vmax.f32 %v2443, %v2444
        %2446 = vmax.xlane.f32.xlu0 %v2445
        %v2447 = vpop.xlane.xlu0 %2446
        %v2448 = vmax.f32 %v2254, %v2255
        %v2449 = vsel %vm855, %v2256, -inf
        %v2450 = vmax.f32 %v2448, %v2449
        %2451 = vmax.xlane.f32.xlu0 %v2450
        %v2452 = vpop.xlane.xlu0 %2451
        %v2453 = vmax.f32 %v2257, %v2258
        %v2454 = vsel %vm855, %v2259, -inf
        %v2455 = vmax.f32 %v2453, %v2454
        %2456 = vmax.xlane.f32.xlu0 %v2455
        %v2457 = vpop.xlane.xlu0 %2456
        %v2458 = vmax.f32 %v2260, %v2261
        %v2459 = vsel %vm855, %v2262, -inf
        %v2460 = vmax.f32 %v2458, %v2459
        %2461 = vmax.xlane.f32.xlu0 %v2460
        %v2462 = vpop.xlane.xlu0 %2461
        %v2463 = vsub.f32 %v2143, %v2267
        %v2464 = vsub.f32 %v2144, %v2267
        %v2465 = vsub.f32 %v2145, %v2267
        %v2466 = vsub.f32 %v2146, %v2272
        %v2467 = vsub.f32 %v2147, %v2272
        %v2468 = vsub.f32 %v2148, %v2272
        %v2469 = vsub.f32 %v2149, %v2277
        %v2470 = vsub.f32 %v2150, %v2277
        %v2471 = vsub.f32 %v2151, %v2277
        %v2472 = vsub.f32 %v2152, %v2282
        %v2473 = vsub.f32 %v2153, %v2282
        %v2474 = vsub.f32 %v2154, %v2282
        %v2475 = vsub.f32 %v2155, %v2287
        %v2476 = vsub.f32 %v2156, %v2287
        %v2477 = vsub.f32 %v2157, %v2287
        %v2478 = vsub.f32 %v2158, %v2292
        %v2479 = vsub.f32 %v2159, %v2292
        %v2480 = vsub.f32 %v2160, %v2292
        %v2481 = vsub.f32 %v2161, %v2297
        %v2482 = vsub.f32 %v2162, %v2297
        %v2483 = vsub.f32 %v2163, %v2297
        %v2484 = vsub.f32 %v2164, %v2302
        %v2485 = vsub.f32 %v2165, %v2302
        %v2486 = vsub.f32 %v2166, %v2302
        %v2487 = vsub.f32 %v2167, %v2307
        %v2488 = vsub.f32 %v2168, %v2307
        %v2489 = vsub.f32 %v2169, %v2307
        %v2490 = vsub.f32 %v2170, %v2312
        %v2491 = vsub.f32 %v2171, %v2312
        %v2492 = vsub.f32 %v2172, %v2312
        %v2493 = vsub.f32 %v2173, %v2317
        %v2494 = vsub.f32 %v2174, %v2317
        %v2495 = vsub.f32 %v2175, %v2317
        %v2496 = vsub.f32 %v2176, %v2322
        %v2497 = vsub.f32 %v2177, %v2322
        %v2498 = vsub.f32 %v2178, %v2322
        %v2499 = vsub.f32 %v2179, %v2327
        %v2500 = vsub.f32 %v2180, %v2327
        %v2501 = vsub.f32 %v2181, %v2327
        %v2502 = vsub.f32 %v2182, %v2332
        %v2503 = vsub.f32 %v2183, %v2332
        %v2504 = vsub.f32 %v2184, %v2332
        %v2505 = vsub.f32 %v2185, %v2337
        %v2506 = vsub.f32 %v2186, %v2337
        %v2507 = vsub.f32 %v2187, %v2337
        %v2508 = vsub.f32 %v2188, %v2342
        %v2509 = vsub.f32 %v2189, %v2342
        %v2510 = vsub.f32 %v2190, %v2342
        %v2511 = vsub.f32 %v2191, %v2347
        %v2512 = vsub.f32 %v2192, %v2347
        %v2513 = vsub.f32 %v2193, %v2347
        %v2514 = vsub.f32 %v2194, %v2352
        %v2515 = vsub.f32 %v2195, %v2352
        %v2516 = vsub.f32 %v2196, %v2352
        %v2517 = vsub.f32 %v2197, %v2357
        %v2518 = vsub.f32 %v2198, %v2357
        %v2519 = vsub.f32 %v2199, %v2357
        %v2520 = vsub.f32 %v2200, %v2362
        %v2521 = vsub.f32 %v2201, %v2362
        %v2522 = vsub.f32 %v2202, %v2362
        %v2523 = vsub.f32 %v2203, %v2367
        %v2524 = vsub.f32 %v2204, %v2367
        %v2525 = vsub.f32 %v2205, %v2367
        %v2526 = vsub.f32 %v2206, %v2372
        %v2527 = vsub.f32 %v2207, %v2372
        %v2528 = vsub.f32 %v2208, %v2372
        %v2529 = vsub.f32 %v2209, %v2377
        %v2530 = vsub.f32 %v2210, %v2377
        %v2531 = vsub.f32 %v2211, %v2377
        %v2532 = vsub.f32 %v2212, %v2382
        %v2533 = vsub.f32 %v2213, %v2382
        %v2534 = vsub.f32 %v2214, %v2382
        %v2535 = vsub.f32 %v2215, %v2387
        %v2536 = vsub.f32 %v2216, %v2387
        %v2537 = vsub.f32 %v2217, %v2387
        %v2538 = vsub.f32 %v2218, %v2392
        %v2539 = vsub.f32 %v2219, %v2392
        %v2540 = vsub.f32 %v2220, %v2392
        %v2541 = vsub.f32 %v2221, %v2397
        %v2542 = vsub.f32 %v2222, %v2397
        %v2543 = vsub.f32 %v2223, %v2397
        %v2544 = vsub.f32 %v2224, %v2402
        %v2545 = vsub.f32 %v2225, %v2402
        %v2546 = vsub.f32 %v2226, %v2402
        %v2547 = vsub.f32 %v2227, %v2407
        %v2548 = vsub.f32 %v2228, %v2407
        %v2549 = vsub.f32 %v2229, %v2407
        %v2550 = vsub.f32 %v2230, %v2412
        %v2551 = vsub.f32 %v2231, %v2412
        %v2552 = vsub.f32 %v2232, %v2412
        %v2553 = vsub.f32 %v2233, %v2417
        %v2554 = vsub.f32 %v2234, %v2417
        %v2555 = vsub.f32 %v2235, %v2417
        %v2556 = vsub.f32 %v2236, %v2422
        %v2557 = vsub.f32 %v2237, %v2422
        %v2558 = vsub.f32 %v2238, %v2422
        %v2559 = vsub.f32 %v2239, %v2427
        %v2560 = vsub.f32 %v2240, %v2427
        %v2561 = vsub.f32 %v2241, %v2427
        %v2562 = vsub.f32 %v2242, %v2432
        %v2563 = vsub.f32 %v2243, %v2432
        %v2564 = vsub.f32 %v2244, %v2432
        %v2565 = vsub.f32 %v2245, %v2437
        %v2566 = vsub.f32 %v2246, %v2437
        %v2567 = vsub.f32 %v2247, %v2437
        %v2568 = vsub.f32 %v2248, %v2442
        %v2569 = vsub.f32 %v2249, %v2442
        %v2570 = vsub.f32 %v2250, %v2442
        %v2571 = vsub.f32 %v2251, %v2447
        %v2572 = vsub.f32 %v2252, %v2447
        %v2573 = vsub.f32 %v2253, %v2447
        %v2574 = vsub.f32 %v2254, %v2452
        %v2575 = vsub.f32 %v2255, %v2452
        %v2576 = vsub.f32 %v2256, %v2452
        %v2577 = vsub.f32 %v2257, %v2457
        %v2578 = vsub.f32 %v2258, %v2457
        %v2579 = vsub.f32 %v2259, %v2457
        %v2580 = vsub.f32 %v2260, %v2462
        %v2581 = vsub.f32 %v2261, %v2462
        %v2582 = vsub.f32 %v2262, %v2462
        %v2583 = vmul.f32 %v2463, 1.442695
        %v2584 = vpow.pop %v2583
        %v2585 = vmul.f32 %v2464, 1.442695
        %v2586 = vpow.pop %v2585
        %v2587 = vmul.f32 %v2465, 1.442695
        %v2588 = vpow.pop %v2587
        %v2589 = vmul.f32 %v2466, 1.442695
        %v2590 = vpow.pop %v2589
        %v2591 = vmul.f32 %v2467, 1.442695
        %v2592 = vpow.pop %v2591
        %v2593 = vmul.f32 %v2468, 1.442695
        %v2594 = vpow.pop %v2593
        %v2595 = vmul.f32 %v2469, 1.442695
        %v2596 = vpow.pop %v2595
        %v2597 = vmul.f32 %v2470, 1.442695
        %v2598 = vpow.pop %v2597
        %v2599 = vmul.f32 %v2471, 1.442695
        %v2600 = vpow.pop %v2599
        %v2601 = vmul.f32 %v2472, 1.442695
        %v2602 = vpow.pop %v2601
        %v2603 = vmul.f32 %v2473, 1.442695
        %v2604 = vpow.pop %v2603
        %v2605 = vmul.f32 %v2474, 1.442695
        %v2606 = vpow.pop %v2605
        %v2607 = vmul.f32 %v2475, 1.442695
        %v2608 = vpow.pop %v2607
        %v2609 = vmul.f32 %v2476, 1.442695
        %v2610 = vpow.pop %v2609
        %v2611 = vmul.f32 %v2477, 1.442695
        %v2612 = vpow.pop %v2611
        %v2613 = vmul.f32 %v2478, 1.442695
        %v2614 = vpow.pop %v2613
        %v2615 = vmul.f32 %v2479, 1.442695
        %v2616 = vpow.pop %v2615
        %v2617 = vmul.f32 %v2480, 1.442695
        %v2618 = vpow.pop %v2617
        %v2619 = vmul.f32 %v2481, 1.442695
        %v2620 = vpow.pop %v2619
        %v2621 = vmul.f32 %v2482, 1.442695
        %v2622 = vpow.pop %v2621
        %v2623 = vmul.f32 %v2483, 1.442695
        %v2624 = vpow.pop %v2623
        %v2625 = vmul.f32 %v2484, 1.442695
        %v2626 = vpow.pop %v2625
        %v2627 = vmul.f32 %v2485, 1.442695
        %v2628 = vpow.pop %v2627
        %v2629 = vmul.f32 %v2486, 1.442695
        %v2630 = vpow.pop %v2629
        %v2631 = vmul.f32 %v2487, 1.442695
        %v2632 = vpow.pop %v2631
        %v2633 = vmul.f32 %v2488, 1.442695
        %v2634 = vpow.pop %v2633
        %v2635 = vmul.f32 %v2489, 1.442695
        %v2636 = vpow.pop %v2635
        %v2637 = vmul.f32 %v2490, 1.442695
        %v2638 = vpow.pop %v2637
        %v2639 = vmul.f32 %v2491, 1.442695
        %v2640 = vpow.pop %v2639
        %v2641 = vmul.f32 %v2492, 1.442695
        %v2642 = vpow.pop %v2641
        %v2643 = vmul.f32 %v2493, 1.442695
        %v2644 = vpow.pop %v2643
        %v2645 = vmul.f32 %v2494, 1.442695
        %v2646 = vpow.pop %v2645
        %v2647 = vmul.f32 %v2495, 1.442695
        %v2648 = vpow.pop %v2647
        %v2649 = vmul.f32 %v2496, 1.442695
        %v2650 = vpow.pop %v2649
        %v2651 = vmul.f32 %v2497, 1.442695
        %v2652 = vpow.pop %v2651
        %v2653 = vmul.f32 %v2498, 1.442695
        %v2654 = vpow.pop %v2653
        %v2655 = vmul.f32 %v2499, 1.442695
        %v2656 = vpow.pop %v2655
        %v2657 = vmul.f32 %v2500, 1.442695
        %v2658 = vpow.pop %v2657
        %v2659 = vmul.f32 %v2501, 1.442695
        %v2660 = vpow.pop %v2659
        %v2661 = vmul.f32 %v2502, 1.442695
        %v2662 = vpow.pop %v2661
        %v2663 = vmul.f32 %v2503, 1.442695
        %v2664 = vpow.pop %v2663
        %v2665 = vmul.f32 %v2504, 1.442695
        %v2666 = vpow.pop %v2665
        %v2667 = vmul.f32 %v2505, 1.442695
        %v2668 = vpow.pop %v2667
        %v2669 = vmul.f32 %v2506, 1.442695
        %v2670 = vpow.pop %v2669
        %v2671 = vmul.f32 %v2507, 1.442695
        %v2672 = vpow.pop %v2671
        %v2673 = vmul.f32 %v2508, 1.442695
        %v2674 = vpow.pop %v2673
        %v2675 = vmul.f32 %v2509, 1.442695
        %v2676 = vpow.pop %v2675
        %v2677 = vmul.f32 %v2510, 1.442695
        %v2678 = vpow.pop %v2677
        %v2679 = vmul.f32 %v2511, 1.442695
        %v2680 = vpow.pop %v2679
        %v2681 = vmul.f32 %v2512, 1.442695
        %v2682 = vpow.pop %v2681
        %v2683 = vmul.f32 %v2513, 1.442695
        %v2684 = vpow.pop %v2683
        %v2685 = vmul.f32 %v2514, 1.442695
        %v2686 = vpow.pop %v2685
        %v2687 = vmul.f32 %v2515, 1.442695
        %v2688 = vpow.pop %v2687
        %v2689 = vmul.f32 %v2516, 1.442695
        %v2690 = vpow.pop %v2689
        %v2691 = vmul.f32 %v2517, 1.442695
        %v2692 = vpow.pop %v2691
        %v2693 = vmul.f32 %v2518, 1.442695
        %v2694 = vpow.pop %v2693
        %v2695 = vmul.f32 %v2519, 1.442695
        %v2696 = vpow.pop %v2695
        %v2697 = vmul.f32 %v2520, 1.442695
        %v2698 = vpow.pop %v2697
        %v2699 = vmul.f32 %v2521, 1.442695
        %v2700 = vpow.pop %v2699
        %v2701 = vmul.f32 %v2522, 1.442695
        %v2702 = vpow.pop %v2701
        %v2703 = vmul.f32 %v2523, 1.442695
        %v2704 = vpow.pop %v2703
        %v2705 = vmul.f32 %v2524, 1.442695
        %v2706 = vpow.pop %v2705
        %v2707 = vmul.f32 %v2525, 1.442695
        %v2708 = vpow.pop %v2707
        %v2709 = vmul.f32 %v2526, 1.442695
        %v2710 = vpow.pop %v2709
        %v2711 = vmul.f32 %v2527, 1.442695
        %v2712 = vpow.pop %v2711
        %v2713 = vmul.f32 %v2528, 1.442695
        %v2714 = vpow.pop %v2713
        %v2715 = vmul.f32 %v2529, 1.442695
        %v2716 = vpow.pop %v2715
        %v2717 = vmul.f32 %v2530, 1.442695
        %v2718 = vpow.pop %v2717
        %v2719 = vmul.f32 %v2531, 1.442695
        %v2720 = vpow.pop %v2719
        %v2721 = vmul.f32 %v2532, 1.442695
        %v2722 = vpow.pop %v2721
        %v2723 = vmul.f32 %v2533, 1.442695
        %v2724 = vpow.pop %v2723
        %v2725 = vmul.f32 %v2534, 1.442695
        %v2726 = vpow.pop %v2725
        %v2727 = vmul.f32 %v2535, 1.442695
        %v2728 = vpow.pop %v2727
        %v2729 = vmul.f32 %v2536, 1.442695
        %v2730 = vpow.pop %v2729
        %v2731 = vmul.f32 %v2537, 1.442695
        %v2732 = vpow.pop %v2731
        %v2733 = vmul.f32 %v2538, 1.442695
        %v2734 = vpow.pop %v2733
        %v2735 = vmul.f32 %v2539, 1.442695
        %v2736 = vpow.pop %v2735
        %v2737 = vmul.f32 %v2540, 1.442695
        %v2738 = vpow.pop %v2737
        %v2739 = vmul.f32 %v2541, 1.442695
        %v2740 = vpow.pop %v2739
        %v2741 = vmul.f32 %v2542, 1.442695
        %v2742 = vpow.pop %v2741
        %v2743 = vmul.f32 %v2543, 1.442695
        %v2744 = vpow.pop %v2743
        %v2745 = vmul.f32 %v2544, 1.442695
        %v2746 = vpow.pop %v2745
        %v2747 = vmul.f32 %v2545, 1.442695
        %v2748 = vpow.pop %v2747
        %v2749 = vmul.f32 %v2546, 1.442695
        %v2750 = vpow.pop %v2749
        %v2751 = vmul.f32 %v2547, 1.442695
        %v2752 = vpow.pop %v2751
        %v2753 = vmul.f32 %v2548, 1.442695
        %v2754 = vpow.pop %v2753
        %v2755 = vmul.f32 %v2549, 1.442695
        %v2756 = vpow.pop %v2755
        %v2757 = vmul.f32 %v2550, 1.442695
        %v2758 = vpow.pop %v2757
        %v2759 = vmul.f32 %v2551, 1.442695
        %v2760 = vpow.pop %v2759
        %v2761 = vmul.f32 %v2552, 1.442695
        %v2762 = vpow.pop %v2761
        %v2763 = vmul.f32 %v2553, 1.442695
        %v2764 = vpow.pop %v2763
        %v2765 = vmul.f32 %v2554, 1.442695
        %v2766 = vpow.pop %v2765
        %v2767 = vmul.f32 %v2555, 1.442695
        %v2768 = vpow.pop %v2767
        %v2769 = vmul.f32 %v2556, 1.442695
        %v2770 = vpow.pop %v2769
        %v2771 = vmul.f32 %v2557, 1.442695
        %v2772 = vpow.pop %v2771
        %v2773 = vmul.f32 %v2558, 1.442695
        %v2774 = vpow.pop %v2773
        %v2775 = vmul.f32 %v2559, 1.442695
        %v2776 = vpow.pop %v2775
        %v2777 = vmul.f32 %v2560, 1.442695
        %v2778 = vpow.pop %v2777
        %v2779 = vmul.f32 %v2561, 1.442695
        %v2780 = vpow.pop %v2779
        %v2781 = vmul.f32 %v2562, 1.442695
        %v2782 = vpow.pop %v2781
        %v2783 = vmul.f32 %v2563, 1.442695
        %v2784 = vpow.pop %v2783
        %v2785 = vmul.f32 %v2564, 1.442695
        %v2786 = vpow.pop %v2785
        %v2787 = vmul.f32 %v2565, 1.442695
        %v2788 = vpow.pop %v2787
        %v2789 = vmul.f32 %v2566, 1.442695
        %v2790 = vpow.pop %v2789
        %v2791 = vmul.f32 %v2567, 1.442695
        %v2792 = vpow.pop %v2791
        %v2793 = vmul.f32 %v2568, 1.442695
        %v2794 = vpow.pop %v2793
        %v2795 = vmul.f32 %v2569, 1.442695
        %v2796 = vpow.pop %v2795
        %v2797 = vmul.f32 %v2570, 1.442695
        %v2798 = vpow.pop %v2797
        %v2799 = vmul.f32 %v2571, 1.442695
        %v2800 = vpow.pop %v2799
        %v2801 = vmul.f32 %v2572, 1.442695
        %v2802 = vpow.pop %v2801
        %v2803 = vmul.f32 %v2573, 1.442695
        %v2804 = vpow.pop %v2803
        %v2805 = vmul.f32 %v2574, 1.442695
        %v2806 = vpow.pop %v2805
        %v2807 = vmul.f32 %v2575, 1.442695
        %v2808 = vpow.pop %v2807
        %v2809 = vmul.f32 %v2576, 1.442695
        %v2810 = vpow.pop %v2809
        %v2811 = vmul.f32 %v2577, 1.442695
        %v2812 = vpow.pop %v2811
        %v2813 = vmul.f32 %v2578, 1.442695
        %v2814 = vpow.pop %v2813
        %v2815 = vmul.f32 %v2579, 1.442695
        %v2816 = vpow.pop %v2815
        %v2817 = vmul.f32 %v2580, 1.442695
        %v2818 = vpow.pop %v2817
        %v2819 = vmul.f32 %v2581, 1.442695
        %v2820 = vpow.pop %v2819
        %v2821 = vmul.f32 %v2582, 1.442695
        %v2822 = vpow.pop %v2821
        %v2823 = vadd.f32 %v2584, %v2586
        %v2824 = vsel %vm855, %v2588, 0.0
        %v2825 = vadd.f32 %v2823, %v2824
        %2826 = vadd.xlane.f32.xlu0 %v2825
        %v2827 = vpop.xlane.xlu0 %2826
        %v2828 = vadd.f32 %v2590, %v2592
        %v2829 = vsel %vm855, %v2594, 0.0
        %v2830 = vadd.f32 %v2828, %v2829
        %2831 = vadd.xlane.f32.xlu0 %v2830
        %v2832 = vpop.xlane.xlu0 %2831
        %v2833 = vadd.f32 %v2596, %v2598
        %v2834 = vsel %vm855, %v2600, 0.0
        %v2835 = vadd.f32 %v2833, %v2834
        %2836 = vadd.xlane.f32.xlu0 %v2835
        %v2837 = vpop.xlane.xlu0 %2836
        %v2838 = vadd.f32 %v2602, %v2604
        %v2839 = vsel %vm855, %v2606, 0.0
        %v2840 = vadd.f32 %v2838, %v2839
        %2841 = vadd.xlane.f32.xlu0 %v2840
        %v2842 = vpop.xlane.xlu0 %2841
        %v2843 = vadd.f32 %v2608, %v2610
        %v2844 = vsel %vm855, %v2612, 0.0
        %v2845 = vadd.f32 %v2843, %v2844
        %2846 = vadd.xlane.f32.xlu0 %v2845
        %v2847 = vpop.xlane.xlu0 %2846
        %v2848 = vadd.f32 %v2614, %v2616
        %v2849 = vsel %vm855, %v2618, 0.0
        %v2850 = vadd.f32 %v2848, %v2849
        %2851 = vadd.xlane.f32.xlu0 %v2850
        %v2852 = vpop.xlane.xlu0 %2851
        %v2853 = vadd.f32 %v2620, %v2622
        %v2854 = vsel %vm855, %v2624, 0.0
        %v2855 = vadd.f32 %v2853, %v2854
        %2856 = vadd.xlane.f32.xlu0 %v2855
        %v2857 = vpop.xlane.xlu0 %2856
        %v2858 = vadd.f32 %v2626, %v2628
        %v2859 = vsel %vm855, %v2630, 0.0
        %v2860 = vadd.f32 %v2858, %v2859
        %2861 = vadd.xlane.f32.xlu0 %v2860
        %v2862 = vpop.xlane.xlu0 %2861
        %v2863 = vadd.f32 %v2632, %v2634
        %v2864 = vsel %vm855, %v2636, 0.0
        %v2865 = vadd.f32 %v2863, %v2864
        %2866 = vadd.xlane.f32.xlu0 %v2865
        %v2867 = vpop.xlane.xlu0 %2866
        %v2868 = vadd.f32 %v2638, %v2640
        %v2869 = vsel %vm855, %v2642, 0.0
        %v2870 = vadd.f32 %v2868, %v2869
        %2871 = vadd.xlane.f32.xlu0 %v2870
        %v2872 = vpop.xlane.xlu0 %2871
        %v2873 = vadd.f32 %v2644, %v2646
        %v2874 = vsel %vm855, %v2648, 0.0
        %v2875 = vadd.f32 %v2873, %v2874
        %2876 = vadd.xlane.f32.xlu0 %v2875
        %v2877 = vpop.xlane.xlu0 %2876
        %v2878 = vadd.f32 %v2650, %v2652
        %v2879 = vsel %vm855, %v2654, 0.0
        %v2880 = vadd.f32 %v2878, %v2879
        %2881 = vadd.xlane.f32.xlu0 %v2880
        %v2882 = vpop.xlane.xlu0 %2881
        %v2883 = vadd.f32 %v2656, %v2658
        %v2884 = vsel %vm855, %v2660, 0.0
        %v2885 = vadd.f32 %v2883, %v2884
        %2886 = vadd.xlane.f32.xlu0 %v2885
        %v2887 = vpop.xlane.xlu0 %2886
        %v2888 = vadd.f32 %v2662, %v2664
        %v2889 = vsel %vm855, %v2666, 0.0
        %v2890 = vadd.f32 %v2888, %v2889
        %2891 = vadd.xlane.f32.xlu0 %v2890
        %v2892 = vpop.xlane.xlu0 %2891
        %v2893 = vadd.f32 %v2668, %v2670
        %v2894 = vsel %vm855, %v2672, 0.0
        %v2895 = vadd.f32 %v2893, %v2894
        %2896 = vadd.xlane.f32.xlu0 %v2895
        %v2897 = vpop.xlane.xlu0 %2896
        %v2898 = vadd.f32 %v2674, %v2676
        %v2899 = vsel %vm855, %v2678, 0.0
        %v2900 = vadd.f32 %v2898, %v2899
        %2901 = vadd.xlane.f32.xlu0 %v2900
        %v2902 = vpop.xlane.xlu0 %2901
        %v2903 = vadd.f32 %v2680, %v2682
        %v2904 = vsel %vm855, %v2684, 0.0
        %v2905 = vadd.f32 %v2903, %v2904
        %2906 = vadd.xlane.f32.xlu0 %v2905
        %v2907 = vpop.xlane.xlu0 %2906
        %v2908 = vadd.f32 %v2686, %v2688
        %v2909 = vsel %vm855, %v2690, 0.0
        %v2910 = vadd.f32 %v2908, %v2909
        %2911 = vadd.xlane.f32.xlu0 %v2910
        %v2912 = vpop.xlane.xlu0 %2911
        %v2913 = vadd.f32 %v2692, %v2694
        %v2914 = vsel %vm855, %v2696, 0.0
        %v2915 = vadd.f32 %v2913, %v2914
        %2916 = vadd.xlane.f32.xlu0 %v2915
        %v2917 = vpop.xlane.xlu0 %2916
        %v2918 = vadd.f32 %v2698, %v2700
        %v2919 = vsel %vm855, %v2702, 0.0
        %v2920 = vadd.f32 %v2918, %v2919
        %2921 = vadd.xlane.f32.xlu0 %v2920
        %v2922 = vpop.xlane.xlu0 %2921
        %v2923 = vadd.f32 %v2704, %v2706
        %v2924 = vsel %vm855, %v2708, 0.0
        %v2925 = vadd.f32 %v2923, %v2924
        %2926 = vadd.xlane.f32.xlu0 %v2925
        %v2927 = vpop.xlane.xlu0 %2926
        %v2928 = vadd.f32 %v2710, %v2712
        %v2929 = vsel %vm855, %v2714, 0.0
        %v2930 = vadd.f32 %v2928, %v2929
        %2931 = vadd.xlane.f32.xlu0 %v2930
        %v2932 = vpop.xlane.xlu0 %2931
        %v2933 = vadd.f32 %v2716, %v2718
        %v2934 = vsel %vm855, %v2720, 0.0
        %v2935 = vadd.f32 %v2933, %v2934
        %2936 = vadd.xlane.f32.xlu0 %v2935
        %v2937 = vpop.xlane.xlu0 %2936
        %v2938 = vadd.f32 %v2722, %v2724
        %v2939 = vsel %vm855, %v2726, 0.0
        %v2940 = vadd.f32 %v2938, %v2939
        %2941 = vadd.xlane.f32.xlu0 %v2940
        %v2942 = vpop.xlane.xlu0 %2941
        %v2943 = vadd.f32 %v2728, %v2730
        %v2944 = vsel %vm855, %v2732, 0.0
        %v2945 = vadd.f32 %v2943, %v2944
        %2946 = vadd.xlane.f32.xlu0 %v2945
        %v2947 = vpop.xlane.xlu0 %2946
        %v2948 = vadd.f32 %v2734, %v2736
        %v2949 = vsel %vm855, %v2738, 0.0
        %v2950 = vadd.f32 %v2948, %v2949
        %2951 = vadd.xlane.f32.xlu0 %v2950
        %v2952 = vpop.xlane.xlu0 %2951
        %v2953 = vadd.f32 %v2740, %v2742
        %v2954 = vsel %vm855, %v2744, 0.0
        %v2955 = vadd.f32 %v2953, %v2954
        %2956 = vadd.xlane.f32.xlu0 %v2955
        %v2957 = vpop.xlane.xlu0 %2956
        %v2958 = vadd.f32 %v2746, %v2748
        %v2959 = vsel %vm855, %v2750, 0.0
        %v2960 = vadd.f32 %v2958, %v2959
        %2961 = vadd.xlane.f32.xlu0 %v2960
        %v2962 = vpop.xlane.xlu0 %2961
        %v2963 = vadd.f32 %v2752, %v2754
        %v2964 = vsel %vm855, %v2756, 0.0
        %v2965 = vadd.f32 %v2963, %v2964
        %2966 = vadd.xlane.f32.xlu0 %v2965
        %v2967 = vpop.xlane.xlu0 %2966
        %v2968 = vadd.f32 %v2758, %v2760
        %v2969 = vsel %vm855, %v2762, 0.0
        %v2970 = vadd.f32 %v2968, %v2969
        %2971 = vadd.xlane.f32.xlu0 %v2970
        %v2972 = vpop.xlane.xlu0 %2971
        %v2973 = vadd.f32 %v2764, %v2766
        %v2974 = vsel %vm855, %v2768, 0.0
        %v2975 = vadd.f32 %v2973, %v2974
        %2976 = vadd.xlane.f32.xlu0 %v2975
        %v2977 = vpop.xlane.xlu0 %2976
        %v2978 = vadd.f32 %v2770, %v2772
        %v2979 = vsel %vm855, %v2774, 0.0
        %v2980 = vadd.f32 %v2978, %v2979
        %2981 = vadd.xlane.f32.xlu0 %v2980
        %v2982 = vpop.xlane.xlu0 %2981
        %v2983 = vadd.f32 %v2776, %v2778
        %v2984 = vsel %vm855, %v2780, 0.0
        %v2985 = vadd.f32 %v2983, %v2984
        %2986 = vadd.xlane.f32.xlu0 %v2985
        %v2987 = vpop.xlane.xlu0 %2986
        %v2988 = vadd.f32 %v2782, %v2784
        %v2989 = vsel %vm855, %v2786, 0.0
        %v2990 = vadd.f32 %v2988, %v2989
        %2991 = vadd.xlane.f32.xlu0 %v2990
        %v2992 = vpop.xlane.xlu0 %2991
        %v2993 = vadd.f32 %v2788, %v2790
        %v2994 = vsel %vm855, %v2792, 0.0
        %v2995 = vadd.f32 %v2993, %v2994
        %2996 = vadd.xlane.f32.xlu0 %v2995
        %v2997 = vpop.xlane.xlu0 %2996
        %v2998 = vadd.f32 %v2794, %v2796
        %v2999 = vsel %vm855, %v2798, 0.0
        %v3000 = vadd.f32 %v2998, %v2999
        %3001 = vadd.xlane.f32.xlu0 %v3000
        %v3002 = vpop.xlane.xlu0 %3001
        %v3003 = vadd.f32 %v2800, %v2802
        %v3004 = vsel %vm855, %v2804, 0.0
        %v3005 = vadd.f32 %v3003, %v3004
        %3006 = vadd.xlane.f32.xlu0 %v3005
        %v3007 = vpop.xlane.xlu0 %3006
        %v3008 = vadd.f32 %v2806, %v2808
        %v3009 = vsel %vm855, %v2810, 0.0
        %v3010 = vadd.f32 %v3008, %v3009
        %3011 = vadd.xlane.f32.xlu0 %v3010
        %v3012 = vpop.xlane.xlu0 %3011
        %v3013 = vadd.f32 %v2812, %v2814
        %v3014 = vsel %vm855, %v2816, 0.0
        %v3015 = vadd.f32 %v3013, %v3014
        %3016 = vadd.xlane.f32.xlu0 %v3015
        %v3017 = vpop.xlane.xlu0 %3016
        %v3018 = vadd.f32 %v2818, %v2820
        %v3019 = vsel %vm855, %v2822, 0.0
        %v3020 = vadd.f32 %v3018, %v3019
        %3021 = vadd.xlane.f32.xlu0 %v3020
        %v3022 = vpop.xlane.xlu0 %3021
        %v3023 = vrcp.pop %v2827
        %v3024 = vrcp.pop %v2832
        %v3025 = vrcp.pop %v2837
        %v3026 = vrcp.pop %v2842
        %v3027 = vrcp.pop %v2847
        %v3028 = vrcp.pop %v2852
        %v3029 = vrcp.pop %v2857
        %v3030 = vrcp.pop %v2862
        %v3031 = vrcp.pop %v2867
        %v3032 = vrcp.pop %v2872
        %v3033 = vrcp.pop %v2877
        %v3034 = vrcp.pop %v2882
        %v3035 = vrcp.pop %v2887
        %v3036 = vrcp.pop %v2892
        %v3037 = vrcp.pop %v2897
        %v3038 = vrcp.pop %v2902
        %v3039 = vrcp.pop %v2907
        %v3040 = vrcp.pop %v2912
        %v3041 = vrcp.pop %v2917
        %v3042 = vrcp.pop %v2922
        %v3043 = vrcp.pop %v2927
        %v3044 = vrcp.pop %v2932
        %v3045 = vrcp.pop %v2937
        %v3046 = vrcp.pop %v2942
        %v3047 = vrcp.pop %v2947
        %v3048 = vrcp.pop %v2952
        %v3049 = vrcp.pop %v2957
        %v3050 = vrcp.pop %v2962
        %v3051 = vrcp.pop %v2967
        %v3052 = vrcp.pop %v2972
        %v3053 = vrcp.pop %v2977
        %v3054 = vrcp.pop %v2982
        %v3055 = vrcp.pop %v2987
        %v3056 = vrcp.pop %v2992
        %v3057 = vrcp.pop %v2997
        %v3058 = vrcp.pop %v3002
        %v3059 = vrcp.pop %v3007
        %v3060 = vrcp.pop %v3012
        %v3061 = vrcp.pop %v3017
        %v3062 = vrcp.pop %v3022
        %v3063 = vmul.f32 %v2584, %v3023
        %v3064 = vmul.f32 %v2586, %v3023
        %v3065 = vmul.f32 %v2588, %v3023
        %v3066 = vmul.f32 %v2590, %v3024
        %v3067 = vmul.f32 %v2592, %v3024
        %v3068 = vmul.f32 %v2594, %v3024
        %v3069 = vmul.f32 %v2596, %v3025
        %v3070 = vmul.f32 %v2598, %v3025
        %v3071 = vmul.f32 %v2600, %v3025
        %v3072 = vmul.f32 %v2602, %v3026
        %v3073 = vmul.f32 %v2604, %v3026
        %v3074 = vmul.f32 %v2606, %v3026
        %v3075 = vmul.f32 %v2608, %v3027
        %v3076 = vmul.f32 %v2610, %v3027
        %v3077 = vmul.f32 %v2612, %v3027
        %v3078 = vmul.f32 %v2614, %v3028
        %v3079 = vmul.f32 %v2616, %v3028
        %v3080 = vmul.f32 %v2618, %v3028
        %v3081 = vmul.f32 %v2620, %v3029
        %v3082 = vmul.f32 %v2622, %v3029
        %v3083 = vmul.f32 %v2624, %v3029
        %v3084 = vmul.f32 %v2626, %v3030
        %v3085 = vmul.f32 %v2628, %v3030
        %v3086 = vmul.f32 %v2630, %v3030
        %v3087 = vmul.f32 %v2632, %v3031
        %v3088 = vmul.f32 %v2634, %v3031
        %v3089 = vmul.f32 %v2636, %v3031
        %v3090 = vmul.f32 %v2638, %v3032
        %v3091 = vmul.f32 %v2640, %v3032
        %v3092 = vmul.f32 %v2642, %v3032
        %v3093 = vmul.f32 %v2644, %v3033
        %v3094 = vmul.f32 %v2646, %v3033
        %v3095 = vmul.f32 %v2648, %v3033
        %v3096 = vmul.f32 %v2650, %v3034
        %v3097 = vmul.f32 %v2652, %v3034
        %v3098 = vmul.f32 %v2654, %v3034
        %v3099 = vmul.f32 %v2656, %v3035
        %v3100 = vmul.f32 %v2658, %v3035
        %v3101 = vmul.f32 %v2660, %v3035
        %v3102 = vmul.f32 %v2662, %v3036
        %v3103 = vmul.f32 %v2664, %v3036
        %v3104 = vmul.f32 %v2666, %v3036
        %v3105 = vmul.f32 %v2668, %v3037
        %v3106 = vmul.f32 %v2670, %v3037
        %v3107 = vmul.f32 %v2672, %v3037
        %v3108 = vmul.f32 %v2674, %v3038
        %v3109 = vmul.f32 %v2676, %v3038
        %v3110 = vmul.f32 %v2678, %v3038
        %v3111 = vmul.f32 %v2680, %v3039
        %v3112 = vmul.f32 %v2682, %v3039
        %v3113 = vmul.f32 %v2684, %v3039
        %v3114 = vmul.f32 %v2686, %v3040
        %v3115 = vmul.f32 %v2688, %v3040
        %v3116 = vmul.f32 %v2690, %v3040
        %v3117 = vmul.f32 %v2692, %v3041
        %v3118 = vmul.f32 %v2694, %v3041
        %v3119 = vmul.f32 %v2696, %v3041
        %v3120 = vmul.f32 %v2698, %v3042
        %v3121 = vmul.f32 %v2700, %v3042
        %v3122 = vmul.f32 %v2702, %v3042
        %v3123 = vmul.f32 %v2704, %v3043
        %v3124 = vmul.f32 %v2706, %v3043
        %v3125 = vmul.f32 %v2708, %v3043
        %v3126 = vmul.f32 %v2710, %v3044
        %v3127 = vmul.f32 %v2712, %v3044
        %v3128 = vmul.f32 %v2714, %v3044
        %v3129 = vmul.f32 %v2716, %v3045
        %v3130 = vmul.f32 %v2718, %v3045
        %v3131 = vmul.f32 %v2720, %v3045
        %v3132 = vmul.f32 %v2722, %v3046
        %v3133 = vmul.f32 %v2724, %v3046
        %v3134 = vmul.f32 %v2726, %v3046
        %v3135 = vmul.f32 %v2728, %v3047
        %v3136 = vmul.f32 %v2730, %v3047
        %v3137 = vmul.f32 %v2732, %v3047
        %v3138 = vmul.f32 %v2734, %v3048
        %v3139 = vmul.f32 %v2736, %v3048
        %v3140 = vmul.f32 %v2738, %v3048
        %v3141 = vmul.f32 %v2740, %v3049
        %v3142 = vmul.f32 %v2742, %v3049
        %v3143 = vmul.f32 %v2744, %v3049
        %v3144 = vmul.f32 %v2746, %v3050
        %v3145 = vmul.f32 %v2748, %v3050
        %v3146 = vmul.f32 %v2750, %v3050
        %v3147 = vmul.f32 %v2752, %v3051
        %v3148 = vmul.f32 %v2754, %v3051
        %v3149 = vmul.f32 %v2756, %v3051
        %v3150 = vmul.f32 %v2758, %v3052
        %v3151 = vmul.f32 %v2760, %v3052
        %v3152 = vmul.f32 %v2762, %v3052
        %v3153 = vmul.f32 %v2764, %v3053
        %v3154 = vmul.f32 %v2766, %v3053
        %v3155 = vmul.f32 %v2768, %v3053
        %v3156 = vmul.f32 %v2770, %v3054
        %v3157 = vmul.f32 %v2772, %v3054
        %v3158 = vmul.f32 %v2774, %v3054
        %v3159 = vmul.f32 %v2776, %v3055
        %v3160 = vmul.f32 %v2778, %v3055
        %v3161 = vmul.f32 %v2780, %v3055
        %v3162 = vmul.f32 %v2782, %v3056
        %v3163 = vmul.f32 %v2784, %v3056
        %v3164 = vmul.f32 %v2786, %v3056
        %v3165 = vmul.f32 %v2788, %v3057
        %v3166 = vmul.f32 %v2790, %v3057
        %v3167 = vmul.f32 %v2792, %v3057
        %v3168 = vmul.f32 %v2794, %v3058
        %v3169 = vmul.f32 %v2796, %v3058
        %v3170 = vmul.f32 %v2798, %v3058
        %v3171 = vmul.f32 %v2800, %v3059
        %v3172 = vmul.f32 %v2802, %v3059
        %v3173 = vmul.f32 %v2804, %v3059
        %v3174 = vmul.f32 %v2806, %v3060
        %v3175 = vmul.f32 %v2808, %v3060
        %v3176 = vmul.f32 %v2810, %v3060
        %v3177 = vmul.f32 %v2812, %v3061
        %v3178 = vmul.f32 %v2814, %v3061
        %v3179 = vmul.f32 %v2816, %v3061
        %v3180 = vmul.f32 %v2818, %v3062
        %v3181 = vmul.f32 %v2820, %v3062
        %v3182 = vmul.f32 %v2822, %v3062
        %v3183 = vpack.c.bf16 %v955, %v951
        %v3184 = vpack.c.bf16 %v965, %v961
        %v3185 = vpack.c.bf16 %v975, %v971
        %v3186 = vpack.c.bf16 %v985, %v981
        %v3187 = vpack.c.bf16 %v995, %v991
        %v3188 = vpack.c.bf16 %v1005, %v1001
        %v3189 = vpack.c.bf16 %v1015, %v1011
        %v3190 = vpack.c.bf16 %v1025, %v1021
        %v3191 = vpack.c.bf16 %v1035, %v1031
        %v3192 = vpack.c.bf16 %v1045, %v1041
        %v3193 = vpack.c.bf16 %v1055, %v1051
        %v3194 = vpack.c.bf16 %v1065, %v1061
        %v3195 = vpack.c.bf16 %v1075, %v1071
        %v3196 = vpack.c.bf16 %v1085, %v1081
        %v3197 = vpack.c.bf16 %v1095, %v1091
        %v3198 = vpack.c.bf16 %v1105, %v1101
        %v3199 = vpack.c.bf16 %v1115, %v1111
        %v3200 = vpack.c.bf16 %v1125, %v1121
        %v3201 = vpack.c.bf16 %v1135, %v1131
        %v3202 = vpack.c.bf16 %v1145, %v1141
        %v3203 = vpack.c.bf16 %v3066, %v3063
        %v3204 = vpack.c.bf16 %v3067, %v3064
        %v3205 = vpack.c.bf16 %v3068, %v3065
        %v3206 = vpack.c.bf16 %v3072, %v3069
        %v3207 = vpack.c.bf16 %v3073, %v3070
        %v3208 = vpack.c.bf16 %v3074, %v3071
        %v3209 = vpack.c.bf16 %v3078, %v3075
        %v3210 = vpack.c.bf16 %v3079, %v3076
        %v3211 = vpack.c.bf16 %v3080, %v3077
        %v3212 = vpack.c.bf16 %v3084, %v3081
        %v3213 = vpack.c.bf16 %v3085, %v3082
        %v3214 = vpack.c.bf16 %v3086, %v3083
        %v3215 = vpack.c.bf16 %v3090, %v3087
        %v3216 = vpack.c.bf16 %v3091, %v3088
        %v3217 = vpack.c.bf16 %v3092, %v3089
        %v3218 = vpack.c.bf16 %v3096, %v3093
        %v3219 = vpack.c.bf16 %v3097, %v3094
        %v3220 = vpack.c.bf16 %v3098, %v3095
        %v3221 = vpack.c.bf16 %v3102, %v3099
        %v3222 = vpack.c.bf16 %v3103, %v3100
        %v3223 = vpack.c.bf16 %v3104, %v3101
        %v3224 = vpack.c.bf16 %v3108, %v3105
        %v3225 = vpack.c.bf16 %v3109, %v3106
        %v3226 = vpack.c.bf16 %v3110, %v3107
        %v3227 = vpack.c.bf16 %v3114, %v3111
        %v3228 = vpack.c.bf16 %v3115, %v3112
        %v3229 = vpack.c.bf16 %v3116, %v3113
        %v3230 = vpack.c.bf16 %v3120, %v3117
        %v3231 = vpack.c.bf16 %v3121, %v3118
        %v3232 = vpack.c.bf16 %v3122, %v3119
        %v3233 = vpack.c.bf16 %v3126, %v3123
        %v3234 = vpack.c.bf16 %v3127, %v3124
        %v3235 = vpack.c.bf16 %v3128, %v3125
        %v3236 = vpack.c.bf16 %v3132, %v3129
        %v3237 = vpack.c.bf16 %v3133, %v3130
        %v3238 = vpack.c.bf16 %v3134, %v3131
        %v3239 = vpack.c.bf16 %v3138, %v3135
        %v3240 = vpack.c.bf16 %v3139, %v3136
        %v3241 = vpack.c.bf16 %v3140, %v3137
        %v3242 = vpack.c.bf16 %v3144, %v3141
        %v3243 = vpack.c.bf16 %v3145, %v3142
        %v3244 = vpack.c.bf16 %v3146, %v3143
        %v3245 = vpack.c.bf16 %v3150, %v3147
        %v3246 = vpack.c.bf16 %v3151, %v3148
        %v3247 = vpack.c.bf16 %v3152, %v3149
        %v3248 = vpack.c.bf16 %v3156, %v3153
        %v3249 = vpack.c.bf16 %v3157, %v3154
        %v3250 = vpack.c.bf16 %v3158, %v3155
        %v3251 = vpack.c.bf16 %v3162, %v3159
        %v3252 = vpack.c.bf16 %v3163, %v3160
        %v3253 = vpack.c.bf16 %v3164, %v3161
        %v3254 = vpack.c.bf16 %v3168, %v3165
        %v3255 = vpack.c.bf16 %v3169, %v3166
        %v3256 = vpack.c.bf16 %v3170, %v3167
        %v3257 = vpack.c.bf16 %v3174, %v3171
        %v3258 = vpack.c.bf16 %v3175, %v3172
        %v3259 = vpack.c.bf16 %v3176, %v3173
        %v3260 = vpack.c.bf16 %v3180, %v3177
        %v3261 = vpack.c.bf16 %v3181, %v3178
        %v3262 = vpack.c.bf16 %v3182, %v3179
        %v3264 = vsel %vm855, %v3205, 0
        %v3267 = vsel %vm855, %v3208, 0
        %v3270 = vsel %vm855, %v3211, 0
        %v3273 = vsel %vm855, %v3214, 0
        %v3276 = vsel %vm855, %v3217, 0
        %v3279 = vsel %vm855, %v3220, 0
        %v3282 = vsel %vm855, %v3223, 0
        %v3285 = vsel %vm855, %v3226, 0
        %v3288 = vsel %vm855, %v3229, 0
        %v3291 = vsel %vm855, %v3232, 0
        %v3294 = vsel %vm855, %v3235, 0
        %v3297 = vsel %vm855, %v3238, 0
        %v3300 = vsel %vm855, %v3241, 0
        %v3303 = vsel %vm855, %v3244, 0
        %v3306 = vsel %vm855, %v3247, 0
        %v3309 = vsel %vm855, %v3250, 0
        %v3312 = vsel %vm855, %v3253, 0
        %v3315 = vsel %vm855, %v3256, 0
        %v3318 = vsel %vm855, %v3259, 0
        %v3321 = vsel %vm855, %v3262, 0
        %3323 = vmatprep.subr.bf16.mxu0 0
        %3324 = vmatpush1.bf16.msra.mxu0 %v3190
        %3325 = vmatprep.subr.bf16.mxu0 0
        %3326 = vmatpush1.bf16.msra.mxu0 %v3189
        %3327 = vmatprep.subr.bf16.mxu0 0
        %3328 = vmatpush1.bf16.msra.mxu0 %v3188
        %3329 = vmatprep.subr.bf16.mxu0 0
        %3330 = vmatpush1.bf16.msra.mxu0 %v3187
        %3331 = vmatprep.subr.bf16.mxu0 0
        %3332 = vmatpush1.bf16.msra.mxu0 %v3186
        %3333 = vmatprep.subr.bf16.mxu0 0
        %3334 = vmatpush1.bf16.msra.mxu0 %v3185
        %3335 = vmatprep.subr.bf16.mxu0 0
        %3336 = vmatpush1.bf16.msra.mxu0 %v3184
        %3337 = vmatprep.subr.bf16.mxu0 0
        %3338 = vmatpush1.bf16.msra.mxu0 %v3183
        %3339 = vmatprep.subr.bf16.mxu0 0
        %3340 = vmatpush2.bf16.msra.mxu0 %v3198
        %3341 = vmatprep.subr.bf16.mxu0 0
        %3342 = vmatpush2.bf16.msra.mxu0 %v3197
        %3343 = vmatprep.subr.bf16.mxu0 0
        %3344 = vmatpush2.bf16.msra.mxu0 %v3196
        %3345 = vmatprep.subr.bf16.mxu0 0
        %3346 = vmatpush2.bf16.msra.mxu0 %v3195
        %3347 = vmatprep.subr.bf16.mxu0 0
        %3348 = vmatpush2.bf16.msra.mxu0 %v3194
        %3349 = vmatprep.subr.bf16.mxu0 0
        %3350 = vmatpush2.bf16.msra.mxu0 %v3193
        %3351 = vmatprep.subr.bf16.mxu0 0
        %3352 = vmatpush2.bf16.msra.mxu0 %v3192
        %3353 = vmatprep.subr.bf16.mxu0 0
        %3354 = vmatpush2.bf16.msra.mxu0 %v3191
        %3355 = vmatprep.mubr.bf16.mxu0 %v3204
        %3356 = vmatmul.mubr.bf16.gmra.mxu0 %v3203
        %v3357 = vpop.f32.mrf.mxu0
        %v3358 = vadd.f32 0.0, %v3357
        %v3359 = vpop.f32.mrf.mxu0
        %v3360 = vpop.f32.mrf.mxu0
        %v3361 = vadd.f32 0.0, %v3360
        %v3362 = vpop.f32.mrf.mxu0
        %3363 = vmatprep.mubr.bf16.mxu0 %v3207
        %3364 = vmatmul.mubr.bf16.gmra.mxu0 %v3206
        %v3365 = vpop.f32.mrf.mxu0
        %v3366 = vadd.f32 0.0, %v3365
        %v3367 = vpop.f32.mrf.mxu0
        %v3368 = vpop.f32.mrf.mxu0
        %v3369 = vadd.f32 0.0, %v3368
        %v3370 = vpop.f32.mrf.mxu0
        %3371 = vmatprep.mubr.bf16.mxu0 %v3210
        %3372 = vmatmul.mubr.bf16.gmra.mxu0 %v3209
        %v3373 = vpop.f32.mrf.mxu0
        %v3374 = vadd.f32 0.0, %v3373
        %v3375 = vpop.f32.mrf.mxu0
        %v3376 = vpop.f32.mrf.mxu0
        %v3377 = vadd.f32 0.0, %v3376
        %v3378 = vpop.f32.mrf.mxu0
        %3379 = vmatprep.mubr.bf16.mxu0 %v3213
        %3380 = vmatmul.mubr.bf16.gmra.mxu0 %v3212
        %v3381 = vpop.f32.mrf.mxu0
        %v3382 = vadd.f32 0.0, %v3381
        %v3383 = vpop.f32.mrf.mxu0
        %v3384 = vpop.f32.mrf.mxu0
        %v3385 = vadd.f32 0.0, %v3384
        %v3386 = vpop.f32.mrf.mxu0
        %3387 = vmatprep.mubr.bf16.mxu0 %v3216
        %3388 = vmatmul.mubr.bf16.gmra.mxu0 %v3215
        %v3389 = vpop.f32.mrf.mxu0
        %v3390 = vadd.f32 0.0, %v3389
        %v3391 = vpop.f32.mrf.mxu0
        %v3392 = vpop.f32.mrf.mxu0
        %v3393 = vadd.f32 0.0, %v3392
        %v3394 = vpop.f32.mrf.mxu0
        %3395 = vmatprep.mubr.bf16.mxu0 %v3219
        %3396 = vmatmul.mubr.bf16.gmra.mxu0 %v3218
        %v3397 = vpop.f32.mrf.mxu0
        %v3398 = vadd.f32 0.0, %v3397
        %v3399 = vpop.f32.mrf.mxu0
        %v3400 = vpop.f32.mrf.mxu0
        %v3401 = vadd.f32 0.0, %v3400
        %v3402 = vpop.f32.mrf.mxu0
        %3403 = vmatprep.mubr.bf16.mxu0 %v3222
        %3404 = vmatmul.mubr.bf16.gmra.mxu0 %v3221
        %v3405 = vpop.f32.mrf.mxu0
        %v3406 = vadd.f32 0.0, %v3405
        %v3407 = vpop.f32.mrf.mxu0
        %v3408 = vpop.f32.mrf.mxu0
        %v3409 = vadd.f32 0.0, %v3408
        %v3410 = vpop.f32.mrf.mxu0
        %3411 = vmatprep.mubr.bf16.mxu0 %v3225
        %3412 = vmatmul.mubr.bf16.gmra.mxu0 %v3224
        %v3413 = vpop.f32.mrf.mxu0
        %v3414 = vadd.f32 0.0, %v3413
        %v3415 = vpop.f32.mrf.mxu0
        %v3416 = vpop.f32.mrf.mxu0
        %v3417 = vadd.f32 0.0, %v3416
        %v3418 = vpop.f32.mrf.mxu0
        %3419 = vmatprep.mubr.bf16.mxu0 %v3228
        %3420 = vmatmul.mubr.bf16.gmra.mxu0 %v3227
        %v3421 = vpop.f32.mrf.mxu0
        %v3422 = vadd.f32 0.0, %v3421
        %v3423 = vpop.f32.mrf.mxu0
        %v3424 = vpop.f32.mrf.mxu0
        %v3425 = vadd.f32 0.0, %v3424
        %v3426 = vpop.f32.mrf.mxu0
        %3427 = vmatprep.mubr.bf16.mxu0 %v3231
        %3428 = vmatmul.mubr.bf16.gmra.mxu0 %v3230
        %v3429 = vpop.f32.mrf.mxu0
        %v3430 = vadd.f32 0.0, %v3429
        %v3431 = vpop.f32.mrf.mxu0
        %v3432 = vpop.f32.mrf.mxu0
        %v3433 = vadd.f32 0.0, %v3432
        %v3434 = vpop.f32.mrf.mxu0
        %3435 = vmatprep.mubr.bf16.mxu0 %v3234
        %3436 = vmatmul.mubr.bf16.gmra.mxu0 %v3233
        %v3437 = vpop.f32.mrf.mxu0
        %v3438 = vadd.f32 0.0, %v3437
        %v3439 = vpop.f32.mrf.mxu0
        %v3440 = vpop.f32.mrf.mxu0
        %v3441 = vadd.f32 0.0, %v3440
        %v3442 = vpop.f32.mrf.mxu0
        %3443 = vmatprep.mubr.bf16.mxu0 %v3237
        %3444 = vmatmul.mubr.bf16.gmra.mxu0 %v3236
        %v3445 = vpop.f32.mrf.mxu0
        %v3446 = vadd.f32 0.0, %v3445
        %v3447 = vpop.f32.mrf.mxu0
        %v3448 = vpop.f32.mrf.mxu0
        %v3449 = vadd.f32 0.0, %v3448
        %v3450 = vpop.f32.mrf.mxu0
        %3451 = vmatprep.mubr.bf16.mxu0 %v3240
        %3452 = vmatmul.mubr.bf16.gmra.mxu0 %v3239
        %v3453 = vpop.f32.mrf.mxu0
        %v3454 = vadd.f32 0.0, %v3453
        %v3455 = vpop.f32.mrf.mxu0
        %v3456 = vpop.f32.mrf.mxu0
        %v3457 = vadd.f32 0.0, %v3456
        %v3458 = vpop.f32.mrf.mxu0
        %3459 = vmatprep.mubr.bf16.mxu0 %v3243
        %3460 = vmatmul.mubr.bf16.gmra.mxu0 %v3242
        %v3461 = vpop.f32.mrf.mxu0
        %v3462 = vadd.f32 0.0, %v3461
        %v3463 = vpop.f32.mrf.mxu0
        %v3464 = vpop.f32.mrf.mxu0
        %v3465 = vadd.f32 0.0, %v3464
        %v3466 = vpop.f32.mrf.mxu0
        %3467 = vmatprep.mubr.bf16.mxu0 %v3246
        %3468 = vmatmul.mubr.bf16.gmra.mxu0 %v3245
        %v3469 = vpop.f32.mrf.mxu0
        %v3470 = vadd.f32 0.0, %v3469
        %v3471 = vpop.f32.mrf.mxu0
        %v3472 = vpop.f32.mrf.mxu0
        %v3473 = vadd.f32 0.0, %v3472
        %v3474 = vpop.f32.mrf.mxu0
        %3475 = vmatprep.mubr.bf16.mxu0 %v3249
        %3476 = vmatmul.mubr.bf16.gmra.mxu0 %v3248
        %v3477 = vpop.f32.mrf.mxu0
        %v3478 = vadd.f32 0.0, %v3477
        %v3479 = vpop.f32.mrf.mxu0
        %v3480 = vpop.f32.mrf.mxu0
        %v3481 = vadd.f32 0.0, %v3480
        %v3482 = vpop.f32.mrf.mxu0
        %3483 = vmatprep.mubr.bf16.mxu0 %v3252
        %3484 = vmatmul.mubr.bf16.gmra.mxu0 %v3251
        %v3485 = vpop.f32.mrf.mxu0
        %v3486 = vadd.f32 0.0, %v3485
        %v3487 = vpop.f32.mrf.mxu0
        %v3488 = vpop.f32.mrf.mxu0
        %v3489 = vadd.f32 0.0, %v3488
        %v3490 = vpop.f32.mrf.mxu0
        %3491 = vmatprep.mubr.bf16.mxu0 %v3255
        %3492 = vmatmul.mubr.bf16.gmra.mxu0 %v3254
        %v3493 = vpop.f32.mrf.mxu0
        %v3494 = vadd.f32 0.0, %v3493
        %v3495 = vpop.f32.mrf.mxu0
        %v3496 = vpop.f32.mrf.mxu0
        %v3497 = vadd.f32 0.0, %v3496
        %v3498 = vpop.f32.mrf.mxu0
        %3499 = vmatprep.mubr.bf16.mxu0 %v3258
        %3500 = vmatmul.mubr.bf16.gmra.mxu0 %v3257
        %v3501 = vpop.f32.mrf.mxu0
        %v3502 = vadd.f32 0.0, %v3501
        %v3503 = vpop.f32.mrf.mxu0
        %v3504 = vpop.f32.mrf.mxu0
        %v3505 = vadd.f32 0.0, %v3504
        %v3506 = vpop.f32.mrf.mxu0
        %3507 = vmatprep.mubr.bf16.mxu0 %v3261
        %3508 = vmatmul.mubr.bf16.gmra.mxu0 %v3260
        %v3509 = vpop.f32.mrf.mxu0
        %v3510 = vadd.f32 0.0, %v3509
        %v3511 = vpop.f32.mrf.mxu0
        %v3512 = vpop.f32.mrf.mxu0
        %v3513 = vadd.f32 0.0, %v3512
        %v3514 = vpop.f32.mrf.mxu0
        %3515 = vdwg.mxu0
        %3516 = vmatprep.subr.bf16.mxu0 0
        %3517 = vmatpush1.bf16.msra.mxu0 0
        %3518 = vmatprep.subr.bf16.mxu0 0
        %3519 = vmatpush1.bf16.msra.mxu0 0
        %3520 = vmatprep.subr.bf16.mxu0 0
        %3521 = vmatpush1.bf16.msra.mxu0 0
        %3522 = vmatprep.subr.bf16.mxu0 0
        %3523 = vmatpush1.bf16.msra.mxu0 0
        %3524 = vmatprep.subr.bf16.mxu0 0
        %3525 = vmatpush1.bf16.msra.mxu0 %v3202
        %3526 = vmatprep.subr.bf16.mxu0 0
        %3527 = vmatpush1.bf16.msra.mxu0 %v3201
        %3528 = vmatprep.subr.bf16.mxu0 0
        %3529 = vmatpush1.bf16.msra.mxu0 %v3200
        %3530 = vmatprep.subr.bf16.mxu0 0
        %3531 = vmatpush1.bf16.msra.mxu0 %v3199
        %3532 = vmatprep.subr.bf16.mxu0 0
        %3533 = vmatpush2.bf16.msra.mxu0 0
        %3534 = vmatprep.subr.bf16.mxu0 0
        %3535 = vmatpush2.bf16.msra.mxu0 0
        %3536 = vmatprep.subr.bf16.mxu0 0
        %3537 = vmatpush2.bf16.msra.mxu0 0
        %3538 = vmatprep.subr.bf16.mxu0 0
        %3539 = vmatpush2.bf16.msra.mxu0 0
        %3540 = vmatprep.subr.bf16.mxu0 0
        %3541 = vmatpush2.bf16.msra.mxu0 0
        %3542 = vmatprep.subr.bf16.mxu0 0
        %3543 = vmatpush2.bf16.msra.mxu0 0
        %3544 = vmatprep.subr.bf16.mxu0 0
        %3545 = vmatpush2.bf16.msra.mxu0 0
        %3546 = vmatprep.subr.bf16.mxu0 0
        %3547 = vmatpush2.bf16.msra.mxu0 0
        %3548 = vmatprep.mubr.bf16.mxu0 0
        %3549 = vmatmul.mubr.bf16.gmra.mxu0 %v3264
        %v3550 = vpop.f32.mrf.mxu0
        %v3551 = vadd.f32 %v3358, %v3550
        %v3552 = vpop.f32.mrf.mxu0
        %v3553 = vpop.f32.mrf.mxu0
        %v3554 = vadd.f32 %v3361, %v3553
        %v3555 = vpop.f32.mrf.mxu0
        %3556 = vmatprep.mubr.bf16.mxu0 0
        %3557 = vmatmul.mubr.bf16.gmra.mxu0 %v3267
        %v3558 = vpop.f32.mrf.mxu0
        %v3559 = vadd.f32 %v3366, %v3558
        %v3560 = vpop.f32.mrf.mxu0
        %v3561 = vpop.f32.mrf.mxu0
        %v3562 = vadd.f32 %v3369, %v3561
        %v3563 = vpop.f32.mrf.mxu0
        %3564 = vmatprep.mubr.bf16.mxu0 0
        %3565 = vmatmul.mubr.bf16.gmra.mxu0 %v3270
        %v3566 = vpop.f32.mrf.mxu0
        %v3567 = vadd.f32 %v3374, %v3566
        %v3568 = vpop.f32.mrf.mxu0
        %v3569 = vpop.f32.mrf.mxu0
        %v3570 = vadd.f32 %v3377, %v3569
        %v3571 = vpop.f32.mrf.mxu0
        %3572 = vmatprep.mubr.bf16.mxu0 0
        %3573 = vmatmul.mubr.bf16.gmra.mxu0 %v3273
        %v3574 = vpop.f32.mrf.mxu0
        %v3575 = vadd.f32 %v3382, %v3574
        %v3576 = vpop.f32.mrf.mxu0
        %v3577 = vpop.f32.mrf.mxu0
        %v3578 = vadd.f32 %v3385, %v3577
        %v3579 = vpop.f32.mrf.mxu0
        %3580 = vmatprep.mubr.bf16.mxu0 0
        %3581 = vmatmul.mubr.bf16.gmra.mxu0 %v3276
        %v3582 = vpop.f32.mrf.mxu0
        %v3583 = vadd.f32 %v3390, %v3582
        %v3584 = vpop.f32.mrf.mxu0
        %v3585 = vpop.f32.mrf.mxu0
        %v3586 = vadd.f32 %v3393, %v3585
        %v3587 = vpop.f32.mrf.mxu0
        %3588 = vmatprep.mubr.bf16.mxu0 0
        %3589 = vmatmul.mubr.bf16.gmra.mxu0 %v3279
        %v3590 = vpop.f32.mrf.mxu0
        %v3591 = vadd.f32 %v3398, %v3590
        %v3592 = vpop.f32.mrf.mxu0
        %v3593 = vpop.f32.mrf.mxu0
        %v3594 = vadd.f32 %v3401, %v3593
        %v3595 = vpop.f32.mrf.mxu0
        %3596 = vmatprep.mubr.bf16.mxu0 0
        %3597 = vmatmul.mubr.bf16.gmra.mxu0 %v3282
        %v3598 = vpop.f32.mrf.mxu0
        %v3599 = vadd.f32 %v3406, %v3598
        %v3600 = vpop.f32.mrf.mxu0
        %v3601 = vpop.f32.mrf.mxu0
        %v3602 = vadd.f32 %v3409, %v3601
        %v3603 = vpop.f32.mrf.mxu0
        %3604 = vmatprep.mubr.bf16.mxu0 0
        %3605 = vmatmul.mubr.bf16.gmra.mxu0 %v3285
        %v3606 = vpop.f32.mrf.mxu0
        %v3607 = vadd.f32 %v3414, %v3606
        %v3608 = vpop.f32.mrf.mxu0
        %v3609 = vpop.f32.mrf.mxu0
        %v3610 = vadd.f32 %v3417, %v3609
        %v3611 = vpop.f32.mrf.mxu0
        %3612 = vmatprep.mubr.bf16.mxu0 0
        %3613 = vmatmul.mubr.bf16.gmra.mxu0 %v3288
        %v3614 = vpop.f32.mrf.mxu0
        %v3615 = vadd.f32 %v3422, %v3614
        %v3616 = vpop.f32.mrf.mxu0
        %v3617 = vpop.f32.mrf.mxu0
        %v3618 = vadd.f32 %v3425, %v3617
        %v3619 = vpop.f32.mrf.mxu0
        %3620 = vmatprep.mubr.bf16.mxu0 0
        %3621 = vmatmul.mubr.bf16.gmra.mxu0 %v3291
        %v3622 = vpop.f32.mrf.mxu0
        %v3623 = vadd.f32 %v3430, %v3622
        %v3624 = vpop.f32.mrf.mxu0
        %v3625 = vpop.f32.mrf.mxu0
        %v3626 = vadd.f32 %v3433, %v3625
        %v3627 = vpop.f32.mrf.mxu0
        %3628 = vmatprep.mubr.bf16.mxu0 0
        %3629 = vmatmul.mubr.bf16.gmra.mxu0 %v3294
        %v3630 = vpop.f32.mrf.mxu0
        %v3631 = vadd.f32 %v3438, %v3630
        %v3632 = vpop.f32.mrf.mxu0
        %v3633 = vpop.f32.mrf.mxu0
        %v3634 = vadd.f32 %v3441, %v3633
        %v3635 = vpop.f32.mrf.mxu0
        %3636 = vmatprep.mubr.bf16.mxu0 0
        %3637 = vmatmul.mubr.bf16.gmra.mxu0 %v3297
        %v3638 = vpop.f32.mrf.mxu0
        %v3639 = vadd.f32 %v3446, %v3638
        %v3640 = vpop.f32.mrf.mxu0
        %v3641 = vpop.f32.mrf.mxu0
        %v3642 = vadd.f32 %v3449, %v3641
        %v3643 = vpop.f32.mrf.mxu0
        %3644 = vmatprep.mubr.bf16.mxu0 0
        %3645 = vmatmul.mubr.bf16.gmra.mxu0 %v3300
        %v3646 = vpop.f32.mrf.mxu0
        %v3647 = vadd.f32 %v3454, %v3646
        %v3648 = vpop.f32.mrf.mxu0
        %v3649 = vpop.f32.mrf.mxu0
        %v3650 = vadd.f32 %v3457, %v3649
        %v3651 = vpop.f32.mrf.mxu0
        %3652 = vmatprep.mubr.bf16.mxu0 0
        %3653 = vmatmul.mubr.bf16.gmra.mxu0 %v3303
        %v3654 = vpop.f32.mrf.mxu0
        %v3655 = vadd.f32 %v3462, %v3654
        %v3656 = vpop.f32.mrf.mxu0
        %v3657 = vpop.f32.mrf.mxu0
        %v3658 = vadd.f32 %v3465, %v3657
        %v3659 = vpop.f32.mrf.mxu0
        %3660 = vmatprep.mubr.bf16.mxu0 0
        %3661 = vmatmul.mubr.bf16.gmra.mxu0 %v3306
        %v3662 = vpop.f32.mrf.mxu0
        %v3663 = vadd.f32 %v3470, %v3662
        %v3664 = vpop.f32.mrf.mxu0
        %v3665 = vpop.f32.mrf.mxu0
        %v3666 = vadd.f32 %v3473, %v3665
        %v3667 = vpop.f32.mrf.mxu0
        %3668 = vmatprep.mubr.bf16.mxu0 0
        %3669 = vmatmul.mubr.bf16.gmra.mxu0 %v3309
        %v3670 = vpop.f32.mrf.mxu0
        %v3671 = vadd.f32 %v3478, %v3670
        %v3672 = vpop.f32.mrf.mxu0
        %v3673 = vpop.f32.mrf.mxu0
        %v3674 = vadd.f32 %v3481, %v3673
        %v3675 = vpop.f32.mrf.mxu0
        %3676 = vmatprep.mubr.bf16.mxu0 0
        %3677 = vmatmul.mubr.bf16.gmra.mxu0 %v3312
        %v3678 = vpop.f32.mrf.mxu0
        %v3679 = vadd.f32 %v3486, %v3678
        %v3680 = vpop.f32.mrf.mxu0
        %v3681 = vpop.f32.mrf.mxu0
        %v3682 = vadd.f32 %v3489, %v3681
        %v3683 = vpop.f32.mrf.mxu0
        %3684 = vmatprep.mubr.bf16.mxu0 0
        %3685 = vmatmul.mubr.bf16.gmra.mxu0 %v3315
        %v3686 = vpop.f32.mrf.mxu0
        %v3687 = vadd.f32 %v3494, %v3686
        %v3688 = vpop.f32.mrf.mxu0
        %v3689 = vpop.f32.mrf.mxu0
        %v3690 = vadd.f32 %v3497, %v3689
        %v3691 = vpop.f32.mrf.mxu0
        %3692 = vmatprep.mubr.bf16.mxu0 0
        %3693 = vmatmul.mubr.bf16.gmra.mxu0 %v3318
        %v3694 = vpop.f32.mrf.mxu0
        %v3695 = vadd.f32 %v3502, %v3694
        %v3696 = vpop.f32.mrf.mxu0
        %v3697 = vpop.f32.mrf.mxu0
        %v3698 = vadd.f32 %v3505, %v3697
        %v3699 = vpop.f32.mrf.mxu0
        %3700 = vmatprep.mubr.bf16.mxu0 0
        %3701 = vmatmul.mubr.bf16.gmra.mxu0 %v3321
        %v3702 = vpop.f32.mrf.mxu0
        %v3703 = vadd.f32 %v3510, %v3702
        %v3704 = vpop.f32.mrf.mxu0
        %v3705 = vpop.f32.mrf.mxu0
        %v3706 = vadd.f32 %v3513, %v3705
        %v3707 = vpop.f32.mrf.mxu0
        %3708 = vdwg.mxu0
        %v3709 = vpack.c.bf16 %v3554, %v3551
        %v3710 = vpack.c.bf16 %v3562, %v3559
        %v3711 = vpack.c.bf16 %v3570, %v3567
        %v3712 = vpack.c.bf16 %v3578, %v3575
        %v3713 = vpack.c.bf16 %v3586, %v3583
        %v3714 = vpack.c.bf16 %v3594, %v3591
        %v3715 = vpack.c.bf16 %v3602, %v3599
        %v3716 = vpack.c.bf16 %v3610, %v3607
        %v3717 = vpack.c.bf16 %v3618, %v3615
        %v3718 = vpack.c.bf16 %v3626, %v3623
        %v3719 = vpack.c.bf16 %v3634, %v3631
        %v3720 = vpack.c.bf16 %v3642, %v3639
        %v3721 = vpack.c.bf16 %v3650, %v3647
        %v3722 = vpack.c.bf16 %v3658, %v3655
        %v3723 = vpack.c.bf16 %v3666, %v3663
        %v3724 = vpack.c.bf16 %v3674, %v3671
        %v3725 = vpack.c.bf16 %v3682, %v3679
        %v3726 = vpack.c.bf16 %v3690, %v3687
        %v3727 = vpack.c.bf16 %v3698, %v3695
        %v3728 = vpack.c.bf16 %v3706, %v3703
        %v3729 = vld [vmem:[#allocation7] sm:$0xf]
        %v3730 = vld [vmem:[#allocation7 + $0x4] sm:$0xf]
        %v3731 = vld [vmem:[#allocation7 + $0x8] sm:$0xf]
        %v3732 = vld [vmem:[#allocation7 + $0xc] sm:$0xf]
        %v3733 = vld [vmem:[#allocation7 + $0x10] sm:$0xf]
        %v3734 = vld [vmem:[#allocation7 + $0x14] sm:$0xf]
        %v3735 = vld [vmem:[#allocation7 + $0x18] sm:$0xf]
        %v3736 = vld [vmem:[#allocation7 + $0x1c] sm:$0xf]
        %v3737 = vld [vmem:[#allocation7 + $0x20] sm:$0xf]
        %v3738 = vld [vmem:[#allocation7 + $0x24] sm:$0xf]
        %v3739 = vld [vmem:[#allocation7 + $0x28] sm:$0xf]
        %v3740 = vld [vmem:[#allocation7 + $0x2c] sm:$0xf]
        %v3741 = vld [vmem:[#allocation7 + $0x30] sm:$0xf]
        %v3742 = vld [vmem:[#allocation7 + $0x34] sm:$0xf]
        %v3743 = vld [vmem:[#allocation7 + $0x38] sm:$0xf]
        %v3744 = vld [vmem:[#allocation7 + $0x3c] sm:$0xf]
        %v3745 = vld [vmem:[#allocation7 + $0x40] sm:$0xf]
        %v3746 = vld [vmem:[#allocation7 + $0x44] sm:$0xf]
        %v3747 = vld [vmem:[#allocation7 + $0x48] sm:$0xf]
        %v3748 = vld [vmem:[#allocation7 + $0x4c] sm:$0xf]
        %v3749 = vld [vmem:[#allocation7 + $0x50] sm:$0xf]
        %v3750 = vld [vmem:[#allocation7 + $0x54] sm:$0xf]
        %v3751 = vld [vmem:[#allocation7 + $0x58] sm:$0xf]
        %v3752 = vld [vmem:[#allocation7 + $0x5c] sm:$0xf]
        %v3753 = vld [vmem:[#allocation7 + $0x60] sm:$0xf]
        %v3754 = vld [vmem:[#allocation7 + $0x64] sm:$0xf]
        %v3755 = vld [vmem:[#allocation7 + $0x68] sm:$0xf]
        %v3756 = vld [vmem:[#allocation7 + $0x6c] sm:$0xf]
        %v3757 = vld [vmem:[#allocation7 + $0x70] sm:$0xf]
        %v3758 = vld [vmem:[#allocation7 + $0x74] sm:$0xf]
        %v3759 = vld [vmem:[#allocation7 + $0x78] sm:$0xf]
        %v3760 = vld [vmem:[#allocation7 + $0x7c] sm:$0xf]
        %v3761 = vld [vmem:[%s9] sm:$0x1]
        %v3763 = vlaneseq
        %v3764 = vshrl.u32 %v3763, 7
        %v3765 = vsub.s32 0, %v3764
        %v3766 = vrot.slane %v3761, %v3765
        %v3800 = vunpack.c.l.b16 %v3729
        %v3801 = vunpack.c.l.b16 %v3730
        %v3802 = vunpack.c.l.b16 %v3731
        %v3803 = vunpack.c.l.b16 %v3732
        %v3804 = vunpack.c.l.b16 %v3733
        %v3805 = vunpack.c.l.b16 %v3734
        %v3806 = vunpack.c.l.b16 %v3735
        %v3807 = vunpack.c.l.b16 %v3736
        %v3808 = vunpack.c.l.b16 %v3737
        %v3809 = vunpack.c.l.b16 %v3738
        %v3810 = vunpack.c.l.b16 %v3739
        %v3811 = vunpack.c.l.b16 %v3740
        %v3812 = vunpack.c.l.b16 %v3741
        %v3813 = vunpack.c.l.b16 %v3742
        %v3814 = vunpack.c.l.b16 %v3743
        %v3815 = vunpack.c.l.b16 %v3744
        %v3816 = vunpack.c.l.b16 %v3745
        %v3817 = vunpack.c.l.b16 %v3746
        %v3818 = vunpack.c.l.b16 %v3747
        %v3819 = vunpack.c.l.b16 %v3748
        %v3820 = vunpack.c.l.b16 %v3749
        %v3821 = vunpack.c.l.b16 %v3750
        %v3822 = vunpack.c.l.b16 %v3751
        %v3823 = vunpack.c.l.b16 %v3752
        %v3824 = vunpack.c.l.b16 %v3753
        %v3825 = vunpack.c.l.b16 %v3754
        %v3826 = vunpack.c.l.b16 %v3755
        %v3827 = vunpack.c.l.b16 %v3756
        %v3828 = vunpack.c.l.b16 %v3757
        %v3829 = vunpack.c.l.b16 %v3758
        %v3830 = vunpack.c.l.b16 %v3759
        %v3831 = vunpack.c.l.b16 %v3760
        %v3832 = vpack.c.b16 %v3801, %v3800
        %v3833 = vpack.c.b16 %v3803, %v3802
        %v3834 = vpack.c.b16 %v3805, %v3804
        %v3835 = vpack.c.b16 %v3807, %v3806
        %v3836 = vpack.c.b16 %v3809, %v3808
        %v3837 = vpack.c.b16 %v3811, %v3810
        %v3838 = vpack.c.b16 %v3813, %v3812
        %v3839 = vpack.c.b16 %v3815, %v3814
        %v3840 = vpack.c.b16 %v3817, %v3816
        %v3841 = vpack.c.b16 %v3819, %v3818
        %v3842 = vpack.c.b16 %v3821, %v3820
        %v3843 = vpack.c.b16 %v3823, %v3822
        %v3844 = vpack.c.b16 %v3825, %v3824
        %v3845 = vpack.c.b16 %v3827, %v3826
        %v3846 = vpack.c.b16 %v3829, %v3828
        %v3847 = vpack.c.b16 %v3831, %v3830
        %3864 = vmatprep.subr.bf16.mxu0 0
        %3865 = vmatpush1.bf16.msra.mxu0 %v3839
        %3866 = vmatprep.subr.bf16.mxu0 0
        %3867 = vmatpush1.bf16.msra.mxu0 %v3838
        %3868 = vmatprep.subr.bf16.mxu0 0
        %3869 = vmatpush1.bf16.msra.mxu0 %v3837
        %3870 = vmatprep.subr.bf16.mxu0 0
        %3871 = vmatpush1.bf16.msra.mxu0 %v3836
        %3872 = vmatprep.subr.bf16.mxu0 0
        %3873 = vmatpush1.bf16.msra.mxu0 %v3835
        %3874 = vmatprep.subr.bf16.mxu0 0
        %3875 = vmatpush1.bf16.msra.mxu0 %v3834
        %3876 = vmatprep.subr.bf16.mxu0 0
        %3877 = vmatpush1.bf16.msra.mxu0 %v3833
        %3878 = vmatprep.subr.bf16.mxu0 0
        %3879 = vmatpush1.bf16.msra.mxu0 %v3832
        %3880 = vmatprep.subr.bf16.mxu0 0
        %3881 = vmatpush2.bf16.msra.mxu0 %v3847
        %3882 = vmatprep.subr.bf16.mxu0 0
        %3883 = vmatpush2.bf16.msra.mxu0 %v3846
        %3884 = vmatprep.subr.bf16.mxu0 0
        %3885 = vmatpush2.bf16.msra.mxu0 %v3845
        %3886 = vmatprep.subr.bf16.mxu0 0
        %3887 = vmatpush2.bf16.msra.mxu0 %v3844
        %3888 = vmatprep.subr.bf16.mxu0 0
        %3889 = vmatpush2.bf16.msra.mxu0 %v3843
        %3890 = vmatprep.subr.bf16.mxu0 0
        %3891 = vmatpush2.bf16.msra.mxu0 %v3842
        %3892 = vmatprep.subr.bf16.mxu0 0
        %3893 = vmatpush2.bf16.msra.mxu0 %v3841
        %3894 = vmatprep.subr.bf16.mxu0 0
        %3895 = vmatpush2.bf16.msra.mxu0 %v3840
        %3896 = vmatprep.mubr.bf16.mxu0 %v3709
        %3897 = vmatmul.mubr.bf16.gmra.mxu0 %v3183
        %v3898 = vpop.f32.mrf.mxu0
        %v3899 = vadd.f32 %v3766, %v3898
        %v3900 = vpop.f32.mrf.mxu0
        %v3901 = vpop.f32.mrf.mxu0
        %v3902 = vadd.f32 %v3766, %v3901
        %v3903 = vpop.f32.mrf.mxu0
        %3904 = vmatprep.mubr.bf16.mxu0 %v3710
        %3905 = vmatmul.mubr.bf16.gmra.mxu0 %v3184
        %v3906 = vpop.f32.mrf.mxu0
        %v3907 = vadd.f32 %v3766, %v3906
        %v3908 = vpop.f32.mrf.mxu0
        %v3909 = vpop.f32.mrf.mxu0
        %v3910 = vadd.f32 %v3766, %v3909
        %v3911 = vpop.f32.mrf.mxu0
        %3912 = vmatprep.mubr.bf16.mxu0 %v3711
        %3913 = vmatmul.mubr.bf16.gmra.mxu0 %v3185
        %v3914 = vpop.f32.mrf.mxu0
        %v3915 = vadd.f32 %v3766, %v3914
        %v3916 = vpop.f32.mrf.mxu0
        %v3917 = vpop.f32.mrf.mxu0
        %v3918 = vadd.f32 %v3766, %v3917
        %v3919 = vpop.f32.mrf.mxu0
        %3920 = vmatprep.mubr.bf16.mxu0 %v3712
        %3921 = vmatmul.mubr.bf16.gmra.mxu0 %v3186
        %v3922 = vpop.f32.mrf.mxu0
        %v3923 = vadd.f32 %v3766, %v3922
        %v3924 = vpop.f32.mrf.mxu0
        %v3925 = vpop.f32.mrf.mxu0
        %v3926 = vadd.f32 %v3766, %v3925
        %v3927 = vpop.f32.mrf.mxu0
        %3928 = vmatprep.mubr.bf16.mxu0 %v3713
        %3929 = vmatmul.mubr.bf16.gmra.mxu0 %v3187
        %v3930 = vpop.f32.mrf.mxu0
        %v3931 = vadd.f32 %v3766, %v3930
        %v3932 = vpop.f32.mrf.mxu0
        %v3933 = vpop.f32.mrf.mxu0
        %v3934 = vadd.f32 %v3766, %v3933
        %v3935 = vpop.f32.mrf.mxu0
        %3936 = vmatprep.mubr.bf16.mxu0 %v3714
        %3937 = vmatmul.mubr.bf16.gmra.mxu0 %v3188
        %v3938 = vpop.f32.mrf.mxu0
        %v3939 = vadd.f32 %v3766, %v3938
        %v3940 = vpop.f32.mrf.mxu0
        %v3941 = vpop.f32.mrf.mxu0
        %v3942 = vadd.f32 %v3766, %v3941
        %v3943 = vpop.f32.mrf.mxu0
        %3944 = vmatprep.mubr.bf16.mxu0 %v3715
        %3945 = vmatmul.mubr.bf16.gmra.mxu0 %v3189
        %v3946 = vpop.f32.mrf.mxu0
        %v3947 = vadd.f32 %v3766, %v3946
        %v3948 = vpop.f32.mrf.mxu0
        %v3949 = vpop.f32.mrf.mxu0
        %v3950 = vadd.f32 %v3766, %v3949
        %v3951 = vpop.f32.mrf.mxu0
        %3952 = vmatprep.mubr.bf16.mxu0 %v3716
        %3953 = vmatmul.mubr.bf16.gmra.mxu0 %v3190
        %v3954 = vpop.f32.mrf.mxu0
        %v3955 = vadd.f32 %v3766, %v3954
        %v3956 = vpop.f32.mrf.mxu0
        %v3957 = vpop.f32.mrf.mxu0
        %v3958 = vadd.f32 %v3766, %v3957
        %v3959 = vpop.f32.mrf.mxu0
        %3960 = vmatprep.mubr.bf16.mxu0 %v3717
        %3961 = vmatmul.mubr.bf16.gmra.mxu0 %v3191
        %v3962 = vpop.f32.mrf.mxu0
        %v3963 = vadd.f32 %v3766, %v3962
        %v3964 = vpop.f32.mrf.mxu0
        %v3965 = vpop.f32.mrf.mxu0
        %v3966 = vadd.f32 %v3766, %v3965
        %v3967 = vpop.f32.mrf.mxu0
        %3968 = vmatprep.mubr.bf16.mxu0 %v3718
        %3969 = vmatmul.mubr.bf16.gmra.mxu0 %v3192
        %v3970 = vpop.f32.mrf.mxu0
        %v3971 = vadd.f32 %v3766, %v3970
        %v3972 = vpop.f32.mrf.mxu0
        %v3973 = vpop.f32.mrf.mxu0
        %v3974 = vadd.f32 %v3766, %v3973
        %v3975 = vpop.f32.mrf.mxu0
        %3976 = vmatprep.mubr.bf16.mxu0 %v3719
        %3977 = vmatmul.mubr.bf16.gmra.mxu0 %v3193
        %v3978 = vpop.f32.mrf.mxu0
        %v3979 = vadd.f32 %v3766, %v3978
        %v3980 = vpop.f32.mrf.mxu0
        %v3981 = vpop.f32.mrf.mxu0
        %v3982 = vadd.f32 %v3766, %v3981
        %v3983 = vpop.f32.mrf.mxu0
        %3984 = vmatprep.mubr.bf16.mxu0 %v3720
        %3985 = vmatmul.mubr.bf16.gmra.mxu0 %v3194
        %v3986 = vpop.f32.mrf.mxu0
        %v3987 = vadd.f32 %v3766, %v3986
        %v3988 = vpop.f32.mrf.mxu0
        %v3989 = vpop.f32.mrf.mxu0
        %v3990 = vadd.f32 %v3766, %v3989
        %v3991 = vpop.f32.mrf.mxu0
        %3992 = vmatprep.mubr.bf16.mxu0 %v3721
        %3993 = vmatmul.mubr.bf16.gmra.mxu0 %v3195
        %v3994 = vpop.f32.mrf.mxu0
        %v3995 = vadd.f32 %v3766, %v3994
        %v3996 = vpop.f32.mrf.mxu0
        %v3997 = vpop.f32.mrf.mxu0
        %v3998 = vadd.f32 %v3766, %v3997
        %v3999 = vpop.f32.mrf.mxu0
        %4000 = vmatprep.mubr.bf16.mxu0 %v3722
        %4001 = vmatmul.mubr.bf16.gmra.mxu0 %v3196
        %v4002 = vpop.f32.mrf.mxu0
        %v4003 = vadd.f32 %v3766, %v4002
        %v4004 = vpop.f32.mrf.mxu0
        %v4005 = vpop.f32.mrf.mxu0
        %v4006 = vadd.f32 %v3766, %v4005
        %v4007 = vpop.f32.mrf.mxu0
        %4008 = vmatprep.mubr.bf16.mxu0 %v3723
        %4009 = vmatmul.mubr.bf16.gmra.mxu0 %v3197
        %v4010 = vpop.f32.mrf.mxu0
        %v4011 = vadd.f32 %v3766, %v4010
        %v4012 = vpop.f32.mrf.mxu0
        %v4013 = vpop.f32.mrf.mxu0
        %v4014 = vadd.f32 %v3766, %v4013
        %v4015 = vpop.f32.mrf.mxu0
        %4016 = vmatprep.mubr.bf16.mxu0 %v3724
        %4017 = vmatmul.mubr.bf16.gmra.mxu0 %v3198
        %v4018 = vpop.f32.mrf.mxu0
        %v4019 = vadd.f32 %v3766, %v4018
        %v4020 = vpop.f32.mrf.mxu0
        %v4021 = vpop.f32.mrf.mxu0
        %v4022 = vadd.f32 %v3766, %v4021
        %v4023 = vpop.f32.mrf.mxu0
        %4024 = vmatprep.mubr.bf16.mxu0 %v3725
        %4025 = vmatmul.mubr.bf16.gmra.mxu0 %v3199
        %v4026 = vpop.f32.mrf.mxu0
        %v4027 = vadd.f32 %v3766, %v4026
        %v4028 = vpop.f32.mrf.mxu0
        %v4029 = vpop.f32.mrf.mxu0
        %v4030 = vadd.f32 %v3766, %v4029
        %v4031 = vpop.f32.mrf.mxu0
        %4032 = vmatprep.mubr.bf16.mxu0 %v3726
        %4033 = vmatmul.mubr.bf16.gmra.mxu0 %v3200
        %v4034 = vpop.f32.mrf.mxu0
        %v4035 = vadd.f32 %v3766, %v4034
        %v4036 = vpop.f32.mrf.mxu0
        %v4037 = vpop.f32.mrf.mxu0
        %v4038 = vadd.f32 %v3766, %v4037
        %v4039 = vpop.f32.mrf.mxu0
        %4040 = vmatprep.mubr.bf16.mxu0 %v3727
        %4041 = vmatmul.mubr.bf16.gmra.mxu0 %v3201
        %v4042 = vpop.f32.mrf.mxu0
        %v4043 = vadd.f32 %v3766, %v4042
        %v4044 = vpop.f32.mrf.mxu0
        %v4045 = vpop.f32.mrf.mxu0
        %v4046 = vadd.f32 %v3766, %v4045
        %v4047 = vpop.f32.mrf.mxu0
        %4048 = vmatprep.mubr.bf16.mxu0 %v3728
        %4049 = vmatmul.mubr.bf16.gmra.mxu0 %v3202
        %v4050 = vpop.f32.mrf.mxu0
        %v4051 = vadd.f32 %v3766, %v4050
        %v4052 = vpop.f32.mrf.mxu0
        %v4053 = vpop.f32.mrf.mxu0
        %v4054 = vadd.f32 %v3766, %v4053
        %v4055 = vpop.f32.mrf.mxu0
        %4056 = vdwg.mxu0
        %v4057 = vmax.f32 %v3899, 0.0
        %v4058 = vmax.f32 %v3902, 0.0
        %v4059 = vmax.f32 %v3907, 0.0
        %v4060 = vmax.f32 %v3910, 0.0
        %v4061 = vmax.f32 %v3915, 0.0
        %v4062 = vmax.f32 %v3918, 0.0
        %v4063 = vmax.f32 %v3923, 0.0
        %v4064 = vmax.f32 %v3926, 0.0
        %v4065 = vmax.f32 %v3931, 0.0
        %v4066 = vmax.f32 %v3934, 0.0
        %v4067 = vmax.f32 %v3939, 0.0
        %v4068 = vmax.f32 %v3942, 0.0
        %v4069 = vmax.f32 %v3947, 0.0
        %v4070 = vmax.f32 %v3950, 0.0
        %v4071 = vmax.f32 %v3955, 0.0
        %v4072 = vmax.f32 %v3958, 0.0
        %v4073 = vmax.f32 %v3963, 0.0
        %v4074 = vmax.f32 %v3966, 0.0
        %v4075 = vmax.f32 %v3971, 0.0
        %v4076 = vmax.f32 %v3974, 0.0
        %v4077 = vmax.f32 %v3979, 0.0
        %v4078 = vmax.f32 %v3982, 0.0
        %v4079 = vmax.f32 %v3987, 0.0
        %v4080 = vmax.f32 %v3990, 0.0
        %v4081 = vmax.f32 %v3995, 0.0
        %v4082 = vmax.f32 %v3998, 0.0
        %v4083 = vmax.f32 %v4003, 0.0
        %v4084 = vmax.f32 %v4006, 0.0
        %v4085 = vmax.f32 %v4011, 0.0
        %v4086 = vmax.f32 %v4014, 0.0
        %v4087 = vmax.f32 %v4019, 0.0
        %v4088 = vmax.f32 %v4022, 0.0
        %v4089 = vmax.f32 %v4027, 0.0
        %v4090 = vmax.f32 %v4030, 0.0
        %v4091 = vmax.f32 %v4035, 0.0
        %v4092 = vmax.f32 %v4038, 0.0
        %v4093 = vmax.f32 %v4043, 0.0
        %v4094 = vmax.f32 %v4046, 0.0
        %v4095 = vmax.f32 %v4051, 0.0
        %v4096 = vmax.f32 %v4054, 0.0
        %v4097 = vpack.c.bf16 %v4058, %v4057
        %v4098 = vpack.c.bf16 %v4060, %v4059
        %v4099 = vpack.c.bf16 %v4062, %v4061
        %v4100 = vpack.c.bf16 %v4064, %v4063
        %v4101 = vpack.c.bf16 %v4066, %v4065
        %v4102 = vpack.c.bf16 %v4068, %v4067
        %v4103 = vpack.c.bf16 %v4070, %v4069
        %v4104 = vpack.c.bf16 %v4072, %v4071
        %v4105 = vpack.c.bf16 %v4074, %v4073
        %v4106 = vpack.c.bf16 %v4076, %v4075
        %v4107 = vpack.c.bf16 %v4078, %v4077
        %v4108 = vpack.c.bf16 %v4080, %v4079
        %v4109 = vpack.c.bf16 %v4082, %v4081
        %v4110 = vpack.c.bf16 %v4084, %v4083
        %v4111 = vpack.c.bf16 %v4086, %v4085
        %v4112 = vpack.c.bf16 %v4088, %v4087
        %v4113 = vpack.c.bf16 %v4090, %v4089
        %v4114 = vpack.c.bf16 %v4092, %v4091
        %v4115 = vpack.c.bf16 %v4094, %v4093
        %v4116 = vpack.c.bf16 %v4096, %v4095
        %v4117 = vld [vmem:[#allocation9] sm:$0xf]
        %v4118 = vld [vmem:[#allocation9 + $0x4] sm:$0xf]
        %v4119 = vld [vmem:[#allocation9 + $0x8] sm:$0xf]
        %v4120 = vld [vmem:[#allocation9 + $0xc] sm:$0xf]
        %v4121 = vld [vmem:[#allocation9 + $0x10] sm:$0xf]
        %v4122 = vld [vmem:[#allocation9 + $0x14] sm:$0xf]
        %v4123 = vld [vmem:[#allocation9 + $0x18] sm:$0xf]
        %v4124 = vld [vmem:[#allocation9 + $0x1c] sm:$0xf]
        %v4125 = vld [vmem:[#allocation9 + $0x20] sm:$0xf]
        %v4126 = vld [vmem:[#allocation9 + $0x24] sm:$0xf]
        %v4127 = vld [vmem:[#allocation9 + $0x28] sm:$0xf]
        %v4128 = vld [vmem:[#allocation9 + $0x2c] sm:$0xf]
        %v4129 = vld [vmem:[#allocation9 + $0x30] sm:$0xf]
        %v4130 = vld [vmem:[#allocation9 + $0x34] sm:$0xf]
        %v4131 = vld [vmem:[#allocation9 + $0x38] sm:$0xf]
        %v4132 = vld [vmem:[#allocation9 + $0x3c] sm:$0xf]
        %v4133 = vld [vmem:[%s11] sm:$0x1]
        %v4135 = vlaneseq
        %v4136 = vshrl.u32 %v4135, 7
        %v4137 = vsub.s32 0, %v4136
        %v4138 = vrot.slane %v4133, %v4137
        %v4156 = vunpack.c.l.b16 %v4117
        %v4157 = vunpack.c.l.b16 %v4118
        %v4158 = vunpack.c.l.b16 %v4119
        %v4159 = vunpack.c.l.b16 %v4120
        %v4160 = vunpack.c.l.b16 %v4121
        %v4161 = vunpack.c.l.b16 %v4122
        %v4162 = vunpack.c.l.b16 %v4123
        %v4163 = vunpack.c.l.b16 %v4124
        %v4164 = vunpack.c.l.b16 %v4125
        %v4165 = vunpack.c.l.b16 %v4126
        %v4166 = vunpack.c.l.b16 %v4127
        %v4167 = vunpack.c.l.b16 %v4128
        %v4168 = vunpack.c.l.b16 %v4129
        %v4169 = vunpack.c.l.b16 %v4130
        %v4170 = vunpack.c.l.b16 %v4131
        %v4171 = vunpack.c.l.b16 %v4132
        %v4172 = vpack.c.b16 %v4157, %v4156
        %v4173 = vpack.c.b16 %v4159, %v4158
        %v4174 = vpack.c.b16 %v4161, %v4160
        %v4175 = vpack.c.b16 %v4163, %v4162
        %v4176 = vpack.c.b16 %v4165, %v4164
        %v4177 = vpack.c.b16 %v4167, %v4166
        %v4178 = vpack.c.b16 %v4169, %v4168
        %v4179 = vpack.c.b16 %v4171, %v4170
        %4188 = vmatprep.subr.bf16.mxu0 0
        %4189 = vmatpush1.bf16.msra.mxu0 %v4179
        %4190 = vmatprep.subr.bf16.mxu0 0
        %4191 = vmatpush1.bf16.msra.mxu0 %v4178
        %4192 = vmatprep.subr.bf16.mxu0 0
        %4193 = vmatpush1.bf16.msra.mxu0 %v4177
        %4194 = vmatprep.subr.bf16.mxu0 0
        %4195 = vmatpush1.bf16.msra.mxu0 %v4176
        %4196 = vmatprep.subr.bf16.mxu0 0
        %4197 = vmatpush1.bf16.msra.mxu0 %v4175
        %4198 = vmatprep.subr.bf16.mxu0 0
        %4199 = vmatpush1.bf16.msra.mxu0 %v4174
        %4200 = vmatprep.subr.bf16.mxu0 0
        %4201 = vmatpush1.bf16.msra.mxu0 %v4173
        %4202 = vmatprep.subr.bf16.mxu0 0
        %4203 = vmatpush1.bf16.msra.mxu0 %v4172
        %4204 = vmatprep.subr.bf16.mxu0 0
        %4205 = vmatpush2.bf16.msra.mxu0 0
        %4206 = vmatprep.subr.bf16.mxu0 0
        %4207 = vmatpush2.bf16.msra.mxu0 0
        %4208 = vmatprep.subr.bf16.mxu0 0
        %4209 = vmatpush2.bf16.msra.mxu0 0
        %4210 = vmatprep.subr.bf16.mxu0 0
        %4211 = vmatpush2.bf16.msra.mxu0 0
        %4212 = vmatprep.subr.bf16.mxu0 0
        %4213 = vmatpush2.bf16.msra.mxu0 0
        %4214 = vmatprep.subr.bf16.mxu0 0
        %4215 = vmatpush2.bf16.msra.mxu0 0
        %4216 = vmatprep.subr.bf16.mxu0 0
        %4217 = vmatpush2.bf16.msra.mxu0 0
        %4218 = vmatprep.subr.bf16.mxu0 0
        %4219 = vmatpush2.bf16.msra.mxu0 0
        %4220 = vmatprep.mubr.bf16.mxu0 0
        %4221 = vmatmul.mubr.bf16.gmra.mxu0 %v4097
        %v4222 = vpop.f32.mrf.mxu0
        %v4223 = vadd.f32 %v4138, %v4222
        %v4224 = vpop.f32.mrf.mxu0
        %v4225 = vpop.f32.mrf.mxu0
        %v4226 = vadd.f32 %v4138, %v4225
        %v4227 = vpop.f32.mrf.mxu0
        %4228 = vmatprep.mubr.bf16.mxu0 0
        %4229 = vmatmul.mubr.bf16.gmra.mxu0 %v4098
        %v4230 = vpop.f32.mrf.mxu0
        %v4231 = vadd.f32 %v4138, %v4230
        %v4232 = vpop.f32.mrf.mxu0
        %v4233 = vpop.f32.mrf.mxu0
        %v4234 = vadd.f32 %v4138, %v4233
        %v4235 = vpop.f32.mrf.mxu0
        %4236 = vmatprep.mubr.bf16.mxu0 0
        %4237 = vmatmul.mubr.bf16.gmra.mxu0 %v4099
        %v4238 = vpop.f32.mrf.mxu0
        %v4239 = vadd.f32 %v4138, %v4238
        %v4240 = vpop.f32.mrf.mxu0
        %v4241 = vpop.f32.mrf.mxu0
        %v4242 = vadd.f32 %v4138, %v4241
        %v4243 = vpop.f32.mrf.mxu0
        %4244 = vmatprep.mubr.bf16.mxu0 0
        %4245 = vmatmul.mubr.bf16.gmra.mxu0 %v4100
        %v4246 = vpop.f32.mrf.mxu0
        %v4247 = vadd.f32 %v4138, %v4246
        %v4248 = vpop.f32.mrf.mxu0
        %v4249 = vpop.f32.mrf.mxu0
        %v4250 = vadd.f32 %v4138, %v4249
        %v4251 = vpop.f32.mrf.mxu0
        %4252 = vmatprep.mubr.bf16.mxu0 0
        %4253 = vmatmul.mubr.bf16.gmra.mxu0 %v4101
        %v4254 = vpop.f32.mrf.mxu0
        %v4255 = vadd.f32 %v4138, %v4254
        %v4256 = vpop.f32.mrf.mxu0
        %v4257 = vpop.f32.mrf.mxu0
        %v4258 = vadd.f32 %v4138, %v4257
        %v4259 = vpop.f32.mrf.mxu0
        %4260 = vmatprep.mubr.bf16.mxu0 0
        %4261 = vmatmul.mubr.bf16.gmra.mxu0 %v4102
        %v4262 = vpop.f32.mrf.mxu0
        %v4263 = vadd.f32 %v4138, %v4262
        %v4264 = vpop.f32.mrf.mxu0
        %v4265 = vpop.f32.mrf.mxu0
        %v4266 = vadd.f32 %v4138, %v4265
        %v4267 = vpop.f32.mrf.mxu0
        %4268 = vmatprep.mubr.bf16.mxu0 0
        %4269 = vmatmul.mubr.bf16.gmra.mxu0 %v4103
        %v4270 = vpop.f32.mrf.mxu0
        %v4271 = vadd.f32 %v4138, %v4270
        %v4272 = vpop.f32.mrf.mxu0
        %v4273 = vpop.f32.mrf.mxu0
        %v4274 = vadd.f32 %v4138, %v4273
        %v4275 = vpop.f32.mrf.mxu0
        %4276 = vmatprep.mubr.bf16.mxu0 0
        %4277 = vmatmul.mubr.bf16.gmra.mxu0 %v4104
        %v4278 = vpop.f32.mrf.mxu0
        %v4279 = vadd.f32 %v4138, %v4278
        %v4280 = vpop.f32.mrf.mxu0
        %v4281 = vpop.f32.mrf.mxu0
        %v4282 = vadd.f32 %v4138, %v4281
        %v4283 = vpop.f32.mrf.mxu0
        %4284 = vmatprep.mubr.bf16.mxu0 0
        %4285 = vmatmul.mubr.bf16.gmra.mxu0 %v4105
        %v4286 = vpop.f32.mrf.mxu0
        %v4287 = vadd.f32 %v4138, %v4286
        %v4288 = vpop.f32.mrf.mxu0
        %v4289 = vpop.f32.mrf.mxu0
        %v4290 = vadd.f32 %v4138, %v4289
        %v4291 = vpop.f32.mrf.mxu0
        %4292 = vmatprep.mubr.bf16.mxu0 0
        %4293 = vmatmul.mubr.bf16.gmra.mxu0 %v4106
        %v4294 = vpop.f32.mrf.mxu0
        %v4295 = vadd.f32 %v4138, %v4294
        %v4296 = vpop.f32.mrf.mxu0
        %v4297 = vpop.f32.mrf.mxu0
        %v4298 = vadd.f32 %v4138, %v4297
        %v4299 = vpop.f32.mrf.mxu0
        %4300 = vmatprep.mubr.bf16.mxu0 0
        %4301 = vmatmul.mubr.bf16.gmra.mxu0 %v4107
        %v4302 = vpop.f32.mrf.mxu0
        %v4303 = vadd.f32 %v4138, %v4302
        %v4304 = vpop.f32.mrf.mxu0
        %v4305 = vpop.f32.mrf.mxu0
        %v4306 = vadd.f32 %v4138, %v4305
        %v4307 = vpop.f32.mrf.mxu0
        %4308 = vmatprep.mubr.bf16.mxu0 0
        %4309 = vmatmul.mubr.bf16.gmra.mxu0 %v4108
        %v4310 = vpop.f32.mrf.mxu0
        %v4311 = vadd.f32 %v4138, %v4310
        %v4312 = vpop.f32.mrf.mxu0
        %v4313 = vpop.f32.mrf.mxu0
        %v4314 = vadd.f32 %v4138, %v4313
        %v4315 = vpop.f32.mrf.mxu0
        %4316 = vmatprep.mubr.bf16.mxu0 0
        %4317 = vmatmul.mubr.bf16.gmra.mxu0 %v4109
        %v4318 = vpop.f32.mrf.mxu0
        %v4319 = vadd.f32 %v4138, %v4318
        %v4320 = vpop.f32.mrf.mxu0
        %v4321 = vpop.f32.mrf.mxu0
        %v4322 = vadd.f32 %v4138, %v4321
        %v4323 = vpop.f32.mrf.mxu0
        %4324 = vmatprep.mubr.bf16.mxu0 0
        %4325 = vmatmul.mubr.bf16.gmra.mxu0 %v4110
        %v4326 = vpop.f32.mrf.mxu0
        %v4327 = vadd.f32 %v4138, %v4326
        %v4328 = vpop.f32.mrf.mxu0
        %v4329 = vpop.f32.mrf.mxu0
        %v4330 = vadd.f32 %v4138, %v4329
        %v4331 = vpop.f32.mrf.mxu0
        %4332 = vmatprep.mubr.bf16.mxu0 0
        %4333 = vmatmul.mubr.bf16.gmra.mxu0 %v4111
        %v4334 = vpop.f32.mrf.mxu0
        %v4335 = vadd.f32 %v4138, %v4334
        %v4336 = vpop.f32.mrf.mxu0
        %v4337 = vpop.f32.mrf.mxu0
        %v4338 = vadd.f32 %v4138, %v4337
        %v4339 = vpop.f32.mrf.mxu0
        %4340 = vmatprep.mubr.bf16.mxu0 0
        %4341 = vmatmul.mubr.bf16.gmra.mxu0 %v4112
        %v4342 = vpop.f32.mrf.mxu0
        %v4343 = vadd.f32 %v4138, %v4342
        %v4344 = vpop.f32.mrf.mxu0
        %v4345 = vpop.f32.mrf.mxu0
        %v4346 = vadd.f32 %v4138, %v4345
        %v4347 = vpop.f32.mrf.mxu0
        %4348 = vmatprep.mubr.bf16.mxu0 0
        %4349 = vmatmul.mubr.bf16.gmra.mxu0 %v4113
        %v4350 = vpop.f32.mrf.mxu0
        %v4351 = vadd.f32 %v4138, %v4350
        %v4352 = vpop.f32.mrf.mxu0
        %v4353 = vpop.f32.mrf.mxu0
        %v4354 = vadd.f32 %v4138, %v4353
        %v4355 = vpop.f32.mrf.mxu0
        %4356 = vmatprep.mubr.bf16.mxu0 0
        %4357 = vmatmul.mubr.bf16.gmra.mxu0 %v4114
        %v4358 = vpop.f32.mrf.mxu0
        %v4359 = vadd.f32 %v4138, %v4358
        %v4360 = vpop.f32.mrf.mxu0
        %v4361 = vpop.f32.mrf.mxu0
        %v4362 = vadd.f32 %v4138, %v4361
        %v4363 = vpop.f32.mrf.mxu0
        %4364 = vmatprep.mubr.bf16.mxu0 0
        %4365 = vmatmul.mubr.bf16.gmra.mxu0 %v4115
        %v4366 = vpop.f32.mrf.mxu0
        %v4367 = vadd.f32 %v4138, %v4366
        %v4368 = vpop.f32.mrf.mxu0
        %v4369 = vpop.f32.mrf.mxu0
        %v4370 = vadd.f32 %v4138, %v4369
        %v4371 = vpop.f32.mrf.mxu0
        %4372 = vmatprep.mubr.bf16.mxu0 0
        %4373 = vmatmul.mubr.bf16.gmra.mxu0 %v4116
        %v4374 = vpop.f32.mrf.mxu0
        %v4375 = vadd.f32 %v4138, %v4374
        %v4376 = vpop.f32.mrf.mxu0
        %v4377 = vpop.f32.mrf.mxu0
        %v4378 = vadd.f32 %v4138, %v4377
        %v4379 = vpop.f32.mrf.mxu0
        %4380 = vdwg.mxu0
        %v4381 = vmax.f32 %v4223, 0.0
        %v4382 = vmax.f32 %v4226, 0.0
        %v4383 = vmax.f32 %v4231, 0.0
        %v4384 = vmax.f32 %v4234, 0.0
        %v4385 = vmax.f32 %v4239, 0.0
        %v4386 = vmax.f32 %v4242, 0.0
        %v4387 = vmax.f32 %v4247, 0.0
        %v4388 = vmax.f32 %v4250, 0.0
        %v4389 = vmax.f32 %v4255, 0.0
        %v4390 = vmax.f32 %v4258, 0.0
        %v4391 = vmax.f32 %v4263, 0.0
        %v4392 = vmax.f32 %v4266, 0.0
        %v4393 = vmax.f32 %v4271, 0.0
        %v4394 = vmax.f32 %v4274, 0.0
        %v4395 = vmax.f32 %v4279, 0.0
        %v4396 = vmax.f32 %v4282, 0.0
        %v4397 = vmax.f32 %v4287, 0.0
        %v4398 = vmax.f32 %v4290, 0.0
        %v4399 = vmax.f32 %v4295, 0.0
        %v4400 = vmax.f32 %v4298, 0.0
        %v4401 = vmax.f32 %v4303, 0.0
        %v4402 = vmax.f32 %v4306, 0.0
        %v4403 = vmax.f32 %v4311, 0.0
        %v4404 = vmax.f32 %v4314, 0.0
        %v4405 = vmax.f32 %v4319, 0.0
        %v4406 = vmax.f32 %v4322, 0.0
        %v4407 = vmax.f32 %v4327, 0.0
        %v4408 = vmax.f32 %v4330, 0.0
        %v4409 = vmax.f32 %v4335, 0.0
        %v4410 = vmax.f32 %v4338, 0.0
        %v4411 = vmax.f32 %v4343, 0.0
        %v4412 = vmax.f32 %v4346, 0.0
        %v4413 = vmax.f32 %v4351, 0.0
        %v4414 = vmax.f32 %v4354, 0.0
        %v4415 = vmax.f32 %v4359, 0.0
        %v4416 = vmax.f32 %v4362, 0.0
        %v4417 = vmax.f32 %v4367, 0.0
        %v4418 = vmax.f32 %v4370, 0.0
        %v4419 = vmax.f32 %v4375, 0.0
        %v4420 = vmax.f32 %v4378, 0.0
        %v4421 = vld [vmem:[%s656] sm:$0xff]
        %v4422 = vld [vmem:[%s656 + $0x8] sm:$0xff]
        %v4423 = vld [vmem:[%s656 + $0x10] sm:$0xf]
        %v4424 = vlaneseq
        %v4425 = vshrl.u32 %v4424, 7
        %v4426 = vsub.s32 0, %v4425
        %v4427 = vrot.slane %v4421, %v4426
        %4429 = vbcast.lane.b32.xlu0 %v4427, 256
        %v4430 = vpop.permute.xlu0 %4429
        %s4432 = sor.u32 256, 8
        %4433 = vbcast.lane.b32.xlu0 %v4427, %s4432
        %v4434 = vpop.permute.xlu0 %4433
        %v4435 = vlaneseq
        %v4436 = vshrl.u32 %v4435, 7
        %v4437 = vsub.s32 1, %v4436
        %v4438 = vrot.slane %v4421, %v4437
        %4440 = vbcast.lane.b32.xlu0 %v4438, 256
        %v4441 = vpop.permute.xlu0 %4440
        %s4443 = sor.u32 256, 8
        %4444 = vbcast.lane.b32.xlu0 %v4438, %s4443
        %v4445 = vpop.permute.xlu0 %4444
        %v4446 = vlaneseq
        %v4447 = vshrl.u32 %v4446, 7
        %v4448 = vsub.s32 2, %v4447
        %v4449 = vrot.slane %v4421, %v4448
        %4451 = vbcast.lane.b32.xlu0 %v4449, 256
        %v4452 = vpop.permute.xlu0 %4451
        %s4454 = sor.u32 256, 8
        %4455 = vbcast.lane.b32.xlu0 %v4449, %s4454
        %v4456 = vpop.permute.xlu0 %4455
        %v4457 = vlaneseq
        %v4458 = vshrl.u32 %v4457, 7
        %v4459 = vsub.s32 3, %v4458
        %v4460 = vrot.slane %v4421, %v4459
        %4462 = vbcast.lane.b32.xlu0 %v4460, 256
        %v4463 = vpop.permute.xlu0 %4462
        %s4465 = sor.u32 256, 8
        %4466 = vbcast.lane.b32.xlu0 %v4460, %s4465
        %v4467 = vpop.permute.xlu0 %4466
        %v4468 = vlaneseq
        %v4469 = vshrl.u32 %v4468, 7
        %v4470 = vsub.s32 4, %v4469
        %v4471 = vrot.slane %v4421, %v4470
        %4473 = vbcast.lane.b32.xlu0 %v4471, 256
        %v4474 = vpop.permute.xlu0 %4473
        %s4476 = sor.u32 256, 8
        %4477 = vbcast.lane.b32.xlu0 %v4471, %s4476
        %v4478 = vpop.permute.xlu0 %4477
        %v4479 = vlaneseq
        %v4480 = vshrl.u32 %v4479, 7
        %v4481 = vsub.s32 5, %v4480
        %v4482 = vrot.slane %v4421, %v4481
        %4484 = vbcast.lane.b32.xlu0 %v4482, 256
        %v4485 = vpop.permute.xlu0 %4484
        %s4487 = sor.u32 256, 8
        %4488 = vbcast.lane.b32.xlu0 %v4482, %s4487
        %v4489 = vpop.permute.xlu0 %4488
        %v4490 = vlaneseq
        %v4491 = vshrl.u32 %v4490, 7
        %v4492 = vsub.s32 6, %v4491
        %v4493 = vrot.slane %v4421, %v4492
        %4495 = vbcast.lane.b32.xlu0 %v4493, 256
        %v4496 = vpop.permute.xlu0 %4495
        %s4498 = sor.u32 256, 8
        %4499 = vbcast.lane.b32.xlu0 %v4493, %s4498
        %v4500 = vpop.permute.xlu0 %4499
        %v4501 = vlaneseq
        %v4502 = vshrl.u32 %v4501, 7
        %v4503 = vsub.s32 7, %v4502
        %v4504 = vrot.slane %v4421, %v4503
        %4506 = vbcast.lane.b32.xlu0 %v4504, 256
        %v4507 = vpop.permute.xlu0 %4506
        %s4509 = sor.u32 256, 8
        %4510 = vbcast.lane.b32.xlu0 %v4504, %s4509
        %v4511 = vpop.permute.xlu0 %4510
        %v4512 = vlaneseq
        %v4513 = vshrl.u32 %v4512, 7
        %v4514 = vsub.s32 0, %v4513
        %v4515 = vrot.slane %v4422, %v4514
        %4517 = vbcast.lane.b32.xlu0 %v4515, 256
        %v4518 = vpop.permute.xlu0 %4517
        %s4520 = sor.u32 256, 8
        %4521 = vbcast.lane.b32.xlu0 %v4515, %s4520
        %v4522 = vpop.permute.xlu0 %4521
        %v4523 = vlaneseq
        %v4524 = vshrl.u32 %v4523, 7
        %v4525 = vsub.s32 1, %v4524
        %v4526 = vrot.slane %v4422, %v4525
        %4528 = vbcast.lane.b32.xlu0 %v4526, 256
        %v4529 = vpop.permute.xlu0 %4528
        %s4531 = sor.u32 256, 8
        %4532 = vbcast.lane.b32.xlu0 %v4526, %s4531
        %v4533 = vpop.permute.xlu0 %4532
        %v4534 = vlaneseq
        %v4535 = vshrl.u32 %v4534, 7
        %v4536 = vsub.s32 2, %v4535
        %v4537 = vrot.slane %v4422, %v4536
        %4539 = vbcast.lane.b32.xlu0 %v4537, 256
        %v4540 = vpop.permute.xlu0 %4539
        %s4542 = sor.u32 256, 8
        %4543 = vbcast.lane.b32.xlu0 %v4537, %s4542
        %v4544 = vpop.permute.xlu0 %4543
        %v4545 = vlaneseq
        %v4546 = vshrl.u32 %v4545, 7
        %v4547 = vsub.s32 3, %v4546
        %v4548 = vrot.slane %v4422, %v4547
        %4550 = vbcast.lane.b32.xlu0 %v4548, 256
        %v4551 = vpop.permute.xlu0 %4550
        %s4553 = sor.u32 256, 8
        %4554 = vbcast.lane.b32.xlu0 %v4548, %s4553
        %v4555 = vpop.permute.xlu0 %4554
        %v4556 = vlaneseq
        %v4557 = vshrl.u32 %v4556, 7
        %v4558 = vsub.s32 4, %v4557
        %v4559 = vrot.slane %v4422, %v4558
        %4561 = vbcast.lane.b32.xlu0 %v4559, 256
        %v4562 = vpop.permute.xlu0 %4561
        %s4564 = sor.u32 256, 8
        %4565 = vbcast.lane.b32.xlu0 %v4559, %s4564
        %v4566 = vpop.permute.xlu0 %4565
        %v4567 = vlaneseq
        %v4568 = vshrl.u32 %v4567, 7
        %v4569 = vsub.s32 5, %v4568
        %v4570 = vrot.slane %v4422, %v4569
        %4572 = vbcast.lane.b32.xlu0 %v4570, 256
        %v4573 = vpop.permute.xlu0 %4572
        %s4575 = sor.u32 256, 8
        %4576 = vbcast.lane.b32.xlu0 %v4570, %s4575
        %v4577 = vpop.permute.xlu0 %4576
        %v4578 = vlaneseq
        %v4579 = vshrl.u32 %v4578, 7
        %v4580 = vsub.s32 6, %v4579
        %v4581 = vrot.slane %v4422, %v4580
        %4583 = vbcast.lane.b32.xlu0 %v4581, 256
        %v4584 = vpop.permute.xlu0 %4583
        %s4586 = sor.u32 256, 8
        %4587 = vbcast.lane.b32.xlu0 %v4581, %s4586
        %v4588 = vpop.permute.xlu0 %4587
        %v4589 = vlaneseq
        %v4590 = vshrl.u32 %v4589, 7
        %v4591 = vsub.s32 7, %v4590
        %v4592 = vrot.slane %v4422, %v4591
        %4594 = vbcast.lane.b32.xlu0 %v4592, 256
        %v4595 = vpop.permute.xlu0 %4594
        %s4597 = sor.u32 256, 8
        %4598 = vbcast.lane.b32.xlu0 %v4592, %s4597
        %v4599 = vpop.permute.xlu0 %4598
        %v4600 = vlaneseq
        %v4601 = vshrl.u32 %v4600, 7
        %v4602 = vsub.s32 0, %v4601
        %v4603 = vrot.slane %v4423, %v4602
        %4605 = vbcast.lane.b32.xlu0 %v4603, 256
        %v4606 = vpop.permute.xlu0 %4605
        %s4608 = sor.u32 256, 8
        %4609 = vbcast.lane.b32.xlu0 %v4603, %s4608
        %v4610 = vpop.permute.xlu0 %4609
        %v4611 = vlaneseq
        %v4612 = vshrl.u32 %v4611, 7
        %v4613 = vsub.s32 1, %v4612
        %v4614 = vrot.slane %v4423, %v4613
        %4616 = vbcast.lane.b32.xlu0 %v4614, 256
        %v4617 = vpop.permute.xlu0 %4616
        %s4619 = sor.u32 256, 8
        %4620 = vbcast.lane.b32.xlu0 %v4614, %s4619
        %v4621 = vpop.permute.xlu0 %4620
        %v4622 = vlaneseq
        %v4623 = vshrl.u32 %v4622, 7
        %v4624 = vsub.s32 2, %v4623
        %v4625 = vrot.slane %v4423, %v4624
        %4627 = vbcast.lane.b32.xlu0 %v4625, 256
        %v4628 = vpop.permute.xlu0 %4627
        %s4630 = sor.u32 256, 8
        %4631 = vbcast.lane.b32.xlu0 %v4625, %s4630
        %v4632 = vpop.permute.xlu0 %4631
        %v4633 = vlaneseq
        %v4634 = vshrl.u32 %v4633, 7
        %v4635 = vsub.s32 3, %v4634
        %v4636 = vrot.slane %v4423, %v4635
        %4638 = vbcast.lane.b32.xlu0 %v4636, 256
        %v4639 = vpop.permute.xlu0 %4638
        %s4641 = sor.u32 256, 8
        %4642 = vbcast.lane.b32.xlu0 %v4636, %s4641
        %v4643 = vpop.permute.xlu0 %4642
        %v4644 = vmul.f32 %v4381, %v4430
        %v4645 = vmul.f32 %v4382, %v4434
        %v4646 = vmul.f32 %v4383, %v4441
        %v4647 = vmul.f32 %v4384, %v4445
        %v4648 = vmul.f32 %v4385, %v4452
        %v4649 = vmul.f32 %v4386, %v4456
        %v4650 = vmul.f32 %v4387, %v4463
        %v4651 = vmul.f32 %v4388, %v4467
        %v4652 = vmul.f32 %v4389, %v4474
        %v4653 = vmul.f32 %v4390, %v4478
        %v4654 = vmul.f32 %v4391, %v4485
        %v4655 = vmul.f32 %v4392, %v4489
        %v4656 = vmul.f32 %v4393, %v4496
        %v4657 = vmul.f32 %v4394, %v4500
        %v4658 = vmul.f32 %v4395, %v4507
        %v4659 = vmul.f32 %v4396, %v4511
        %v4660 = vmul.f32 %v4397, %v4518
        %v4661 = vmul.f32 %v4398, %v4522
        %v4662 = vmul.f32 %v4399, %v4529
        %v4663 = vmul.f32 %v4400, %v4533
        %v4664 = vmul.f32 %v4401, %v4540
        %v4665 = vmul.f32 %v4402, %v4544
        %v4666 = vmul.f32 %v4403, %v4551
        %v4667 = vmul.f32 %v4404, %v4555
        %v4668 = vmul.f32 %v4405, %v4562
        %v4669 = vmul.f32 %v4406, %v4566
        %v4670 = vmul.f32 %v4407, %v4573
        %v4671 = vmul.f32 %v4408, %v4577
        %v4672 = vmul.f32 %v4409, %v4584
        %v4673 = vmul.f32 %v4410, %v4588
        %v4674 = vmul.f32 %v4411, %v4595
        %v4675 = vmul.f32 %v4412, %v4599
        %v4676 = vmul.f32 %v4413, %v4606
        %v4677 = vmul.f32 %v4414, %v4610
        %v4678 = vmul.f32 %v4415, %v4617
        %v4679 = vmul.f32 %v4416, %v4621
        %v4680 = vmul.f32 %v4417, %v4628
        %v4681 = vmul.f32 %v4418, %v4632
        %v4682 = vmul.f32 %v4419, %v4639
        %v4683 = vmul.f32 %v4420, %v4643
        %v4684 = vrot.slane %v4644, 4
        %v4685 = vadd.f32 %v4644, %v4684
        %v4686 = vrot.slane %v4685, 2
        %v4687 = vadd.f32 %v4685, %v4686
        %v4688 = vrot.slane %v4687, 1
        %v4689 = vadd.f32 %v4687, %v4688
        %v4690 = vrot.slane %v4646, 4
        %v4691 = vadd.f32 %v4646, %v4690
        %v4692 = vrot.slane %v4691, 2
        %v4693 = vadd.f32 %v4691, %v4692
        %v4694 = vrot.slane %v4693, 1
        %v4695 = vadd.f32 %v4693, %v4694
        %v4696 = vrot.slane %v4648, 4
        %v4697 = vadd.f32 %v4648, %v4696
        %v4698 = vrot.slane %v4697, 2
        %v4699 = vadd.f32 %v4697, %v4698
        %v4700 = vrot.slane %v4699, 1
        %v4701 = vadd.f32 %v4699, %v4700
        %v4702 = vrot.slane %v4650, 4
        %v4703 = vadd.f32 %v4650, %v4702
        %v4704 = vrot.slane %v4703, 2
        %v4705 = vadd.f32 %v4703, %v4704
        %v4706 = vrot.slane %v4705, 1
        %v4707 = vadd.f32 %v4705, %v4706
        %v4708 = vrot.slane %v4652, 4
        %v4709 = vadd.f32 %v4652, %v4708
        %v4710 = vrot.slane %v4709, 2
        %v4711 = vadd.f32 %v4709, %v4710
        %v4712 = vrot.slane %v4711, 1
        %v4713 = vadd.f32 %v4711, %v4712
        %v4714 = vrot.slane %v4654, 4
        %v4715 = vadd.f32 %v4654, %v4714
        %v4716 = vrot.slane %v4715, 2
        %v4717 = vadd.f32 %v4715, %v4716
        %v4718 = vrot.slane %v4717, 1
        %v4719 = vadd.f32 %v4717, %v4718
        %v4720 = vrot.slane %v4656, 4
        %v4721 = vadd.f32 %v4656, %v4720
        %v4722 = vrot.slane %v4721, 2
        %v4723 = vadd.f32 %v4721, %v4722
        %v4724 = vrot.slane %v4723, 1
        %v4725 = vadd.f32 %v4723, %v4724
        %v4726 = vrot.slane %v4658, 4
        %v4727 = vadd.f32 %v4658, %v4726
        %v4728 = vrot.slane %v4727, 2
        %v4729 = vadd.f32 %v4727, %v4728
        %v4730 = vrot.slane %v4729, 1
        %v4731 = vadd.f32 %v4729, %v4730
        %v4732 = vrot.slane %v4660, 4
        %v4733 = vadd.f32 %v4660, %v4732
        %v4734 = vrot.slane %v4733, 2
        %v4735 = vadd.f32 %v4733, %v4734
        %v4736 = vrot.slane %v4735, 1
        %v4737 = vadd.f32 %v4735, %v4736
        %v4738 = vrot.slane %v4662, 4
        %v4739 = vadd.f32 %v4662, %v4738
        %v4740 = vrot.slane %v4739, 2
        %v4741 = vadd.f32 %v4739, %v4740
        %v4742 = vrot.slane %v4741, 1
        %v4743 = vadd.f32 %v4741, %v4742
        %v4744 = vrot.slane %v4664, 4
        %v4745 = vadd.f32 %v4664, %v4744
        %v4746 = vrot.slane %v4745, 2
        %v4747 = vadd.f32 %v4745, %v4746
        %v4748 = vrot.slane %v4747, 1
        %v4749 = vadd.f32 %v4747, %v4748
        %v4750 = vrot.slane %v4666, 4
        %v4751 = vadd.f32 %v4666, %v4750
        %v4752 = vrot.slane %v4751, 2
        %v4753 = vadd.f32 %v4751, %v4752
        %v4754 = vrot.slane %v4753, 1
        %v4755 = vadd.f32 %v4753, %v4754
        %v4756 = vrot.slane %v4668, 4
        %v4757 = vadd.f32 %v4668, %v4756
        %v4758 = vrot.slane %v4757, 2
        %v4759 = vadd.f32 %v4757, %v4758
        %v4760 = vrot.slane %v4759, 1
        %v4761 = vadd.f32 %v4759, %v4760
        %v4762 = vrot.slane %v4670, 4
        %v4763 = vadd.f32 %v4670, %v4762
        %v4764 = vrot.slane %v4763, 2
        %v4765 = vadd.f32 %v4763, %v4764
        %v4766 = vrot.slane %v4765, 1
        %v4767 = vadd.f32 %v4765, %v4766
        %v4768 = vrot.slane %v4672, 4
        %v4769 = vadd.f32 %v4672, %v4768
        %v4770 = vrot.slane %v4769, 2
        %v4771 = vadd.f32 %v4769, %v4770
        %v4772 = vrot.slane %v4771, 1
        %v4773 = vadd.f32 %v4771, %v4772
        %v4774 = vrot.slane %v4674, 4
        %v4775 = vadd.f32 %v4674, %v4774
        %v4776 = vrot.slane %v4775, 2
        %v4777 = vadd.f32 %v4775, %v4776
        %v4778 = vrot.slane %v4777, 1
        %v4779 = vadd.f32 %v4777, %v4778
        %v4780 = vrot.slane %v4676, 4
        %v4781 = vadd.f32 %v4676, %v4780
        %v4782 = vrot.slane %v4781, 2
        %v4783 = vadd.f32 %v4781, %v4782
        %v4784 = vrot.slane %v4783, 1
        %v4785 = vadd.f32 %v4783, %v4784
        %v4786 = vrot.slane %v4678, 4
        %v4787 = vadd.f32 %v4678, %v4786
        %v4788 = vrot.slane %v4787, 2
        %v4789 = vadd.f32 %v4787, %v4788
        %v4790 = vrot.slane %v4789, 1
        %v4791 = vadd.f32 %v4789, %v4790
        %v4792 = vrot.slane %v4680, 4
        %v4793 = vadd.f32 %v4680, %v4792
        %v4794 = vrot.slane %v4793, 2
        %v4795 = vadd.f32 %v4793, %v4794
        %v4796 = vrot.slane %v4795, 1
        %v4797 = vadd.f32 %v4795, %v4796
        %v4798 = vrot.slane %v4682, 4
        %v4799 = vadd.f32 %v4682, %v4798
        %v4800 = vrot.slane %v4799, 2
        %v4801 = vadd.f32 %v4799, %v4800
        %v4802 = vrot.slane %v4801, 1
        %v4803 = vadd.f32 %v4801, %v4802
        %v4804 = vrot.slane %v4645, 4
        %v4805 = vadd.f32 %v4645, %v4804
        %v4806 = vrot.slane %v4805, 2
        %v4807 = vadd.f32 %v4805, %v4806
        %v4808 = vrot.slane %v4807, 1
        %v4809 = vadd.f32 %v4807, %v4808
        %v4810 = vrot.slane %v4647, 4
        %v4811 = vadd.f32 %v4647, %v4810
        %v4812 = vrot.slane %v4811, 2
        %v4813 = vadd.f32 %v4811, %v4812
        %v4814 = vrot.slane %v4813, 1
        %v4815 = vadd.f32 %v4813, %v4814
        %v4816 = vrot.slane %v4649, 4
        %v4817 = vadd.f32 %v4649, %v4816
        %v4818 = vrot.slane %v4817, 2
        %v4819 = vadd.f32 %v4817, %v4818
        %v4820 = vrot.slane %v4819, 1
        %v4821 = vadd.f32 %v4819, %v4820
        %v4822 = vrot.slane %v4651, 4
        %v4823 = vadd.f32 %v4651, %v4822
        %v4824 = vrot.slane %v4823, 2
        %v4825 = vadd.f32 %v4823, %v4824
        %v4826 = vrot.slane %v4825, 1
        %v4827 = vadd.f32 %v4825, %v4826
        %v4828 = vrot.slane %v4653, 4
        %v4829 = vadd.f32 %v4653, %v4828
        %v4830 = vrot.slane %v4829, 2
        %v4831 = vadd.f32 %v4829, %v4830
        %v4832 = vrot.slane %v4831, 1
        %v4833 = vadd.f32 %v4831, %v4832
        %v4834 = vrot.slane %v4655, 4
        %v4835 = vadd.f32 %v4655, %v4834
        %v4836 = vrot.slane %v4835, 2
        %v4837 = vadd.f32 %v4835, %v4836
        %v4838 = vrot.slane %v4837, 1
        %v4839 = vadd.f32 %v4837, %v4838
        %v4840 = vrot.slane %v4657, 4
        %v4841 = vadd.f32 %v4657, %v4840
        %v4842 = vrot.slane %v4841, 2
        %v4843 = vadd.f32 %v4841, %v4842
        %v4844 = vrot.slane %v4843, 1
        %v4845 = vadd.f32 %v4843, %v4844
        %v4846 = vrot.slane %v4659, 4
        %v4847 = vadd.f32 %v4659, %v4846
        %v4848 = vrot.slane %v4847, 2
        %v4849 = vadd.f32 %v4847, %v4848
        %v4850 = vrot.slane %v4849, 1
        %v4851 = vadd.f32 %v4849, %v4850
        %v4852 = vrot.slane %v4661, 4
        %v4853 = vadd.f32 %v4661, %v4852
        %v4854 = vrot.slane %v4853, 2
        %v4855 = vadd.f32 %v4853, %v4854
        %v4856 = vrot.slane %v4855, 1
        %v4857 = vadd.f32 %v4855, %v4856
        %v4858 = vrot.slane %v4663, 4
        %v4859 = vadd.f32 %v4663, %v4858
        %v4860 = vrot.slane %v4859, 2
        %v4861 = vadd.f32 %v4859, %v4860
        %v4862 = vrot.slane %v4861, 1
        %v4863 = vadd.f32 %v4861, %v4862
        %v4864 = vrot.slane %v4665, 4
        %v4865 = vadd.f32 %v4665, %v4864
        %v4866 = vrot.slane %v4865, 2
        %v4867 = vadd.f32 %v4865, %v4866
        %v4868 = vrot.slane %v4867, 1
        %v4869 = vadd.f32 %v4867, %v4868
        %v4870 = vrot.slane %v4667, 4
        %v4871 = vadd.f32 %v4667, %v4870
        %v4872 = vrot.slane %v4871, 2
        %v4873 = vadd.f32 %v4871, %v4872
        %v4874 = vrot.slane %v4873, 1
        %v4875 = vadd.f32 %v4873, %v4874
        %v4876 = vrot.slane %v4669, 4
        %v4877 = vadd.f32 %v4669, %v4876
        %v4878 = vrot.slane %v4877, 2
        %v4879 = vadd.f32 %v4877, %v4878
        %v4880 = vrot.slane %v4879, 1
        %v4881 = vadd.f32 %v4879, %v4880
        %v4882 = vrot.slane %v4671, 4
        %v4883 = vadd.f32 %v4671, %v4882
        %v4884 = vrot.slane %v4883, 2
        %v4885 = vadd.f32 %v4883, %v4884
        %v4886 = vrot.slane %v4885, 1
        %v4887 = vadd.f32 %v4885, %v4886
        %v4888 = vrot.slane %v4673, 4
        %v4889 = vadd.f32 %v4673, %v4888
        %v4890 = vrot.slane %v4889, 2
        %v4891 = vadd.f32 %v4889, %v4890
        %v4892 = vrot.slane %v4891, 1
        %v4893 = vadd.f32 %v4891, %v4892
        %v4894 = vrot.slane %v4675, 4
        %v4895 = vadd.f32 %v4675, %v4894
        %v4896 = vrot.slane %v4895, 2
        %v4897 = vadd.f32 %v4895, %v4896
        %v4898 = vrot.slane %v4897, 1
        %v4899 = vadd.f32 %v4897, %v4898
        %v4900 = vrot.slane %v4677, 4
        %v4901 = vadd.f32 %v4677, %v4900
        %v4902 = vrot.slane %v4901, 2
        %v4903 = vadd.f32 %v4901, %v4902
        %v4904 = vrot.slane %v4903, 1
        %v4905 = vadd.f32 %v4903, %v4904
        %v4906 = vrot.slane %v4679, 4
        %v4907 = vadd.f32 %v4679, %v4906
        %v4908 = vrot.slane %v4907, 2
        %v4909 = vadd.f32 %v4907, %v4908
        %v4910 = vrot.slane %v4909, 1
        %v4911 = vadd.f32 %v4909, %v4910
        %v4912 = vrot.slane %v4681, 4
        %v4913 = vadd.f32 %v4681, %v4912
        %v4914 = vrot.slane %v4913, 2
        %v4915 = vadd.f32 %v4913, %v4914
        %v4916 = vrot.slane %v4915, 1
        %v4917 = vadd.f32 %v4915, %v4916
        %v4918 = vrot.slane %v4683, 4
        %v4919 = vadd.f32 %v4683, %v4918
        %v4920 = vrot.slane %v4919, 2
        %v4921 = vadd.f32 %v4919, %v4920
        %v4922 = vrot.slane %v4921, 1
        %v4923 = vadd.f32 %v4921, %v4922
        %vm4944 = vcmask 1041409
        %v4945 = vsel %vm4944, %v4695, %v4689
        %vm4946 = vcmask 1042434
        %v4947 = vsel %vm4946, %v4701, %v4945
        %vm4948 = vcmask 1043459
        %v4949 = vsel %vm4948, %v4707, %v4947
        %vm4950 = vcmask 1044484
        %v4951 = vsel %vm4950, %v4713, %v4949
        %vm4952 = vcmask 1045509
        %v4953 = vsel %vm4952, %v4719, %v4951
        %vm4954 = vcmask 1046534
        %v4955 = vsel %vm4954, %v4725, %v4953
        %vm4956 = vcmask 1047559
        %v4957 = vsel %vm4956, %v4731, %v4955
        %v4958 = vsel %vm4944, %v4743, %v4737
        %v4959 = vsel %vm4946, %v4749, %v4958
        %v4960 = vsel %vm4948, %v4755, %v4959
        %v4961 = vsel %vm4950, %v4761, %v4960
        %v4962 = vsel %vm4952, %v4767, %v4961
        %v4963 = vsel %vm4954, %v4773, %v4962
        %v4964 = vsel %vm4956, %v4779, %v4963
        %v4965 = vsel %vm4944, %v4791, %v4785
        %v4966 = vsel %vm4946, %v4797, %v4965
        %v4967 = vsel %vm4948, %v4803, %v4966
        %v4991 = vsel %vm4944, %v4815, %v4809
        %v4992 = vsel %vm4946, %v4821, %v4991
        %v4993 = vsel %vm4948, %v4827, %v4992
        %v4994 = vsel %vm4950, %v4833, %v4993
        %v4995 = vsel %vm4952, %v4839, %v4994
        %v4996 = vsel %vm4954, %v4845, %v4995
        %v4997 = vsel %vm4956, %v4851, %v4996
        %v4998 = vsel %vm4944, %v4863, %v4857
        %v4999 = vsel %vm4946, %v4869, %v4998
        %v5000 = vsel %vm4948, %v4875, %v4999
        %v5001 = vsel %vm4950, %v4881, %v5000
        %v5002 = vsel %vm4952, %v4887, %v5001
        %v5003 = vsel %vm4954, %v4893, %v5002
        %v5004 = vsel %vm4956, %v4899, %v5003
        %v5005 = vsel %vm4944, %v4911, %v4905
        %v5006 = vsel %vm4946, %v4917, %v5005
        %v5007 = vsel %vm4948, %v4923, %v5006
        %v5011 = vpack.c.bf16 %v4964, %v4957
        %v5012 = vpack.c.bf16 %v5004, %v4997
        %v5013 = vpack.c.bf16 %v4967, %v4967
        %v5014 = vpack.c.bf16 %v5007, %v5007
        %v5015 = vld [vmem:[#allocation10] sm:$0xf]
        %v5016 = vld [vmem:[#allocation10 + $0x4] sm:$0xf]
        %v5017 = vld [vmem:[#allocation10 + $0x8] sm:$0xf]
        %v5018 = vld [vmem:[#allocation10 + $0xc] sm:$0xf]
        %v5019 = vld [vmem:[#allocation10 + $0x10] sm:$0xf]
        %v5020 = vld [vmem:[#allocation10 + $0x14] sm:$0xf]
        %v5021 = vld [vmem:[#allocation10 + $0x18] sm:$0xf]
        %v5022 = vld [vmem:[#allocation10 + $0x1c] sm:$0xf]
        %v5023 = vld [vmem:[#allocation10 + $0x20] sm:$0xf]
        %v5024 = vld [vmem:[#allocation10 + $0x24] sm:$0xf]
        %v5025 = vld [vmem:[#allocation10 + $0x28] sm:$0xf]
        %v5026 = vld [vmem:[#allocation10 + $0x2c] sm:$0xf]
        %v5027 = vld [vmem:[#allocation10 + $0x30] sm:$0xf]
        %v5028 = vld [vmem:[#allocation10 + $0x34] sm:$0xf]
        %v5029 = vld [vmem:[#allocation10 + $0x38] sm:$0xf]
        %v5030 = vld [vmem:[#allocation10 + $0x3c] sm:$0xf]
        %v5031 = vld [vmem:[#allocation10 + $0x40] sm:$0xf]
        %v5032 = vld [vmem:[#allocation10 + $0x44] sm:$0xf]
        %v5033 = vld [vmem:[#allocation10 + $0x48] sm:$0xf]
        %v5034 = vld [vmem:[#allocation10 + $0x4c] sm:$0xf]
        %v5035 = vld [vmem:[#allocation10 + $0x50] sm:$0xf]
        %v5036 = vld [vmem:[#allocation10 + $0x54] sm:$0xf]
        %v5037 = vld [vmem:[#allocation10 + $0x58] sm:$0xf]
        %v5038 = vld [vmem:[#allocation10 + $0x5c] sm:$0xf]
        %v5039 = vld [vmem:[#allocation10 + $0x60] sm:$0xf]
        %v5040 = vld [vmem:[#allocation10 + $0x64] sm:$0xf]
        %v5041 = vld [vmem:[#allocation10 + $0x68] sm:$0xf]
        %v5042 = vld [vmem:[#allocation10 + $0x6c] sm:$0xf]
        %v5043 = vld [vmem:[#allocation10 + $0x70] sm:$0xf]
        %v5044 = vld [vmem:[#allocation10 + $0x74] sm:$0xf]
        %v5045 = vld [vmem:[#allocation10 + $0x78] sm:$0xf]
        %v5046 = vld [vmem:[#allocation10 + $0x7c] sm:$0xf]
        %v5047 = vld [vmem:[%s13] sm:$0x1]
        %v5049 = vlaneseq
        %v5050 = vshrl.u32 %v5049, 7
        %v5051 = vsub.s32 0, %v5050
        %v5052 = vrot.slane %v5047, %v5051
        %v5086 = vunpack.c.l.b16 %v5015
        %v5087 = vunpack.c.l.b16 %v5016
        %v5088 = vunpack.c.l.b16 %v5017
        %v5089 = vunpack.c.l.b16 %v5018
        %v5090 = vunpack.c.l.b16 %v5019
        %v5091 = vunpack.c.l.b16 %v5020
        %v5092 = vunpack.c.l.b16 %v5021
        %v5093 = vunpack.c.l.b16 %v5022
        %v5094 = vunpack.c.l.b16 %v5023
        %v5095 = vunpack.c.l.b16 %v5024
        %v5096 = vunpack.c.l.b16 %v5025
        %v5097 = vunpack.c.l.b16 %v5026
        %v5098 = vunpack.c.l.b16 %v5027
        %v5099 = vunpack.c.l.b16 %v5028
        %v5100 = vunpack.c.l.b16 %v5029
        %v5101 = vunpack.c.l.b16 %v5030
        %v5102 = vunpack.c.l.b16 %v5031
        %v5103 = vunpack.c.l.b16 %v5032
        %v5104 = vunpack.c.l.b16 %v5033
        %v5105 = vunpack.c.l.b16 %v5034
        %v5106 = vunpack.c.l.b16 %v5035
        %v5107 = vunpack.c.l.b16 %v5036
        %v5108 = vunpack.c.l.b16 %v5037
        %v5109 = vunpack.c.l.b16 %v5038
        %v5110 = vunpack.c.l.b16 %v5039
        %v5111 = vunpack.c.l.b16 %v5040
        %v5112 = vunpack.c.l.b16 %v5041
        %v5113 = vunpack.c.l.b16 %v5042
        %v5114 = vunpack.c.l.b16 %v5043
        %v5115 = vunpack.c.l.b16 %v5044
        %v5116 = vunpack.c.l.b16 %v5045
        %v5117 = vunpack.c.l.b16 %v5046
        %v5118 = vpack.c.b16 %v5087, %v5086
        %v5119 = vpack.c.b16 %v5089, %v5088
        %v5120 = vpack.c.b16 %v5091, %v5090
        %v5121 = vpack.c.b16 %v5093, %v5092
        %v5122 = vpack.c.b16 %v5095, %v5094
        %v5123 = vpack.c.b16 %v5097, %v5096
        %v5124 = vpack.c.b16 %v5099, %v5098
        %v5125 = vpack.c.b16 %v5101, %v5100
        %v5126 = vpack.c.b16 %v5103, %v5102
        %v5127 = vpack.c.b16 %v5105, %v5104
        %v5128 = vpack.c.b16 %v5107, %v5106
        %v5129 = vpack.c.b16 %v5109, %v5108
        %v5130 = vpack.c.b16 %v5111, %v5110
        %v5131 = vpack.c.b16 %v5113, %v5112
        %v5132 = vpack.c.b16 %v5115, %v5114
        %v5133 = vpack.c.b16 %v5117, %v5116
        %5150 = vmatprep.subr.bf16.mxu0 0
        %5151 = vmatpush1.bf16.msra.mxu0 %v5125
        %5152 = vmatprep.subr.bf16.mxu0 0
        %5153 = vmatpush1.bf16.msra.mxu0 %v5124
        %5154 = vmatprep.subr.bf16.mxu0 0
        %5155 = vmatpush1.bf16.msra.mxu0 %v5123
        %5156 = vmatprep.subr.bf16.mxu0 0
        %5157 = vmatpush1.bf16.msra.mxu0 %v5122
        %5158 = vmatprep.subr.bf16.mxu0 0
        %5159 = vmatpush1.bf16.msra.mxu0 %v5121
        %5160 = vmatprep.subr.bf16.mxu0 0
        %5161 = vmatpush1.bf16.msra.mxu0 %v5120
        %5162 = vmatprep.subr.bf16.mxu0 0
        %5163 = vmatpush1.bf16.msra.mxu0 %v5119
        %5164 = vmatprep.subr.bf16.mxu0 0
        %5165 = vmatpush1.bf16.msra.mxu0 %v5118
        %5166 = vmatprep.subr.bf16.mxu0 0
        %5167 = vmatpush2.bf16.msra.mxu0 %v5133
        %5168 = vmatprep.subr.bf16.mxu0 0
        %5169 = vmatpush2.bf16.msra.mxu0 %v5132
        %5170 = vmatprep.subr.bf16.mxu0 0
        %5171 = vmatpush2.bf16.msra.mxu0 %v5131
        %5172 = vmatprep.subr.bf16.mxu0 0
        %5173 = vmatpush2.bf16.msra.mxu0 %v5130
        %5174 = vmatprep.subr.bf16.mxu0 0
        %5175 = vmatpush2.bf16.msra.mxu0 %v5129
        %5176 = vmatprep.subr.bf16.mxu0 0
        %5177 = vmatpush2.bf16.msra.mxu0 %v5128
        %5178 = vmatprep.subr.bf16.mxu0 0
        %5179 = vmatpush2.bf16.msra.mxu0 %v5127
        %5180 = vmatprep.subr.bf16.mxu0 0
        %5181 = vmatpush2.bf16.msra.mxu0 %v5126
        %5182 = vmatprep.mubr.bf16.mxu0 %v5012
        %5183 = vmatmul.mubr.bf16.gmra.mxu0 %v5011
        %v5184 = vpop.f32.mrf.mxu0
        %v5185 = vadd.f32 %v5052, %v5184
        %v5186 = vpop.f32.mrf.mxu0
        %v5187 = vpop.f32.mrf.mxu0
        %v5188 = vadd.f32 %v5052, %v5187
        %v5189 = vpop.f32.mrf.mxu0
        %5190 = vmatprep.mubr.bf16.mxu0 %v5014
        %5191 = vmatmul.mubr.bf16.gmra.mxu0 %v5013
        %v5192 = vpop.f32.mrf.mxu0
        %v5193 = vadd.f32 %v5052, %v5192
        %v5194 = vpop.f32.mrf.mxu0
        %v5195 = vpop.f32.mrf.mxu0
        %v5196 = vpop.f32.mrf.mxu0
        %5197 = vdwg.mxu0
        %v5198 = vmax.f32 %v5185, 0.0
        %v5199 = vmax.f32 %v5188, 0.0
        %v5200 = vmax.f32 %v5193, 0.0
        %v5201 = vpack.c.bf16 %v5199, %v5198
        %v5202 = vpack.c.bf16 %v5200, %v5200
        %v5203 = vld [vmem:[#allocation12] sm:$0xf]
        %v5204 = vld [vmem:[#allocation12 + $0x4] sm:$0xf]
        %v5205 = vld [vmem:[#allocation12 + $0x8] sm:$0xf]
        %v5206 = vld [vmem:[#allocation12 + $0xc] sm:$0xf]
        %v5207 = vld [vmem:[#allocation12 + $0x10] sm:$0xf]
        %v5208 = vld [vmem:[#allocation12 + $0x14] sm:$0xf]
        %v5209 = vld [vmem:[#allocation12 + $0x18] sm:$0xf]
        %v5210 = vld [vmem:[#allocation12 + $0x1c] sm:$0xf]
        %v5211 = vld [vmem:[#allocation12 + $0x20] sm:$0xf]
        %v5212 = vld [vmem:[#allocation12 + $0x24] sm:$0xf]
        %v5213 = vld [vmem:[#allocation12 + $0x28] sm:$0xf]
        %v5214 = vld [vmem:[#allocation12 + $0x2c] sm:$0xf]
        %v5215 = vld [vmem:[#allocation12 + $0x30] sm:$0xf]
        %v5216 = vld [vmem:[#allocation12 + $0x34] sm:$0xf]
        %v5217 = vld [vmem:[#allocation12 + $0x38] sm:$0xf]
        %v5218 = vld [vmem:[#allocation12 + $0x3c] sm:$0xf]
        %v5219 = vld [vmem:[%s15] sm:$0x1]
        %v5221 = vlaneseq
        %v5222 = vshrl.u32 %v5221, 7
        %v5223 = vsub.s32 0, %v5222
        %v5224 = vrot.slane %v5219, %v5223
        %v5242 = vunpack.c.l.b16 %v5203
        %v5243 = vunpack.c.l.b16 %v5204
        %v5244 = vunpack.c.l.b16 %v5205
        %v5245 = vunpack.c.l.b16 %v5206
        %v5246 = vunpack.c.l.b16 %v5207
        %v5247 = vunpack.c.l.b16 %v5208
        %v5248 = vunpack.c.l.b16 %v5209
        %v5249 = vunpack.c.l.b16 %v5210
        %v5250 = vunpack.c.l.b16 %v5211
        %v5251 = vunpack.c.l.b16 %v5212
        %v5252 = vunpack.c.l.b16 %v5213
        %v5253 = vunpack.c.l.b16 %v5214
        %v5254 = vunpack.c.l.b16 %v5215
        %v5255 = vunpack.c.l.b16 %v5216
        %v5256 = vunpack.c.l.b16 %v5217
        %v5257 = vunpack.c.l.b16 %v5218
        %v5258 = vpack.c.b16 %v5243, %v5242
        %v5259 = vpack.c.b16 %v5245, %v5244
        %v5260 = vpack.c.b16 %v5247, %v5246
        %v5261 = vpack.c.b16 %v5249, %v5248
        %v5262 = vpack.c.b16 %v5251, %v5250
        %v5263 = vpack.c.b16 %v5253, %v5252
        %v5264 = vpack.c.b16 %v5255, %v5254
        %v5265 = vpack.c.b16 %v5257, %v5256
        %5274 = vmatprep.subr.bf16.mxu0 0
        %5275 = vmatpush1.bf16.msra.mxu0 %v5265
        %5276 = vmatprep.subr.bf16.mxu0 0
        %5277 = vmatpush1.bf16.msra.mxu0 %v5264
        %5278 = vmatprep.subr.bf16.mxu0 0
        %5279 = vmatpush1.bf16.msra.mxu0 %v5263
        %5280 = vmatprep.subr.bf16.mxu0 0
        %5281 = vmatpush1.bf16.msra.mxu0 %v5262
        %5282 = vmatprep.subr.bf16.mxu0 0
        %5283 = vmatpush1.bf16.msra.mxu0 %v5261
        %5284 = vmatprep.subr.bf16.mxu0 0
        %5285 = vmatpush1.bf16.msra.mxu0 %v5260
        %5286 = vmatprep.subr.bf16.mxu0 0
        %5287 = vmatpush1.bf16.msra.mxu0 %v5259
        %5288 = vmatprep.subr.bf16.mxu0 0
        %5289 = vmatpush1.bf16.msra.mxu0 %v5258
        %5290 = vmatprep.subr.bf16.mxu0 0
        %5291 = vmatpush2.bf16.msra.mxu0 0
        %5292 = vmatprep.subr.bf16.mxu0 0
        %5293 = vmatpush2.bf16.msra.mxu0 0
        %5294 = vmatprep.subr.bf16.mxu0 0
        %5295 = vmatpush2.bf16.msra.mxu0 0
        %5296 = vmatprep.subr.bf16.mxu0 0
        %5297 = vmatpush2.bf16.msra.mxu0 0
        %5298 = vmatprep.subr.bf16.mxu0 0
        %5299 = vmatpush2.bf16.msra.mxu0 0
        %5300 = vmatprep.subr.bf16.mxu0 0
        %5301 = vmatpush2.bf16.msra.mxu0 0
        %5302 = vmatprep.subr.bf16.mxu0 0
        %5303 = vmatpush2.bf16.msra.mxu0 0
        %5304 = vmatprep.subr.bf16.mxu0 0
        %5305 = vmatpush2.bf16.msra.mxu0 0
        %5306 = vmatprep.mubr.bf16.mxu0 0
        %5307 = vmatmul.mubr.bf16.gmra.mxu0 %v5201
        %v5308 = vpop.f32.mrf.mxu0
        %v5309 = vadd.f32 %v5224, %v5308
        %v5310 = vpop.f32.mrf.mxu0
        %v5311 = vpop.f32.mrf.mxu0
        %v5312 = vadd.f32 %v5224, %v5311
        %v5313 = vpop.f32.mrf.mxu0
        %5314 = vmatprep.mubr.bf16.mxu0 0
        %5315 = vmatmul.mubr.bf16.gmra.mxu0 %v5202
        %v5316 = vpop.f32.mrf.mxu0
        %v5317 = vadd.f32 %v5224, %v5316
        %v5318 = vpop.f32.mrf.mxu0
        %v5319 = vpop.f32.mrf.mxu0
        %v5320 = vpop.f32.mrf.mxu0
        %5321 = vdwg.mxu0
        %5322 = vst [vmem:[%s665] sm:$0xff] %v5309
        %5323 = vst [vmem:[%s665 + $0x8] sm:$0xff] %v5312
        %5324 = vst [vmem:[%s665 + $0x10] sm:$0xf] %v5317
        %p5325 = scmp.lt.s32.totalorder %s33, 1
        %s5326 = scalar_select %p5325, %s33, 1
        %s5327 = smul.addr %s5326, 3
        %s5328 = smul.addr %s5327, 8
        %s5329 = scalar_lea.vmem %s16, %s5328
        // Predicated region
        $region113: #{tpu_custom_call.1} parent=83 // pred_check
          %p5330 = pneg %p402
        $region114: #{tpu_custom_call.1} parent=83 // pred_check_branch
          %5332 = sbr.rel (%p5330) target = $region116
        $region115: #{tpu_custom_call.1} parent=83 // pred_region
          _
        $region116: #{tpu_custom_call.1} parent=83 // pred_fallthru
          _
      $region84: #{tpu_custom_call.1} parent=5 // pred_fallthru
        _
      %p5333 = scmp.le.s32.totalorder 2, %s28
      // Predicated region
      $region117: #{tpu_custom_call.1} parent=5 // pred_check
        %p5334 = pneg %p5333
      $region118: #{tpu_custom_call.1} parent=5 // pred_check_branch
        %5336 = sbr.rel (%p5334) target = $region120
      $region119: #{tpu_custom_call.1} parent=5 // pred_region
        %s5337 = ssub.s32 %s28, 2
        // Predicated region
        $region121: #{tpu_custom_call.1} parent=119 // pred_check
          %p5338 = pneg %p408
        $region122: #{tpu_custom_call.1} parent=119 // pred_check_branch
          %5340 = sbr.rel (%p5338) target = $region124
        $region123: #{tpu_custom_call.1} parent=119 // pred_region
          %p5341 = scmp.lt.s32.totalorder %s34, 1
          %s5342 = scalar_select %p5341, %s34, 1
          %s5343 = smul.addr %s5342, 3
          %s5344 = smul.addr %s5343, 8
          %s5345 = scalar_lea.vmem %s16, %s5344
        $region124: #{tpu_custom_call.1} parent=119 // pred_fallthru
          _
      $region120: #{tpu_custom_call.1} parent=5 // pred_fallthru
        _
    $region6: #{tpu_custom_call.1} parent=1 // loop_footer
      %s32 = sadd.s32 1, %s28
    $region7: #{tpu_custom_call.1} parent=1 // loop_footer_branch
      %27 = sbr.rel target = $region3
    $region8: #{tpu_custom_call.1} parent=1 // loop_exit
      _
    %5346 = vsyncpa [#allocation3], 1
    %s5347 = scalar_lea.sflag [#allocation3], 1
    %5348 = vsyncpa %s5347, 1
    %5349 = vsyncpa [#allocation5], 1
    %5350 = vsyncpa [#allocation8], 1
    %5351 = vsyncpa [#allocation11], 1

</llo_original>
